<compile_context>
chip_gen: v5e
topology: v5e:2x2
jax: 0.10.0
libtpu: 0.0.40
codegen_flags: <defaults>
</compile_context>

<pallas_src>
import functools
import numpy as np

import jax
import jax.numpy as jnp
from jax.experimental import pallas as pl
from jax.experimental.pallas import tpu as pltpu

CP = 128           # padded channel width (lane-dense)
NUM_BLOCKS = 4     # encoder_1, encoder_2, decoder_1, decoder_2


# --------------------------------------------------------------------------- #
# Fused kernel: runs all four st_gcn blocks for one batch element.
# --------------------------------------------------------------------------- #
def fused_stgcn_kernel(x_ref, abd_ref,
                       wg_ref, bg_ref,                 # gcn 1x1 conv (BN1 scale folded)
                       bn1b_ref, a1_ref,               # BN1 shift, PReLU1 alpha
                       wt_ref, bt_ref,                 # temporal conv (BN2 folded)
                       wr_ref, br_ref,                 # residual 1x1 conv (BN_r folded)
                       a2_ref,                         # final PReLU alpha
                       ev_ref, dv_ref,
                       *, T, V):
    TV = T * V
    x = x_ref[0].astype(jnp.float32)            # (TV, CP)
    abd = abd_ref[...].astype(jnp.float32)      # (TV, TV) block-diag of A[t]^T

    for blk in range(NUM_BLOCKS):               # static unroll; weights stay in VMEM
        # ---- residual branch: 1x1 conv (+ BN_r folded into wr/br) ------------
        res = jnp.dot(x, wr_ref[blk], preferred_element_type=jnp.float32) + br_ref[blk]

        # ---- gcn: 1x1 conv (BN1 scale folded in) then graph step -------------
        g = jnp.dot(x, wg_ref[blk], preferred_element_type=jnp.float32) + bg_ref[blk]
        # y[t*V+w, c] = sum_v A[t,v,w] * g[t*V+v, c]   (channels untouched)
        y = jnp.dot(abd, g, preferred_element_type=jnp.float32)         # (TV, CP)

        # ---- BN1 shift -> PReLU ----------------------------------------------
        y = y + bn1b_ref[blk]
        a1 = a1_ref[blk]
        y = jnp.where(y >= 0, y, a1 * y)

        # ---- temporal conv(3,1), pad (1,0): one K = 3*CP matmul ---------------
        # time shift by one step == shift by V rows (single batch element here)
        zrow = jnp.zeros((V, CP), jnp.float32)
        y_prev = jnp.concatenate([zrow, y[:TV - V]], axis=0)   # y at t-1 (zero pad t=0)
        y_next = jnp.concatenate([y[V:], zrow], axis=0)        # y at t+1 (zero pad t=T-1)
        ystack = jnp.concatenate([y_prev, y, y_next], axis=-1)  # (TV, 3*CP)
        z = jnp.dot(ystack, wt_ref[blk], preferred_element_type=jnp.float32) + bt_ref[blk]
        # (BN2 folded into wt/bt in the wrapper; Dropout(p=0) is identity.)

        # ---- add residual + final PReLU --------------------------------------
        out = z + res
        a2 = a2_ref[blk]
        x = jnp.where(out >= 0, out, a2 * out)

        if blk == 1:                      # encoder_2 output -> ev
            ev_ref[0] = x.astype(ev_ref.dtype)
        if blk == 3:                      # decoder_2 output -> dv
            dv_ref[0] = x.astype(dv_ref.dtype)


# --------------------------------------------------------------------------- #
# Wrapper
# --------------------------------------------------------------------------- #
def graph_autoencoder_forward(v, a, packed, *, latent_dim):
    """v: (N, Cin, T, V) NCHW; a: (T, V, V). Returns (ev NCHW, dv NCHW)."""
    N, Cin, T, V = v.shape
    TV = T * V

    # NCHW -> channel-last, zero-pad channels to CP lanes, flatten (T,V) rows.
    x = jnp.transpose(v, (0, 2, 3, 1)).astype(jnp.float32)            # (N, T, V, Cin)
    x = jnp.pad(x, ((0, 0), (0, 0), (0, 0), (0, CP - Cin))).reshape(N, TV, CP)

    # Block-diagonal A^T over time: abd[t*V+w, s*V+v] = delta_{ts} * A[t, v, w]
    at = jnp.transpose(a, (0, 2, 1)).astype(jnp.float32)              # at[t,w,v] = A[t,v,w]
    eye = jnp.eye(T, dtype=jnp.float32)
    abd = (eye[:, None, :, None] * at[:, :, None, :]).reshape(TV, TV)

    def full(shape):
        return pl.BlockSpec(shape, lambda n, _s=shape: (0,) * len(_s))

    batch_spec = pl.BlockSpec((1, TV, CP), lambda n: (n, 0, 0))
    vec_spec = full((NUM_BLOCKS, 1, CP))

    kernel = functools.partial(fused_stgcn_kernel, T=T, V=V)
    ev_p, dv_p = pl.pallas_call(
        kernel,
        grid=(N,),
        out_shape=(jax.ShapeDtypeStruct((N, TV, CP), jnp.float32),
                   jax.ShapeDtypeStruct((N, TV, CP), jnp.float32)),
        in_specs=[batch_spec,                      # x
                  full((TV, TV)),                  # abd
                  full((NUM_BLOCKS, CP, CP)),      # wg (BN1 scale folded)
                  vec_spec,                        # bg (BN1 scale folded)
                  vec_spec, vec_spec,              # bn1_b, alpha1
                  full((NUM_BLOCKS, 3 * CP, CP)),  # wt (stacked taps, BN2 folded)
                  vec_spec,                        # bt
                  full((NUM_BLOCKS, CP, CP)),      # wr (residual, BN_r folded)
                  vec_spec,                        # br
                  vec_spec],                       # alpha2
        out_specs=(batch_spec, batch_spec),
        compiler_params=pltpu.CompilerParams(dimension_semantics=("parallel",)),
    )(x, abd,
      packed["wg"], packed["bg"],
      packed["bn1_b"], packed["alpha1"],
      packed["wt"], packed["bt"],
      packed["wr"], packed["br"],
      packed["alpha2"])

    # Slice back to true channel widths and restore NCHW.
    ev = ev_p[:, :, :latent_dim].reshape(N, T, V, latent_dim).transpose(0, 3, 1, 2)
    dv = dv_p[:, :, :Cin].reshape(N, T, V, Cin).transpose(0, 3, 1, 2)
    return ev, dv


# --------------------------------------------------------------------------- #
# Parameter init (PyTorch defaults) + packing (pad to CP, fold BN, stack blocks)
# --------------------------------------------------------------------------- #
def init_st_gcn_params(key, cin, cout):
    ks = jax.random.split(key, 6)

    def u(k, shape, fan_in):
        bound = 1.0 / np.sqrt(fan_in)
        return jax.random.uniform(k, shape, jnp.float32, -bound, bound)

    eps = 1e-5
    bn_s = jnp.full((cout,), 1.0 / np.sqrt(1.0 + eps), jnp.float32)   # identity stats
    bn_b = jnp.zeros((cout,), jnp.float32)
    return dict(
        wg=u(ks[0], (cin, cout), cin),             # Conv2d(cin,cout,(1,1)) as (Cin,Cout)
        bg=u(ks[1], (cout,), cin),
        bn1_s=bn_s, bn1_b=bn_b,
        alpha1=jnp.full((cout,), 0.25, jnp.float32),
        wt=u(ks[2], (3, cout, cout), cout * 3),    # temporal taps wt[k][ci,co]
        bt=u(ks[3], (cout,), cout * 3),
        bn2_s=bn_s, bn2_b=bn_b,
        wr=u(ks[4], (cin, cout), cin),             # residual Conv2d(cin,cout,1)
        br=u(ks[5], (cout,), cin),
        bnr_s=bn_s, bnr_b=bn_b,
        alpha2=jnp.full((cout,), 0.25, jnp.float32),
    )


def pack_params(blocks):
    def pad_mat(w):                                  # (cin, cout) -> (CP, CP)
        return jnp.pad(w, ((0, CP - w.shape[0]), (0, CP - w.shape[1])))

    def pad_vec(x):                                  # (cout,) -> (1, CP)
        return jnp.pad(x, (0, CP - x.shape[0]))[None, :]

    acc = {k: [] for k in ("wg", "bg", "bn1_b", "alpha1",
                           "wt", "bt", "wr", "br", "alpha2")}
    for p in blocks:
        # gcn conv with BN1 *scale* folded in (graph step is channel-independent,
        # so the per-channel scale commutes through the adjacency matmul).
        acc["wg"].append(pad_mat(p["wg"] * p["bn1_s"][None, :]))
        acc["bg"].append(pad_vec(p["bg"] * p["bn1_s"]))
        acc["bn1_b"].append(pad_vec(p["bn1_b"]))
        acc["alpha1"].append(pad_vec(p["alpha1"]))
        # temporal conv: stack the 3 taps along K and fold BN2 (column scale).
        wt = jnp.concatenate(
            [pad_mat(p["wt"][k] * p["bn2_s"][None, :]) for k in range(3)], axis=0)
        acc["wt"].append(wt)
        acc["bt"].append(pad_vec(p["bt"] * p["bn2_s"] + p["bn2_b"]))
        # residual conv with its BN folded in.
        acc["wr"].append(pad_mat(p["wr"] * p["bnr_s"][None, :]))
        acc["br"].append(pad_vec(p["br"] * p["bnr_s"] + p["bnr_b"]))
        acc["alpha2"].append(pad_vec(p["alpha2"]))
    return {k: jnp.stack(v, axis=0) for k, v in acc.items()}


# --------------------------------------------------------------------------- #
# Pure-JAX reference (direct transcription of the PyTorch block) for checking
# --------------------------------------------------------------------------- #
def _st_gcn_ref(x, a, p):
    # x: (N, T, V, Cin) channel-last
    res = jnp.einsum('ntvi,io->ntvo', x, p["wr"]) + p["br"]
    res = res * p["bnr_s"] + p["bnr_b"]
    g = jnp.einsum('ntvi,io->ntvo', x, p["wg"]) + p["bg"]
    y = jnp.einsum('ntvc,tvw->ntwc', g, a)
    y = y * p["bn1_s"] + p["bn1_b"]
    y = jnp.where(y >= 0, y, p["alpha1"] * y)
    T = x.shape[1]
    zero = jnp.zeros_like(y[:, :1])
    y_prev = jnp.concatenate([zero, y[:, :T - 1]], axis=1)
    y_next = jnp.concatenate([y[:, 1:], zero], axis=1)
    z = (jnp.einsum('ntvi,io->ntvo', y_prev, p["wt"][0])
         + jnp.einsum('ntvi,io->ntvo', y, p["wt"][1])
         + jnp.einsum('ntvi,io->ntvo', y_next, p["wt"][2])
         + p["bt"])
    z = z * p["bn2_s"] + p["bn2_b"]
    out = z + res
    return jnp.where(out >= 0, out, p["alpha2"] * out)


def _autoencoder_ref(v, a, blocks):
    x = jnp.transpose(v, (0, 2, 3, 1)).astype(jnp.float32)
    outs = []
    for p in blocks:
        x = _st_gcn_ref(x, a, p)
        outs.append(x)
    ev = jnp.transpose(outs[1], (0, 3, 1, 2))
    dv = jnp.transpose(outs[3], (0, 3, 1, 2))
    return ev, dv


# --------------------------------------------------------------------------- #
if __name__ == "__main__":
    key = jax.random.PRNGKey(0)
    N, Cin, T, V = 2, 2, 8, 16           # batch=2, in_channels=2, seq_len=8, nodes=16
    latent, middle = 64, 32

    k_v, k_a, k1, k2, k3, k4 = jax.random.split(key, 6)
    v = jax.random.normal(k_v, (N, Cin, T, V), jnp.float32)       # NCHW (N, C, T, V)
    a = jax.random.normal(k_a, (T, V, V), jnp.float32)            # per-timestep adjacency

    blocks = [init_st_gcn_params(k1, Cin, middle),     # encoder_1
              init_st_gcn_params(k2, middle, latent),  # encoder_2
              init_st_gcn_params(k3, latent, middle),  # decoder_1
              init_st_gcn_params(k4, middle, Cin)]     # decoder_2
    packed = pack_params(blocks)

    fwd = jax.jit(functools.partial(graph_autoencoder_forward, latent_dim=latent))
    ev, dv = fwd(v, a, packed)
    jax.block_until_ready((ev, dv))

    assert ev.shape == (N, latent, T, V), ev.shape
    assert dv.shape == (N, Cin, T, V), dv.shape
    assert bool(jnp.isfinite(ev).all()) and bool(jnp.isfinite(dv).all())

    # Numerical check against the pure-JAX reference (loose tol: TPU matmul
    # default precision differs between XLA einsum and the in-kernel MXU path).
    ev_ref, dv_ref = _autoencoder_ref(v, a, blocks)
    np.testing.assert_allclose(np.asarray(ev), np.asarray(ev_ref), rtol=5e-2, atol=5e-2)
    np.testing.assert_allclose(np.asarray(dv), np.asarray(dv_ref), rtol=5e-2, atol=5e-2)

    print("KERNEL_OK")
</pallas_src>

<mosaic_0001>
module attributes {stable_mosaic.version = 11 : i64} {
  func.func @fused_stgcn_kernel(%arg0: i32, %arg1: memref<1x128x128xf32, #tpu.memory_space<vmem>>, %arg2: memref<128x128xf32, #tpu.memory_space<vmem>>, %arg3: memref<4x128x128xf32, #tpu.memory_space<vmem>>, %arg4: memref<4x1x128xf32, #tpu.memory_space<vmem>>, %arg5: memref<4x1x128xf32, #tpu.memory_space<vmem>>, %arg6: memref<4x1x128xf32, #tpu.memory_space<vmem>>, %arg7: memref<4x384x128xf32, #tpu.memory_space<vmem>>, %arg8: memref<4x1x128xf32, #tpu.memory_space<vmem>>, %arg9: memref<4x128x128xf32, #tpu.memory_space<vmem>>, %arg10: memref<4x1x128xf32, #tpu.memory_space<vmem>>, %arg11: memref<4x1x128xf32, #tpu.memory_space<vmem>>, %arg12: memref<1x128x128xf32, #tpu.memory_space<vmem>>, %arg13: memref<1x128x128xf32, #tpu.memory_space<vmem>>) attributes {dimension_semantics = [#tpu.dimension_semantics<parallel>], iteration_bounds = array<i64: 2>, scalar_prefetch = 0 : i64, scratch_operands = 0 : i64, tpu.core_type = #tpu.core_type<tc>, window_params = [{transform_indices = @transform_0, window_bounds = array<i64: 1, 128, 128>}, {pipeline_mode = #tpu.pipeline_mode<synchronous>, transform_indices = @transform_1, window_bounds = array<i64: 128, 128>}, {pipeline_mode = #tpu.pipeline_mode<synchronous>, transform_indices = @transform_2, window_bounds = array<i64: 4, 128, 128>}, {pipeline_mode = #tpu.pipeline_mode<synchronous>, transform_indices = @transform_3, window_bounds = array<i64: 4, 1, 128>}, {pipeline_mode = #tpu.pipeline_mode<synchronous>, transform_indices = @transform_4, window_bounds = array<i64: 4, 1, 128>}, {pipeline_mode = #tpu.pipeline_mode<synchronous>, transform_indices = @transform_5, window_bounds = array<i64: 4, 1, 128>}, {pipeline_mode = #tpu.pipeline_mode<synchronous>, transform_indices = @transform_6, window_bounds = array<i64: 4, 384, 128>}, {pipeline_mode = #tpu.pipeline_mode<synchronous>, transform_indices = @transform_7, window_bounds = array<i64: 4, 1, 128>}, {pipeline_mode = #tpu.pipeline_mode<synchronous>, transform_indices = @transform_8, window_bounds = array<i64: 4, 128, 128>}, {pipeline_mode = #tpu.pipeline_mode<synchronous>, transform_indices = @transform_9, window_bounds = array<i64: 4, 1, 128>}, {pipeline_mode = #tpu.pipeline_mode<synchronous>, transform_indices = @transform_10, window_bounds = array<i64: 4, 1, 128>}, {transform_indices = @transform_11, window_bounds = array<i64: 1, 128, 128>}, {transform_indices = @transform_12, window_bounds = array<i64: 1, 128, 128>}]} {
    %c0 = arith.constant 0 : index
    %c0_0 = arith.constant 0 : index
    %c0_1 = arith.constant 0 : index
    %0 = vector.load %arg1[%c0, %c0_0, %c0_1] : memref<1x128x128xf32, #tpu.memory_space<vmem>>, vector<1x128x128xf32>
    %1 = vector.shape_cast %0 : vector<1x128x128xf32> to vector<128x128xf32>
    %c0_2 = arith.constant 0 : index
    %c0_3 = arith.constant 0 : index
    %2 = vector.load %arg2[%c0_2, %c0_3] : memref<128x128xf32, #tpu.memory_space<vmem>>, vector<128x128xf32>
    %c0_4 = arith.constant 0 : index
    %c0_5 = arith.constant 0 : index
    %c0_6 = arith.constant 0 : index
    %3 = vector.load %arg9[%c0_4, %c0_5, %c0_6] : memref<4x128x128xf32, #tpu.memory_space<vmem>>, vector<1x128x128xf32>
    %4 = vector.shape_cast %3 : vector<1x128x128xf32> to vector<128x128xf32>
    %cst = arith.constant dense<0.000000e+00> : vector<128x128xf32>
    %5 = tpu.matmul %1, %4, %cst {dimension_numbers = #tpu.dot_dimension_numbers<[1], [0], [0], [1], [0, 0, 1, 1], [], []>} : vector<128x128xf32>, vector<128x128xf32>, vector<128x128xf32> -> vector<128x128xf32>
    %c0_7 = arith.constant 0 : index
    %c0_8 = arith.constant 0 : index
    %c0_9 = arith.constant 0 : index
    %6 = vector.load %arg10[%c0_7, %c0_8, %c0_9] : memref<4x1x128xf32, #tpu.memory_space<vmem>>, vector<1x1x128xf32>
    %7 = vector.shape_cast %6 : vector<1x1x128xf32> to vector<1x128xf32>
    %8 = vector.broadcast %7 : vector<1x128xf32> to vector<128x128xf32>
    %9 = arith.addf %5, %8 : vector<128x128xf32>
    %c0_10 = arith.constant 0 : index
    %c0_11 = arith.constant 0 : index
    %c0_12 = arith.constant 0 : index
    %10 = vector.load %arg3[%c0_10, %c0_11, %c0_12] : memref<4x128x128xf32, #tpu.memory_space<vmem>>, vector<1x128x128xf32>
    %11 = vector.shape_cast %10 : vector<1x128x128xf32> to vector<128x128xf32>
    %cst_13 = arith.constant dense<0.000000e+00> : vector<128x128xf32>
    %12 = tpu.matmul %1, %11, %cst_13 {dimension_numbers = #tpu.dot_dimension_numbers<[1], [0], [0], [1], [0, 0, 1, 1], [], []>} : vector<128x128xf32>, vector<128x128xf32>, vector<128x128xf32> -> vector<128x128xf32>
    %c0_14 = arith.constant 0 : index
    %c0_15 = arith.constant 0 : index
    %c0_16 = arith.constant 0 : index
    %13 = vector.load %arg4[%c0_14, %c0_15, %c0_16] : memref<4x1x128xf32, #tpu.memory_space<vmem>>, vector<1x1x128xf32>
    %14 = vector.shape_cast %13 : vector<1x1x128xf32> to vector<1x128xf32>
    %15 = vector.broadcast %14 : vector<1x128xf32> to vector<128x128xf32>
    %16 = arith.addf %12, %15 : vector<128x128xf32>
    %cst_17 = arith.constant dense<0.000000e+00> : vector<128x128xf32>
    %17 = tpu.matmul %2, %16, %cst_17 {dimension_numbers = #tpu.dot_dimension_numbers<[1], [0], [0], [1], [0, 0, 1, 1], [], []>} : vector<128x128xf32>, vector<128x128xf32>, vector<128x128xf32> -> vector<128x128xf32>
    %c0_18 = arith.constant 0 : index
    %c0_19 = arith.constant 0 : index
    %c0_20 = arith.constant 0 : index
    %18 = vector.load %arg5[%c0_18, %c0_19, %c0_20] : memref<4x1x128xf32, #tpu.memory_space<vmem>>, vector<1x1x128xf32>
    %19 = vector.shape_cast %18 : vector<1x1x128xf32> to vector<1x128xf32>
    %20 = vector.broadcast %19 : vector<1x128xf32> to vector<128x128xf32>
    %21 = arith.addf %17, %20 : vector<128x128xf32>
    %c0_21 = arith.constant 0 : index
    %c0_22 = arith.constant 0 : index
    %c0_23 = arith.constant 0 : index
    %22 = vector.load %arg6[%c0_21, %c0_22, %c0_23] : memref<4x1x128xf32, #tpu.memory_space<vmem>>, vector<1x1x128xf32>
    %23 = vector.shape_cast %22 : vector<1x1x128xf32> to vector<1x128xf32>
    %cst_24 = arith.constant 0.000000e+00 : f32
    %24 = vector.broadcast %cst_24 : f32 to vector<128x128xf32>
    %25 = arith.cmpf oge, %21, %24 : vector<128x128xf32>
    %26 = vector.broadcast %23 : vector<1x128xf32> to vector<128x128xf32>
    %27 = arith.mulf %26, %21 : vector<128x128xf32>
    %28 = arith.select %25, %21, %27 : vector<128x128xi1>, vector<128x128xf32>
    %cst_25 = arith.constant 0.000000e+00 : f32
    %29 = vector.broadcast %cst_25 : f32 to vector<16x128xf32>
    %30 = vector.extract_strided_slice %28 {offsets = [0, 0], sizes = [112, 128], strides = [1, 1]} : vector<128x128xf32> to vector<112x128xf32>
    %31 = tpu.concatenate %29, %30 in 0 : vector<16x128xf32>, vector<112x128xf32> -> vector<128x128xf32>
    %32 = vector.extract_strided_slice %28 {offsets = [16, 0], sizes = [112, 128], strides = [1, 1]} : vector<128x128xf32> to vector<112x128xf32>
    %33 = tpu.concatenate %32, %29 in 0 : vector<112x128xf32>, vector<16x128xf32> -> vector<128x128xf32>
    %34 = tpu.concatenate %31, %28, %33 in 1 : vector<128x128xf32>, vector<128x128xf32>, vector<128x128xf32> -> vector<128x384xf32>
    %c0_26 = arith.constant 0 : index
    %c0_27 = arith.constant 0 : index
    %c0_28 = arith.constant 0 : index
    %35 = vector.load %arg7[%c0_26, %c0_27, %c0_28] : memref<4x384x128xf32, #tpu.memory_space<vmem>>, vector<1x384x128xf32>
    %36 = vector.shape_cast %35 : vector<1x384x128xf32> to vector<384x128xf32>
    %cst_29 = arith.constant dense<0.000000e+00> : vector<128x128xf32>
    %37 = tpu.matmul %34, %36, %cst_29 {dimension_numbers = #tpu.dot_dimension_numbers<[1], [0], [0], [1], [0, 0, 1, 1], [], []>} : vector<128x384xf32>, vector<384x128xf32>, vector<128x128xf32> -> vector<128x128xf32>
    %c0_30 = arith.constant 0 : index
    %c0_31 = arith.constant 0 : index
    %c0_32 = arith.constant 0 : index
    %38 = vector.load %arg8[%c0_30, %c0_31, %c0_32] : memref<4x1x128xf32, #tpu.memory_space<vmem>>, vector<1x1x128xf32>
    %39 = vector.shape_cast %38 : vector<1x1x128xf32> to vector<1x128xf32>
    %40 = vector.broadcast %39 : vector<1x128xf32> to vector<128x128xf32>
    %41 = arith.addf %37, %40 : vector<128x128xf32>
    %42 = arith.addf %41, %9 : vector<128x128xf32>
    %c0_33 = arith.constant 0 : index
    %c0_34 = arith.constant 0 : index
    %c0_35 = arith.constant 0 : index
    %43 = vector.load %arg11[%c0_33, %c0_34, %c0_35] : memref<4x1x128xf32, #tpu.memory_space<vmem>>, vector<1x1x128xf32>
    %44 = vector.shape_cast %43 : vector<1x1x128xf32> to vector<1x128xf32>
    %cst_36 = arith.constant 0.000000e+00 : f32
    %45 = vector.broadcast %cst_36 : f32 to vector<128x128xf32>
    %46 = arith.cmpf oge, %42, %45 : vector<128x128xf32>
    %47 = vector.broadcast %44 : vector<1x128xf32> to vector<128x128xf32>
    %48 = arith.mulf %47, %42 : vector<128x128xf32>
    %49 = arith.select %46, %42, %48 : vector<128x128xi1>, vector<128x128xf32>
    %c1 = arith.constant 1 : index
    %c0_37 = arith.constant 0 : index
    %c0_38 = arith.constant 0 : index
    %50 = vector.load %arg9[%c1, %c0_37, %c0_38] : memref<4x128x128xf32, #tpu.memory_space<vmem>>, vector<1x128x128xf32>
    %51 = vector.shape_cast %50 : vector<1x128x128xf32> to vector<128x128xf32>
    %cst_39 = arith.constant dense<0.000000e+00> : vector<128x128xf32>
    %52 = tpu.matmul %49, %51, %cst_39 {dimension_numbers = #tpu.dot_dimension_numbers<[1], [0], [0], [1], [0, 0, 1, 1], [], []>} : vector<128x128xf32>, vector<128x128xf32>, vector<128x128xf32> -> vector<128x128xf32>
    %c1_40 = arith.constant 1 : index
    %c0_41 = arith.constant 0 : index
    %c0_42 = arith.constant 0 : index
    %53 = vector.load %arg10[%c1_40, %c0_41, %c0_42] : memref<4x1x128xf32, #tpu.memory_space<vmem>>, vector<1x1x128xf32>
    %54 = vector.shape_cast %53 : vector<1x1x128xf32> to vector<1x128xf32>
    %55 = vector.broadcast %54 : vector<1x128xf32> to vector<128x128xf32>
    %56 = arith.addf %52, %55 : vector<128x128xf32>
    %c1_43 = arith.constant 1 : index
    %c0_44 = arith.constant 0 : index
    %c0_45 = arith.constant 0 : index
    %57 = vector.load %arg3[%c1_43, %c0_44, %c0_45] : memref<4x128x128xf32, #tpu.memory_space<vmem>>, vector<1x128x128xf32>
    %58 = vector.shape_cast %57 : vector<1x128x128xf32> to vector<128x128xf32>
    %cst_46 = arith.constant dense<0.000000e+00> : vector<128x128xf32>
    %59 = tpu.matmul %49, %58, %cst_46 {dimension_numbers = #tpu.dot_dimension_numbers<[1], [0], [0], [1], [0, 0, 1, 1], [], []>} : vector<128x128xf32>, vector<128x128xf32>, vector<128x128xf32> -> vector<128x128xf32>
    %c1_47 = arith.constant 1 : index
    %c0_48 = arith.constant 0 : index
    %c0_49 = arith.constant 0 : index
    %60 = vector.load %arg4[%c1_47, %c0_48, %c0_49] : memref<4x1x128xf32, #tpu.memory_space<vmem>>, vector<1x1x128xf32>
    %61 = vector.shape_cast %60 : vector<1x1x128xf32> to vector<1x128xf32>
    %62 = vector.broadcast %61 : vector<1x128xf32> to vector<128x128xf32>
    %63 = arith.addf %59, %62 : vector<128x128xf32>
    %cst_50 = arith.constant dense<0.000000e+00> : vector<128x128xf32>
    %64 = tpu.matmul %2, %63, %cst_50 {dimension_numbers = #tpu.dot_dimension_numbers<[1], [0], [0], [1], [0, 0, 1, 1], [], []>} : vector<128x128xf32>, vector<128x128xf32>, vector<128x128xf32> -> vector<128x128xf32>
    %c1_51 = arith.constant 1 : index
    %c0_52 = arith.constant 0 : index
    %c0_53 = arith.constant 0 : index
    %65 = vector.load %arg5[%c1_51, %c0_52, %c0_53] : memref<4x1x128xf32, #tpu.memory_space<vmem>>, vector<1x1x128xf32>
    %66 = vector.shape_cast %65 : vector<1x1x128xf32> to vector<1x128xf32>
    %67 = vector.broadcast %66 : vector<1x128xf32> to vector<128x128xf32>
    %68 = arith.addf %64, %67 : vector<128x128xf32>
    %c1_54 = arith.constant 1 : index
    %c0_55 = arith.constant 0 : index
    %c0_56 = arith.constant 0 : index
    %69 = vector.load %arg6[%c1_54, %c0_55, %c0_56] : memref<4x1x128xf32, #tpu.memory_space<vmem>>, vector<1x1x128xf32>
    %70 = vector.shape_cast %69 : vector<1x1x128xf32> to vector<1x128xf32>
    %cst_57 = arith.constant 0.000000e+00 : f32
    %71 = vector.broadcast %cst_57 : f32 to vector<128x128xf32>
    %72 = arith.cmpf oge, %68, %71 : vector<128x128xf32>
    %73 = vector.broadcast %70 : vector<1x128xf32> to vector<128x128xf32>
    %74 = arith.mulf %73, %68 : vector<128x128xf32>
    %75 = arith.select %72, %68, %74 : vector<128x128xi1>, vector<128x128xf32>
    %cst_58 = arith.constant 0.000000e+00 : f32
    %76 = vector.broadcast %cst_58 : f32 to vector<16x128xf32>
    %77 = vector.extract_strided_slice %75 {offsets = [0, 0], sizes = [112, 128], strides = [1, 1]} : vector<128x128xf32> to vector<112x128xf32>
    %78 = tpu.concatenate %76, %77 in 0 : vector<16x128xf32>, vector<112x128xf32> -> vector<128x128xf32>
    %79 = vector.extract_strided_slice %75 {offsets = [16, 0], sizes = [112, 128], strides = [1, 1]} : vector<128x128xf32> to vector<112x128xf32>
    %80 = tpu.concatenate %79, %76 in 0 : vector<112x128xf32>, vector<16x128xf32> -> vector<128x128xf32>
    %81 = tpu.concatenate %78, %75, %80 in 1 : vector<128x128xf32>, vector<128x128xf32>, vector<128x128xf32> -> vector<128x384xf32>
    %c1_59 = arith.constant 1 : index
    %c0_60 = arith.constant 0 : index
    %c0_61 = arith.constant 0 : index
    %82 = vector.load %arg7[%c1_59, %c0_60, %c0_61] : memref<4x384x128xf32, #tpu.memory_space<vmem>>, vector<1x384x128xf32>
    %83 = vector.shape_cast %82 : vector<1x384x128xf32> to vector<384x128xf32>
    %cst_62 = arith.constant dense<0.000000e+00> : vector<128x128xf32>
    %84 = tpu.matmul %81, %83, %cst_62 {dimension_numbers = #tpu.dot_dimension_numbers<[1], [0], [0], [1], [0, 0, 1, 1], [], []>} : vector<128x384xf32>, vector<384x128xf32>, vector<128x128xf32> -> vector<128x128xf32>
    %c1_63 = arith.constant 1 : index
    %c0_64 = arith.constant 0 : index
    %c0_65 = arith.constant 0 : index
    %85 = vector.load %arg8[%c1_63, %c0_64, %c0_65] : memref<4x1x128xf32, #tpu.memory_space<vmem>>, vector<1x1x128xf32>
    %86 = vector.shape_cast %85 : vector<1x1x128xf32> to vector<1x128xf32>
    %87 = vector.broadcast %86 : vector<1x128xf32> to vector<128x128xf32>
    %88 = arith.addf %84, %87 : vector<128x128xf32>
    %89 = arith.addf %88, %56 : vector<128x128xf32>
    %c1_66 = arith.constant 1 : index
    %c0_67 = arith.constant 0 : index
    %c0_68 = arith.constant 0 : index
    %90 = vector.load %arg11[%c1_66, %c0_67, %c0_68] : memref<4x1x128xf32, #tpu.memory_space<vmem>>, vector<1x1x128xf32>
    %91 = vector.shape_cast %90 : vector<1x1x128xf32> to vector<1x128xf32>
    %cst_69 = arith.constant 0.000000e+00 : f32
    %92 = vector.broadcast %cst_69 : f32 to vector<128x128xf32>
    %93 = arith.cmpf oge, %89, %92 : vector<128x128xf32>
    %94 = vector.broadcast %91 : vector<1x128xf32> to vector<128x128xf32>
    %95 = arith.mulf %94, %89 : vector<128x128xf32>
    %96 = arith.select %93, %89, %95 : vector<128x128xi1>, vector<128x128xf32>
    %c0_70 = arith.constant 0 : index
    %c0_71 = arith.constant 0 : index
    %c0_72 = arith.constant 0 : index
    %97 = vector.load %arg12[%c0_70, %c0_71, %c0_72] : memref<1x128x128xf32, #tpu.memory_space<vmem>>, vector<1x128x128xf32>
    %98 = vector.shape_cast %97 : vector<1x128x128xf32> to vector<128x128xf32>
    %99 = vector.shape_cast %96 : vector<128x128xf32> to vector<1x128x128xf32>
    tpu.vector_store %arg12[%c0_70, %c0_71, %c0_72], %99 {strides = array<i32>} : memref<1x128x128xf32, #tpu.memory_space<vmem>>, vector<1x128x128xf32>,
    %c2 = arith.constant 2 : index
    %c0_73 = arith.constant 0 : index
    %c0_74 = arith.constant 0 : index
    %100 = vector.load %arg9[%c2, %c0_73, %c0_74] : memref<4x128x128xf32, #tpu.memory_space<vmem>>, vector<1x128x128xf32>
    %101 = vector.shape_cast %100 : vector<1x128x128xf32> to vector<128x128xf32>
    %cst_75 = arith.constant dense<0.000000e+00> : vector<128x128xf32>
    %102 = tpu.matmul %96, %101, %cst_75 {dimension_numbers = #tpu.dot_dimension_numbers<[1], [0], [0], [1], [0, 0, 1, 1], [], []>} : vector<128x128xf32>, vector<128x128xf32>, vector<128x128xf32> -> vector<128x128xf32>
    %c2_76 = arith.constant 2 : index
    %c0_77 = arith.constant 0 : index
    %c0_78 = arith.constant 0 : index
    %103 = vector.load %arg10[%c2_76, %c0_77, %c0_78] : memref<4x1x128xf32, #tpu.memory_space<vmem>>, vector<1x1x128xf32>
    %104 = vector.shape_cast %103 : vector<1x1x128xf32> to vector<1x128xf32>
    %105 = vector.broadcast %104 : vector<1x128xf32> to vector<128x128xf32>
    %106 = arith.addf %102, %105 : vector<128x128xf32>
    %c2_79 = arith.constant 2 : index
    %c0_80 = arith.constant 0 : index
    %c0_81 = arith.constant 0 : index
    %107 = vector.load %arg3[%c2_79, %c0_80, %c0_81] : memref<4x128x128xf32, #tpu.memory_space<vmem>>, vector<1x128x128xf32>
    %108 = vector.shape_cast %107 : vector<1x128x128xf32> to vector<128x128xf32>
    %cst_82 = arith.constant dense<0.000000e+00> : vector<128x128xf32>
    %109 = tpu.matmul %96, %108, %cst_82 {dimension_numbers = #tpu.dot_dimension_numbers<[1], [0], [0], [1], [0, 0, 1, 1], [], []>} : vector<128x128xf32>, vector<128x128xf32>, vector<128x128xf32> -> vector<128x128xf32>
    %c2_83 = arith.constant 2 : index
    %c0_84 = arith.constant 0 : index
    %c0_85 = arith.constant 0 : index
    %110 = vector.load %arg4[%c2_83, %c0_84, %c0_85] : memref<4x1x128xf32, #tpu.memory_space<vmem>>, vector<1x1x128xf32>
    %111 = vector.shape_cast %110 : vector<1x1x128xf32> to vector<1x128xf32>
    %112 = vector.broadcast %111 : vector<1x128xf32> to vector<128x128xf32>
    %113 = arith.addf %109, %112 : vector<128x128xf32>
    %cst_86 = arith.constant dense<0.000000e+00> : vector<128x128xf32>
    %114 = tpu.matmul %2, %113, %cst_86 {dimension_numbers = #tpu.dot_dimension_numbers<[1], [0], [0], [1], [0, 0, 1, 1], [], []>} : vector<128x128xf32>, vector<128x128xf32>, vector<128x128xf32> -> vector<128x128xf32>
    %c2_87 = arith.constant 2 : index
    %c0_88 = arith.constant 0 : index
    %c0_89 = arith.constant 0 : index
    %115 = vector.load %arg5[%c2_87, %c0_88, %c0_89] : memref<4x1x128xf32, #tpu.memory_space<vmem>>, vector<1x1x128xf32>
    %116 = vector.shape_cast %115 : vector<1x1x128xf32> to vector<1x128xf32>
    %117 = vector.broadcast %116 : vector<1x128xf32> to vector<128x128xf32>
    %118 = arith.addf %114, %117 : vector<128x128xf32>
    %c2_90 = arith.constant 2 : index
    %c0_91 = arith.constant 0 : index
    %c0_92 = arith.constant 0 : index
    %119 = vector.load %arg6[%c2_90, %c0_91, %c0_92] : memref<4x1x128xf32, #tpu.memory_space<vmem>>, vector<1x1x128xf32>
    %120 = vector.shape_cast %119 : vector<1x1x128xf32> to vector<1x128xf32>
    %cst_93 = arith.constant 0.000000e+00 : f32
    %121 = vector.broadcast %cst_93 : f32 to vector<128x128xf32>
    %122 = arith.cmpf oge, %118, %121 : vector<128x128xf32>
    %123 = vector.broadcast %120 : vector<1x128xf32> to vector<128x128xf32>
    %124 = arith.mulf %123, %118 : vector<128x128xf32>
    %125 = arith.select %122, %118, %124 : vector<128x128xi1>, vector<128x128xf32>
    %cst_94 = arith.constant 0.000000e+00 : f32
    %126 = vector.broadcast %cst_94 : f32 to vector<16x128xf32>
    %127 = vector.extract_strided_slice %125 {offsets = [0, 0], sizes = [112, 128], strides = [1, 1]} : vector<128x128xf32> to vector<112x128xf32>
    %128 = tpu.concatenate %126, %127 in 0 : vector<16x128xf32>, vector<112x128xf32> -> vector<128x128xf32>
    %129 = vector.extract_strided_slice %125 {offsets = [16, 0], sizes = [112, 128], strides = [1, 1]} : vector<128x128xf32> to vector<112x128xf32>
    %130 = tpu.concatenate %129, %126 in 0 : vector<112x128xf32>, vector<16x128xf32> -> vector<128x128xf32>
    %131 = tpu.concatenate %128, %125, %130 in 1 : vector<128x128xf32>, vector<128x128xf32>, vector<128x128xf32> -> vector<128x384xf32>
    %c2_95 = arith.constant 2 : index
    %c0_96 = arith.constant 0 : index
    %c0_97 = arith.constant 0 : index
    %132 = vector.load %arg7[%c2_95, %c0_96, %c0_97] : memref<4x384x128xf32, #tpu.memory_space<vmem>>, vector<1x384x128xf32>
    %133 = vector.shape_cast %132 : vector<1x384x128xf32> to vector<384x128xf32>
    %cst_98 = arith.constant dense<0.000000e+00> : vector<128x128xf32>
    %134 = tpu.matmul %131, %133, %cst_98 {dimension_numbers = #tpu.dot_dimension_numbers<[1], [0], [0], [1], [0, 0, 1, 1], [], []>} : vector<128x384xf32>, vector<384x128xf32>, vector<128x128xf32> -> vector<128x128xf32>
    %c2_99 = arith.constant 2 : index
    %c0_100 = arith.constant 0 : index
    %c0_101 = arith.constant 0 : index
    %135 = vector.load %arg8[%c2_99, %c0_100, %c0_101] : memref<4x1x128xf32, #tpu.memory_space<vmem>>, vector<1x1x128xf32>
    %136 = vector.shape_cast %135 : vector<1x1x128xf32> to vector<1x128xf32>
    %137 = vector.broadcast %136 : vector<1x128xf32> to vector<128x128xf32>
    %138 = arith.addf %134, %137 : vector<128x128xf32>
    %139 = arith.addf %138, %106 : vector<128x128xf32>
    %c2_102 = arith.constant 2 : index
    %c0_103 = arith.constant 0 : index
    %c0_104 = arith.constant 0 : index
    %140 = vector.load %arg11[%c2_102, %c0_103, %c0_104] : memref<4x1x128xf32, #tpu.memory_space<vmem>>, vector<1x1x128xf32>
    %141 = vector.shape_cast %140 : vector<1x1x128xf32> to vector<1x128xf32>
    %cst_105 = arith.constant 0.000000e+00 : f32
    %142 = vector.broadcast %cst_105 : f32 to vector<128x128xf32>
    %143 = arith.cmpf oge, %139, %142 : vector<128x128xf32>
    %144 = vector.broadcast %141 : vector<1x128xf32> to vector<128x128xf32>
    %145 = arith.mulf %144, %139 : vector<128x128xf32>
    %146 = arith.select %143, %139, %145 : vector<128x128xi1>, vector<128x128xf32>
    %c3 = arith.constant 3 : index
    %c0_106 = arith.constant 0 : index
    %c0_107 = arith.constant 0 : index
    %147 = vector.load %arg9[%c3, %c0_106, %c0_107] : memref<4x128x128xf32, #tpu.memory_space<vmem>>, vector<1x128x128xf32>
    %148 = vector.shape_cast %147 : vector<1x128x128xf32> to vector<128x128xf32>
    %cst_108 = arith.constant dense<0.000000e+00> : vector<128x128xf32>
    %149 = tpu.matmul %146, %148, %cst_108 {dimension_numbers = #tpu.dot_dimension_numbers<[1], [0], [0], [1], [0, 0, 1, 1], [], []>} : vector<128x128xf32>, vector<128x128xf32>, vector<128x128xf32> -> vector<128x128xf32>
    %c3_109 = arith.constant 3 : index
    %c0_110 = arith.constant 0 : index
    %c0_111 = arith.constant 0 : index
    %150 = vector.load %arg10[%c3_109, %c0_110, %c0_111] : memref<4x1x128xf32, #tpu.memory_space<vmem>>, vector<1x1x128xf32>
    %151 = vector.shape_cast %150 : vector<1x1x128xf32> to vector<1x128xf32>
    %152 = vector.broadcast %151 : vector<1x128xf32> to vector<128x128xf32>
    %153 = arith.addf %149, %152 : vector<128x128xf32>
    %c3_112 = arith.constant 3 : index
    %c0_113 = arith.constant 0 : index
    %c0_114 = arith.constant 0 : index
    %154 = vector.load %arg3[%c3_112, %c0_113, %c0_114] : memref<4x128x128xf32, #tpu.memory_space<vmem>>, vector<1x128x128xf32>
    %155 = vector.shape_cast %154 : vector<1x128x128xf32> to vector<128x128xf32>
    %cst_115 = arith.constant dense<0.000000e+00> : vector<128x128xf32>
    %156 = tpu.matmul %146, %155, %cst_115 {dimension_numbers = #tpu.dot_dimension_numbers<[1], [0], [0], [1], [0, 0, 1, 1], [], []>} : vector<128x128xf32>, vector<128x128xf32>, vector<128x128xf32> -> vector<128x128xf32>
    %c3_116 = arith.constant 3 : index
    %c0_117 = arith.constant 0 : index
    %c0_118 = arith.constant 0 : index
    %157 = vector.load %arg4[%c3_116, %c0_117, %c0_118] : memref<4x1x128xf32, #tpu.memory_space<vmem>>, vector<1x1x128xf32>
    %158 = vector.shape_cast %157 : vector<1x1x128xf32> to vector<1x128xf32>
    %159 = vector.broadcast %158 : vector<1x128xf32> to vector<128x128xf32>
    %160 = arith.addf %156, %159 : vector<128x128xf32>
    %cst_119 = arith.constant dense<0.000000e+00> : vector<128x128xf32>
    %161 = tpu.matmul %2, %160, %cst_119 {dimension_numbers = #tpu.dot_dimension_numbers<[1], [0], [0], [1], [0, 0, 1, 1], [], []>} : vector<128x128xf32>, vector<128x128xf32>, vector<128x128xf32> -> vector<128x128xf32>
    %c3_120 = arith.constant 3 : index
    %c0_121 = arith.constant 0 : index
    %c0_122 = arith.constant 0 : index
    %162 = vector.load %arg5[%c3_120, %c0_121, %c0_122] : memref<4x1x128xf32, #tpu.memory_space<vmem>>, vector<1x1x128xf32>
    %163 = vector.shape_cast %162 : vector<1x1x128xf32> to vector<1x128xf32>
    %164 = vector.broadcast %163 : vector<1x128xf32> to vector<128x128xf32>
    %165 = arith.addf %161, %164 : vector<128x128xf32>
    %c3_123 = arith.constant 3 : index
    %c0_124 = arith.constant 0 : index
    %c0_125 = arith.constant 0 : index
    %166 = vector.load %arg6[%c3_123, %c0_124, %c0_125] : memref<4x1x128xf32, #tpu.memory_space<vmem>>, vector<1x1x128xf32>
    %167 = vector.shape_cast %166 : vector<1x1x128xf32> to vector<1x128xf32>
    %cst_126 = arith.constant 0.000000e+00 : f32
    %168 = vector.broadcast %cst_126 : f32 to vector<128x128xf32>
    %169 = arith.cmpf oge, %165, %168 : vector<128x128xf32>
    %170 = vector.broadcast %167 : vector<1x128xf32> to vector<128x128xf32>
    %171 = arith.mulf %170, %165 : vector<128x128xf32>
    %172 = arith.select %169, %165, %171 : vector<128x128xi1>, vector<128x128xf32>
    %cst_127 = arith.constant 0.000000e+00 : f32
    %173 = vector.broadcast %cst_127 : f32 to vector<16x128xf32>
    %174 = vector.extract_strided_slice %172 {offsets = [0, 0], sizes = [112, 128], strides = [1, 1]} : vector<128x128xf32> to vector<112x128xf32>
    %175 = tpu.concatenate %173, %174 in 0 : vector<16x128xf32>, vector<112x128xf32> -> vector<128x128xf32>
    %176 = vector.extract_strided_slice %172 {offsets = [16, 0], sizes = [112, 128], strides = [1, 1]} : vector<128x128xf32> to vector<112x128xf32>
    %177 = tpu.concatenate %176, %173 in 0 : vector<112x128xf32>, vector<16x128xf32> -> vector<128x128xf32>
    %178 = tpu.concatenate %175, %172, %177 in 1 : vector<128x128xf32>, vector<128x128xf32>, vector<128x128xf32> -> vector<128x384xf32>
    %c3_128 = arith.constant 3 : index
    %c0_129 = arith.constant 0 : index
    %c0_130 = arith.constant 0 : index
    %179 = vector.load %arg7[%c3_128, %c0_129, %c0_130] : memref<4x384x128xf32, #tpu.memory_space<vmem>>, vector<1x384x128xf32>
    %180 = vector.shape_cast %179 : vector<1x384x128xf32> to vector<384x128xf32>
    %cst_131 = arith.constant dense<0.000000e+00> : vector<128x128xf32>
    %181 = tpu.matmul %178, %180, %cst_131 {dimension_numbers = #tpu.dot_dimension_numbers<[1], [0], [0], [1], [0, 0, 1, 1], [], []>} : vector<128x384xf32>, vector<384x128xf32>, vector<128x128xf32> -> vector<128x128xf32>
    %c3_132 = arith.constant 3 : index
    %c0_133 = arith.constant 0 : index
    %c0_134 = arith.constant 0 : index
    %182 = vector.load %arg8[%c3_132, %c0_133, %c0_134] : memref<4x1x128xf32, #tpu.memory_space<vmem>>, vector<1x1x128xf32>
    %183 = vector.shape_cast %182 : vector<1x1x128xf32> to vector<1x128xf32>
    %184 = vector.broadcast %183 : vector<1x128xf32> to vector<128x128xf32>
    %185 = arith.addf %181, %184 : vector<128x128xf32>
    %186 = arith.addf %185, %153 : vector<128x128xf32>
    %c3_135 = arith.constant 3 : index
    %c0_136 = arith.constant 0 : index
    %c0_137 = arith.constant 0 : index
    %187 = vector.load %arg11[%c3_135, %c0_136, %c0_137] : memref<4x1x128xf32, #tpu.memory_space<vmem>>, vector<1x1x128xf32>
    %188 = vector.shape_cast %187 : vector<1x1x128xf32> to vector<1x128xf32>
    %cst_138 = arith.constant 0.000000e+00 : f32
    %189 = vector.broadcast %cst_138 : f32 to vector<128x128xf32>
    %190 = arith.cmpf oge, %186, %189 : vector<128x128xf32>
    %191 = vector.broadcast %188 : vector<1x128xf32> to vector<128x128xf32>
    %192 = arith.mulf %191, %186 : vector<128x128xf32>
    %193 = arith.select %190, %186, %192 : vector<128x128xi1>, vector<128x128xf32>
    %c0_139 = arith.constant 0 : index
    %c0_140 = arith.constant 0 : index
    %c0_141 = arith.constant 0 : index
    %194 = vector.load %arg13[%c0_139, %c0_140, %c0_141] : memref<1x128x128xf32, #tpu.memory_space<vmem>>, vector<1x128x128xf32>
    %195 = vector.shape_cast %194 : vector<1x128x128xf32> to vector<128x128xf32>
    %196 = vector.shape_cast %193 : vector<128x128xf32> to vector<1x128x128xf32>
    tpu.vector_store %arg13[%c0_139, %c0_140, %c0_141], %196 {strides = array<i32>} : memref<1x128x128xf32, #tpu.memory_space<vmem>>, vector<1x128x128xf32>,
    return
  }
  func.func @transform_0(%arg0: i32) -> (i32, i32, i32) {
    %c0_i32 = arith.constant 0 : i32
    %c0_i32_0 = arith.constant 0 : i32
    %c0_i32_1 = arith.constant 0 : i32
    return %arg0, %c0_i32, %c0_i32_0 : i32, i32, i32
  }
  func.func @transform_1(%arg0: i32) -> (i32, i32) {
    %c0_i32 = arith.constant 0 : i32
    %c0_i32_0 = arith.constant 0 : i32
    %c0_i32_1 = arith.constant 0 : i32
    return %c0_i32, %c0_i32_0 : i32, i32
  }
  func.func @transform_2(%arg0: i32) -> (i32, i32, i32) {
    %c0_i32 = arith.constant 0 : i32
    %c0_i32_0 = arith.constant 0 : i32
    %c0_i32_1 = arith.constant 0 : i32
    %c0_i32_2 = arith.constant 0 : i32
    return %c0_i32, %c0_i32_0, %c0_i32_1 : i32, i32, i32
  }
  func.func @transform_3(%arg0: i32) -> (i32, i32, i32) {
    %c0_i32 = arith.constant 0 : i32
    %c0_i32_0 = arith.constant 0 : i32
    %c0_i32_1 = arith.constant 0 : i32
    %c0_i32_2 = arith.constant 0 : i32
    return %c0_i32, %c0_i32_0, %c0_i32_1 : i32, i32, i32
  }
  func.func @transform_4(%arg0: i32) -> (i32, i32, i32) {
    %c0_i32 = arith.constant 0 : i32
    %c0_i32_0 = arith.constant 0 : i32
    %c0_i32_1 = arith.constant 0 : i32
    %c0_i32_2 = arith.constant 0 : i32
    return %c0_i32, %c0_i32_0, %c0_i32_1 : i32, i32, i32
  }
  func.func @transform_5(%arg0: i32) -> (i32, i32, i32) {
    %c0_i32 = arith.constant 0 : i32
    %c0_i32_0 = arith.constant 0 : i32
    %c0_i32_1 = arith.constant 0 : i32
    %c0_i32_2 = arith.constant 0 : i32
    return %c0_i32, %c0_i32_0, %c0_i32_1 : i32, i32, i32
  }
  func.func @transform_6(%arg0: i32) -> (i32, i32, i32) {
    %c0_i32 = arith.constant 0 : i32
    %c0_i32_0 = arith.constant 0 : i32
    %c0_i32_1 = arith.constant 0 : i32
    %c0_i32_2 = arith.constant 0 : i32
    return %c0_i32, %c0_i32_0, %c0_i32_1 : i32, i32, i32
  }
  func.func @transform_7(%arg0: i32) -> (i32, i32, i32) {
    %c0_i32 = arith.constant 0 : i32
    %c0_i32_0 = arith.constant 0 : i32
    %c0_i32_1 = arith.constant 0 : i32
    %c0_i32_2 = arith.constant 0 : i32
    return %c0_i32, %c0_i32_0, %c0_i32_1 : i32, i32, i32
  }
  func.func @transform_8(%arg0: i32) -> (i32, i32, i32) {
    %c0_i32 = arith.constant 0 : i32
    %c0_i32_0 = arith.constant 0 : i32
    %c0_i32_1 = arith.constant 0 : i32
    %c0_i32_2 = arith.constant 0 : i32
    return %c0_i32, %c0_i32_0, %c0_i32_1 : i32, i32, i32
  }
  func.func @transform_9(%arg0: i32) -> (i32, i32, i32) {
    %c0_i32 = arith.constant 0 : i32
    %c0_i32_0 = arith.constant 0 : i32
    %c0_i32_1 = arith.constant 0 : i32
    %c0_i32_2 = arith.constant 0 : i32
    return %c0_i32, %c0_i32_0, %c0_i32_1 : i32, i32, i32
  }
  func.func @transform_10(%arg0: i32) -> (i32, i32, i32) {
    %c0_i32 = arith.constant 0 : i32
    %c0_i32_0 = arith.constant 0 : i32
    %c0_i32_1 = arith.constant 0 : i32
    %c0_i32_2 = arith.constant 0 : i32
    return %c0_i32, %c0_i32_0, %c0_i32_1 : i32, i32, i32
  }
  func.func @transform_11(%arg0: i32) -> (i32, i32, i32) {
    %c0_i32 = arith.constant 0 : i32
    %c0_i32_0 = arith.constant 0 : i32
    %c0_i32_1 = arith.constant 0 : i32
    return %arg0, %c0_i32, %c0_i32_0 : i32, i32, i32
  }
  func.func @transform_12(%arg0: i32) -> (i32, i32, i32) {
    %c0_i32 = arith.constant 0 : i32
    %c0_i32_0 = arith.constant 0 : i32
    %c0_i32_1 = arith.constant 0 : i32
    return %arg0, %c0_i32, %c0_i32_0 : i32, i32, i32
  }
}

</mosaic_0001>

<llo_original>
// kernel: graph_autoencoder_forward.1
$region0: #{graph_autoencoder_forward.1}
  #allocation0 [shape = 'u32[]', space=smem, size = 0x4, offset = 0x4, fixed_abs, tag = 'smem constant byte address 0x4 - core index']
  #allocation1 [shape = 'u32[72,128]{1,0:T(1,128)}', space=vmem, size = 0x9000, scoped, tag = 'internal scratch']
  %s0 = inlined_call_operand.vmem [shape: f32[2,128,128], index: 0, kind: input, shape index: {}]
  %s1 = inlined_call_operand.vmem [shape: f32[128,128], index: 1, kind: input, shape index: {}]
  %s2 = inlined_call_operand.vmem [shape: f32[4,128,128], index: 2, kind: input, shape index: {}]
  %s3 = inlined_call_operand.vmem [shape: f32[4,1,128], index: 3, kind: input, shape index: {}]
  %s4 = inlined_call_operand.vmem [shape: f32[4,1,128], index: 4, kind: input, shape index: {}]
  %s5 = inlined_call_operand.vmem [shape: f32[4,1,128], index: 5, kind: input, shape index: {}]
  %s6 = inlined_call_operand.vmem [shape: f32[4,384,128], index: 6, kind: input, shape index: {}]
  %s7 = inlined_call_operand.vmem [shape: f32[4,1,128], index: 7, kind: input, shape index: {}]
  %s8 = inlined_call_operand.vmem [shape: f32[4,128,128], index: 8, kind: input, shape index: {}]
  %s9 = inlined_call_operand.vmem [shape: f32[4,1,128], index: 9, kind: input, shape index: {}]
  %s10 = inlined_call_operand.vmem [shape: f32[4,1,128], index: 10, kind: input, shape index: {}]
  %s11 = inlined_call_operand.hbm [shape: f32[2,128,128], index: 11, kind: output, shape index: {0}]
  %s12 = inlined_call_operand.vmem [shape: f32[2,128,128], index: 12, kind: output, shape index: {1}]
  %13 = xla_tuple %s11, %s12
  %s14 = sld [smem:[#allocation0]]
  $region85: #{graph_autoencoder_forward.1} parent=0
    _
  %s16 = ssub.s32 1, %s14
  %s17 = scalar_select 0, %s16, %s14
  $region1: #{graph_autoencoder_forward.1} parent=0
    #allocation2 [shape = 'u8[131072]{0}', space=vmem, size = 0x20000, scoped, tag = 'output window, operand 0']
    #allocation3 [shape = 's32[2]{0}', space=sflag, size = 0x8, scoped, tag = 'scoped memory for graph_autoencoder_forward.1']
    %18 = vsyncpa [#allocation3], 0
    %s19 = scalar_lea.sflag [#allocation3], 1
    %20 = vsyncpa %s19, 0
    loop: start=0, step=1, limit=4
    $region2: #{graph_autoencoder_forward.1} parent=1 // loop_pre_header
      _
    $region3: #{graph_autoencoder_forward.1} parent=1 // loop_header
      %s22 = sphi 0, %s26
      %p23 = scmp.ge.s32.totalorder %s22, 4
      %s32 = sphi 0, %s34
      %s35 = sphi 0, %s32
      %s36 = sphi 0, %s35
      %s52 = sphi 0, %s36
      %s56 = sphi 0, %s56
      %s58 = sphi 0, %s56
      %s59 = sphi 0, %s58
      %s73 = sphi 0, %s59
      %s77 = sphi 0, %s77
      %s79 = sphi 0, %s77
      %s80 = sphi 0, %s79
      %s94 = sphi 0, %s80
      %s98 = sphi 0, %s98
      %s100 = sphi 0, %s98
      %s101 = sphi 0, %s100
      %s115 = sphi 0, %s101
      %s119 = sphi 0, %s119
      %s121 = sphi 0, %s119
      %s122 = sphi 0, %s121
      %s136 = sphi 0, %s122
      %s140 = sphi 0, %s140
      %s142 = sphi 0, %s140
      %s143 = sphi 0, %s142
      %s157 = sphi 0, %s143
      %s161 = sphi 0, %s161
      %s163 = sphi 0, %s161
      %s164 = sphi 0, %s163
      %s178 = sphi 0, %s164
      %s182 = sphi 0, %s182
      %s184 = sphi 0, %s182
      %s185 = sphi 0, %s184
      %s199 = sphi 0, %s185
      %s203 = sphi 0, %s203
      %s205 = sphi 0, %s203
      %s206 = sphi 0, %s205
      %s220 = sphi 0, %s206
      %s224 = sphi 0, %s224
      %s226 = sphi 0, %s224
      %s227 = sphi 0, %s226
      %s241 = sphi 0, %s227
      %s245 = sphi 0, %s245
      %s247 = sphi 0, %s245
      %s248 = sphi 0, %s247
      %s262 = sphi 0, %s248
      %s268 = sphi 0, %s270
      %s271 = sphi 0, %s268
      %s272 = sphi 0, %s271
      %s288 = sphi 0, %s272
      %s294 = sphi 0, %s296
      %s297 = sphi 0, %s294
      %s298 = sphi 0, %s297
      %s314 = sphi 0, %s298
    $region4: #{graph_autoencoder_forward.1} parent=1 // loop_header_branch
      %25 = sbr.rel (%p23) target = $region8
    $region5: #{graph_autoencoder_forward.1} parent=1 // loop_body
      %s27 = ssub.s32 %s22, 1
      %s28 = ssub.s32 %s22, 2
      %s29 = sadd.s32 %s22, 1
      %s30 = ssub.s32 %s22, %s29
      %p31 = scmp.eq.s32.totalorder %s30, 0
      %s33 = sadd.s32 %s32, 1
      %s34 = scalar_select %p31, %s32, %s33
      %p37 = pneg %p31
      %p38 = scmp.eq.s32.totalorder %s22, 1
      %p39 = por %p37, %p38
      %p40 = scmp.ne.s32.totalorder %s32, %s35
      %p41 = scmp.eq.s32.totalorder %s22, 0
      %p42 = por %p40, %p41
      %p43 = scmp.ne.s32.totalorder %s32, %s35
      %p44 = scmp.eq.s32.totalorder %s27, 1
      %p45 = por %p43, %p44
      %p46 = scmp.ne.s32.totalorder %s35, %s36
      %p47 = scmp.eq.s32.totalorder %s27, 0
      %p48 = por %p46, %p47
      %p49 = scmp.ne.s32.totalorder %s35, %s36
      %p50 = scmp.eq.s32.totalorder %s28, 1
      %p51 = por %p49, %p50
      %p53 = scmp.ne.s32.totalorder %s36, %s52
      %p54 = scmp.eq.s32.totalorder %s28, 0
      %p55 = por %p53, %p54
      %s57 = sadd.s32 %s56, 1
      %p60 = scmp.eq.s32.totalorder %s22, 1
      %p61 = scmp.ne.s32.totalorder %s56, %s58
      %p62 = scmp.eq.s32.totalorder %s22, 0
      %p63 = por %p61, %p62
      %p64 = scmp.ne.s32.totalorder %s56, %s58
      %p65 = scmp.eq.s32.totalorder %s27, 1
      %p66 = por %p64, %p65
      %p67 = scmp.ne.s32.totalorder %s58, %s59
      %p68 = scmp.eq.s32.totalorder %s27, 0
      %p69 = por %p67, %p68
      %p70 = scmp.ne.s32.totalorder %s58, %s59
      %p71 = scmp.eq.s32.totalorder %s28, 1
      %p72 = por %p70, %p71
      %p74 = scmp.ne.s32.totalorder %s59, %s73
      %p75 = scmp.eq.s32.totalorder %s28, 0
      %p76 = por %p74, %p75
      %s78 = sadd.s32 %s77, 1
      %p81 = scmp.eq.s32.totalorder %s22, 1
      %p82 = scmp.ne.s32.totalorder %s77, %s79
      %p83 = scmp.eq.s32.totalorder %s22, 0
      %p84 = por %p82, %p83
      %p85 = scmp.ne.s32.totalorder %s77, %s79
      %p86 = scmp.eq.s32.totalorder %s27, 1
      %p87 = por %p85, %p86
      %p88 = scmp.ne.s32.totalorder %s79, %s80
      %p89 = scmp.eq.s32.totalorder %s27, 0
      %p90 = por %p88, %p89
      %p91 = scmp.ne.s32.totalorder %s79, %s80
      %p92 = scmp.eq.s32.totalorder %s28, 1
      %p93 = por %p91, %p92
      %p95 = scmp.ne.s32.totalorder %s80, %s94
      %p96 = scmp.eq.s32.totalorder %s28, 0
      %p97 = por %p95, %p96
      %s99 = sadd.s32 %s98, 1
      %p102 = scmp.eq.s32.totalorder %s22, 1
      %p103 = scmp.ne.s32.totalorder %s98, %s100
      %p104 = scmp.eq.s32.totalorder %s22, 0
      %p105 = por %p103, %p104
      %p106 = scmp.ne.s32.totalorder %s98, %s100
      %p107 = scmp.eq.s32.totalorder %s27, 1
      %p108 = por %p106, %p107
      %p109 = scmp.ne.s32.totalorder %s100, %s101
      %p110 = scmp.eq.s32.totalorder %s27, 0
      %p111 = por %p109, %p110
      %p112 = scmp.ne.s32.totalorder %s100, %s101
      %p113 = scmp.eq.s32.totalorder %s28, 1
      %p114 = por %p112, %p113
      %p116 = scmp.ne.s32.totalorder %s101, %s115
      %p117 = scmp.eq.s32.totalorder %s28, 0
      %p118 = por %p116, %p117
      %s120 = sadd.s32 %s119, 1
      %p123 = scmp.eq.s32.totalorder %s22, 1
      %p124 = scmp.ne.s32.totalorder %s119, %s121
      %p125 = scmp.eq.s32.totalorder %s22, 0
      %p126 = por %p124, %p125
      %p127 = scmp.ne.s32.totalorder %s119, %s121
      %p128 = scmp.eq.s32.totalorder %s27, 1
      %p129 = por %p127, %p128
      %p130 = scmp.ne.s32.totalorder %s121, %s122
      %p131 = scmp.eq.s32.totalorder %s27, 0
      %p132 = por %p130, %p131
      %p133 = scmp.ne.s32.totalorder %s121, %s122
      %p134 = scmp.eq.s32.totalorder %s28, 1
      %p135 = por %p133, %p134
      %p137 = scmp.ne.s32.totalorder %s122, %s136
      %p138 = scmp.eq.s32.totalorder %s28, 0
      %p139 = por %p137, %p138
      %s141 = sadd.s32 %s140, 1
      %p144 = scmp.eq.s32.totalorder %s22, 1
      %p145 = scmp.ne.s32.totalorder %s140, %s142
      %p146 = scmp.eq.s32.totalorder %s22, 0
      %p147 = por %p145, %p146
      %p148 = scmp.ne.s32.totalorder %s140, %s142
      %p149 = scmp.eq.s32.totalorder %s27, 1
      %p150 = por %p148, %p149
      %p151 = scmp.ne.s32.totalorder %s142, %s143
      %p152 = scmp.eq.s32.totalorder %s27, 0
      %p153 = por %p151, %p152
      %p154 = scmp.ne.s32.totalorder %s142, %s143
      %p155 = scmp.eq.s32.totalorder %s28, 1
      %p156 = por %p154, %p155
      %p158 = scmp.ne.s32.totalorder %s143, %s157
      %p159 = scmp.eq.s32.totalorder %s28, 0
      %p160 = por %p158, %p159
      %s162 = sadd.s32 %s161, 1
      %p165 = scmp.eq.s32.totalorder %s22, 1
      %p166 = scmp.ne.s32.totalorder %s161, %s163
      %p167 = scmp.eq.s32.totalorder %s22, 0
      %p168 = por %p166, %p167
      %p169 = scmp.ne.s32.totalorder %s161, %s163
      %p170 = scmp.eq.s32.totalorder %s27, 1
      %p171 = por %p169, %p170
      %p172 = scmp.ne.s32.totalorder %s163, %s164
      %p173 = scmp.eq.s32.totalorder %s27, 0
      %p174 = por %p172, %p173
      %p175 = scmp.ne.s32.totalorder %s163, %s164
      %p176 = scmp.eq.s32.totalorder %s28, 1
      %p177 = por %p175, %p176
      %p179 = scmp.ne.s32.totalorder %s164, %s178
      %p180 = scmp.eq.s32.totalorder %s28, 0
      %p181 = por %p179, %p180
      %s183 = sadd.s32 %s182, 1
      %p186 = scmp.eq.s32.totalorder %s22, 1
      %p187 = scmp.ne.s32.totalorder %s182, %s184
      %p188 = scmp.eq.s32.totalorder %s22, 0
      %p189 = por %p187, %p188
      %p190 = scmp.ne.s32.totalorder %s182, %s184
      %p191 = scmp.eq.s32.totalorder %s27, 1
      %p192 = por %p190, %p191
      %p193 = scmp.ne.s32.totalorder %s184, %s185
      %p194 = scmp.eq.s32.totalorder %s27, 0
      %p195 = por %p193, %p194
      %p196 = scmp.ne.s32.totalorder %s184, %s185
      %p197 = scmp.eq.s32.totalorder %s28, 1
      %p198 = por %p196, %p197
      %p200 = scmp.ne.s32.totalorder %s185, %s199
      %p201 = scmp.eq.s32.totalorder %s28, 0
      %p202 = por %p200, %p201
      %s204 = sadd.s32 %s203, 1
      %p207 = scmp.eq.s32.totalorder %s22, 1
      %p208 = scmp.ne.s32.totalorder %s203, %s205
      %p209 = scmp.eq.s32.totalorder %s22, 0
      %p210 = por %p208, %p209
      %p211 = scmp.ne.s32.totalorder %s203, %s205
      %p212 = scmp.eq.s32.totalorder %s27, 1
      %p213 = por %p211, %p212
      %p214 = scmp.ne.s32.totalorder %s205, %s206
      %p215 = scmp.eq.s32.totalorder %s27, 0
      %p216 = por %p214, %p215
      %p217 = scmp.ne.s32.totalorder %s205, %s206
      %p218 = scmp.eq.s32.totalorder %s28, 1
      %p219 = por %p217, %p218
      %p221 = scmp.ne.s32.totalorder %s206, %s220
      %p222 = scmp.eq.s32.totalorder %s28, 0
      %p223 = por %p221, %p222
      %s225 = sadd.s32 %s224, 1
      %p228 = scmp.eq.s32.totalorder %s22, 1
      %p229 = scmp.ne.s32.totalorder %s224, %s226
      %p230 = scmp.eq.s32.totalorder %s22, 0
      %p231 = por %p229, %p230
      %p232 = scmp.ne.s32.totalorder %s224, %s226
      %p233 = scmp.eq.s32.totalorder %s27, 1
      %p234 = por %p232, %p233
      %p235 = scmp.ne.s32.totalorder %s226, %s227
      %p236 = scmp.eq.s32.totalorder %s27, 0
      %p237 = por %p235, %p236
      %p238 = scmp.ne.s32.totalorder %s226, %s227
      %p239 = scmp.eq.s32.totalorder %s28, 1
      %p240 = por %p238, %p239
      %p242 = scmp.ne.s32.totalorder %s227, %s241
      %p243 = scmp.eq.s32.totalorder %s28, 0
      %p244 = por %p242, %p243
      %s246 = sadd.s32 %s245, 1
      %p249 = scmp.eq.s32.totalorder %s22, 1
      %p250 = scmp.ne.s32.totalorder %s245, %s247
      %p251 = scmp.eq.s32.totalorder %s22, 0
      %p252 = por %p250, %p251
      %p253 = scmp.ne.s32.totalorder %s245, %s247
      %p254 = scmp.eq.s32.totalorder %s27, 1
      %p255 = por %p253, %p254
      %p256 = scmp.ne.s32.totalorder %s247, %s248
      %p257 = scmp.eq.s32.totalorder %s27, 0
      %p258 = por %p256, %p257
      %p259 = scmp.ne.s32.totalorder %s247, %s248
      %p260 = scmp.eq.s32.totalorder %s28, 1
      %p261 = por %p259, %p260
      %p263 = scmp.ne.s32.totalorder %s248, %s262
      %p264 = scmp.eq.s32.totalorder %s28, 0
      %p265 = por %p263, %p264
      %s266 = ssub.s32 %s22, %s29
      %p267 = scmp.eq.s32.totalorder %s266, 0
      %s269 = sadd.s32 %s268, 1
      %s270 = scalar_select %p267, %s268, %s269
      %p273 = pneg %p267
      %p274 = scmp.eq.s32.totalorder %s22, 1
      %p275 = por %p273, %p274
      %p276 = scmp.ne.s32.totalorder %s268, %s271
      %p277 = scmp.eq.s32.totalorder %s22, 0
      %p278 = por %p276, %p277
      %p279 = scmp.ne.s32.totalorder %s268, %s271
      %p280 = scmp.eq.s32.totalorder %s27, 1
      %p281 = por %p279, %p280
      %p282 = scmp.ne.s32.totalorder %s271, %s272
      %p283 = scmp.eq.s32.totalorder %s27, 0
      %p284 = por %p282, %p283
      %p285 = scmp.ne.s32.totalorder %s271, %s272
      %p286 = scmp.eq.s32.totalorder %s28, 1
      %p287 = por %p285, %p286
      %p289 = scmp.ne.s32.totalorder %s272, %s288
      %p290 = scmp.eq.s32.totalorder %s28, 0
      %p291 = por %p289, %p290
      %s292 = ssub.s32 %s22, %s29
      %p293 = scmp.eq.s32.totalorder %s292, 0
      %s295 = sadd.s32 %s294, 1
      %s296 = scalar_select %p293, %s294, %s295
      %p299 = pneg %p293
      %p300 = scmp.eq.s32.totalorder %s22, 1
      %p301 = por %p299, %p300
      %p302 = scmp.ne.s32.totalorder %s294, %s297
      %p303 = scmp.eq.s32.totalorder %s22, 0
      %p304 = por %p302, %p303
      %p305 = scmp.ne.s32.totalorder %s294, %s297
      %p306 = scmp.eq.s32.totalorder %s27, 1
      %p307 = por %p305, %p306
      %p308 = scmp.ne.s32.totalorder %s297, %s298
      %p309 = scmp.eq.s32.totalorder %s27, 0
      %p310 = por %p308, %p309
      %p311 = scmp.ne.s32.totalorder %s297, %s298
      %p312 = scmp.eq.s32.totalorder %s28, 1
      %p313 = por %p311, %p312
      %p315 = scmp.ne.s32.totalorder %s298, %s314
      %p316 = scmp.eq.s32.totalorder %s28, 0
      %p317 = por %p315, %p316
      %p318 = scmp.le.s32.totalorder 1, %s22
      %p319 = scmp.lt.s32.totalorder %s22, 3
      %p320 = pnand %p318, %p319
      %p321 = pneg %p320
      // Predicated region
      $region9: #{graph_autoencoder_forward.1} parent=5 // pred_check
        _
      $region10: #{graph_autoencoder_forward.1} parent=5 // pred_check_branch
        %323 = sbr.rel (%p320) target = $region12
      $region11: #{graph_autoencoder_forward.1} parent=5 // pred_region
        %s324 = ssub.s32 %s22, 1
        // Predicated region
        $region13: #{graph_autoencoder_forward.1} parent=11 // pred_check
          %p325 = pneg %p69
        $region14: #{graph_autoencoder_forward.1} parent=11 // pred_check_branch
          %327 = sbr.rel (%p325) target = $region16
        $region15: #{graph_autoencoder_forward.1} parent=11 // pred_region
          _
        $region16: #{graph_autoencoder_forward.1} parent=11 // pred_fallthru
          _
        // Predicated region
        $region17: #{graph_autoencoder_forward.1} parent=11 // pred_check
          %p328 = pneg %p90
        $region18: #{graph_autoencoder_forward.1} parent=11 // pred_check_branch
          %330 = sbr.rel (%p328) target = $region20
        $region19: #{graph_autoencoder_forward.1} parent=11 // pred_region
          _
        $region20: #{graph_autoencoder_forward.1} parent=11 // pred_fallthru
          _
        // Predicated region
        $region21: #{graph_autoencoder_forward.1} parent=11 // pred_check
          %p331 = pneg %p111
        $region22: #{graph_autoencoder_forward.1} parent=11 // pred_check_branch
          %333 = sbr.rel (%p331) target = $region24
        $region23: #{graph_autoencoder_forward.1} parent=11 // pred_region
          _
        $region24: #{graph_autoencoder_forward.1} parent=11 // pred_fallthru
          _
        // Predicated region
        $region25: #{graph_autoencoder_forward.1} parent=11 // pred_check
          %p334 = pneg %p132
        $region26: #{graph_autoencoder_forward.1} parent=11 // pred_check_branch
          %336 = sbr.rel (%p334) target = $region28
        $region27: #{graph_autoencoder_forward.1} parent=11 // pred_region
          _
        $region28: #{graph_autoencoder_forward.1} parent=11 // pred_fallthru
          _
        // Predicated region
        $region29: #{graph_autoencoder_forward.1} parent=11 // pred_check
          %p337 = pneg %p153
        $region30: #{graph_autoencoder_forward.1} parent=11 // pred_check_branch
          %339 = sbr.rel (%p337) target = $region32
        $region31: #{graph_autoencoder_forward.1} parent=11 // pred_region
          _
        $region32: #{graph_autoencoder_forward.1} parent=11 // pred_fallthru
          _
        // Predicated region
        $region33: #{graph_autoencoder_forward.1} parent=11 // pred_check
          %p340 = pneg %p174
        $region34: #{graph_autoencoder_forward.1} parent=11 // pred_check_branch
          %342 = sbr.rel (%p340) target = $region36
        $region35: #{graph_autoencoder_forward.1} parent=11 // pred_region
          _
        $region36: #{graph_autoencoder_forward.1} parent=11 // pred_fallthru
          _
        // Predicated region
        $region37: #{graph_autoencoder_forward.1} parent=11 // pred_check
          %p343 = pneg %p195
        $region38: #{graph_autoencoder_forward.1} parent=11 // pred_check_branch
          %345 = sbr.rel (%p343) target = $region40
        $region39: #{graph_autoencoder_forward.1} parent=11 // pred_region
          _
        $region40: #{graph_autoencoder_forward.1} parent=11 // pred_fallthru
          _
        // Predicated region
        $region41: #{graph_autoencoder_forward.1} parent=11 // pred_check
          %p346 = pneg %p216
        $region42: #{graph_autoencoder_forward.1} parent=11 // pred_check_branch
          %348 = sbr.rel (%p346) target = $region44
        $region43: #{graph_autoencoder_forward.1} parent=11 // pred_region
          _
        $region44: #{graph_autoencoder_forward.1} parent=11 // pred_fallthru
          _
        // Predicated region
        $region45: #{graph_autoencoder_forward.1} parent=11 // pred_check
          %p349 = pneg %p237
        $region46: #{graph_autoencoder_forward.1} parent=11 // pred_check_branch
          %351 = sbr.rel (%p349) target = $region48
        $region47: #{graph_autoencoder_forward.1} parent=11 // pred_region
          _
        $region48: #{graph_autoencoder_forward.1} parent=11 // pred_fallthru
          _
        // Predicated region
        $region49: #{graph_autoencoder_forward.1} parent=11 // pred_check
          %p352 = pneg %p258
        $region50: #{graph_autoencoder_forward.1} parent=11 // pred_check_branch
          %354 = sbr.rel (%p352) target = $region52
        $region51: #{graph_autoencoder_forward.1} parent=11 // pred_region
          _
        $region52: #{graph_autoencoder_forward.1} parent=11 // pred_fallthru
          _
      $region12: #{graph_autoencoder_forward.1} parent=5 // pred_fallthru
        _
      %p355 = scmp.lt.s32.totalorder %s22, 2
      // Predicated region
      $region53: #{graph_autoencoder_forward.1} parent=5 // pred_check
        %p356 = pneg %p355
      $region54: #{graph_autoencoder_forward.1} parent=5 // pred_check_branch
        %358 = sbr.rel (%p356) target = $region56
      $region55: #{graph_autoencoder_forward.1} parent=5 // pred_region
        // Predicated region
        $region57: #{graph_autoencoder_forward.1} parent=55 // pred_check
          %p359 = pneg %p42
        $region58: #{graph_autoencoder_forward.1} parent=55 // pred_check_branch
          %361 = sbr.rel (%p359) target = $region60
        $region59: #{graph_autoencoder_forward.1} parent=55 // pred_region
          %p362 = scmp.lt.s32.totalorder %s22, 1
          %s363 = scalar_select %p362, %s22, 1
          %s364 = smul.addr %s363, 16
          %s365 = smul.addr %s364, 8
          %s366 = scalar_lea.vmem %s0, %s365
        $region60: #{graph_autoencoder_forward.1} parent=55 // pred_fallthru
          _
      $region56: #{graph_autoencoder_forward.1} parent=5 // pred_fallthru
        _
      %p367 = scmp.le.s32.totalorder 1, %s22
      %p368 = scmp.lt.s32.totalorder %s22, 3
      %p369 = pnand %p367, %p368
      %p370 = pneg %p369
      // Predicated region
      $region61: #{graph_autoencoder_forward.1} parent=5 // pred_check
        _
      $region62: #{graph_autoencoder_forward.1} parent=5 // pred_check_branch
        %372 = sbr.rel (%p369) target = $region64
      $region63: #{graph_autoencoder_forward.1} parent=5 // pred_region
        %s373 = ssub.s32 %s22, 1
        %p374 = scmp.lt.s32.totalorder %s27, 1
        %s375 = scalar_select %p374, %s27, 1
        %s376 = smul.addr %s375, 16
        %s377 = smul.addr %s376, 8
        %s378 = scalar_lea.vmem %s0, %s377
        %p379 = pneg %p48
        %p380 = pneg %p45
        %p381 = pneg %p69
        %p382 = pneg %p66
        %p383 = pneg %p90
        %p384 = pneg %p87
        %p385 = pneg %p111
        %p386 = pneg %p108
        %p387 = pneg %p132
        %p388 = pneg %p129
        %p389 = pneg %p153
        %p390 = pneg %p150
        %p391 = pneg %p174
        %p392 = pneg %p171
        %p393 = pneg %p195
        %p394 = pneg %p192
        %p395 = pneg %p216
        %p396 = pneg %p213
        %p397 = pneg %p237
        %p398 = pneg %p234
        %p399 = pneg %p258
        %p400 = pneg %p255
        %p401 = pneg %p284
        %p402 = pneg %p281
        %s403 = sand.u32 %s271, 1
        %s404 = scalar_lea.sflag [#allocation3], %s403
        %s405 = sand.u32 %s271, 1
        %s406 = smul.addr %s405, 128
        %s407 = scalar_lea.vmem [#allocation2], %s406
        %p408 = pneg %p310
        %p409 = pneg %p307
        %p410 = scmp.lt.s32.totalorder %s27, 1
        %s411 = scalar_select %p410, %s27, 1
        %s412 = smul.addr %s411, 16
        %s413 = smul.addr %s412, 8
        %s414 = scalar_lea.vmem %s12, %s413
        %p415 = scmp.lt.s32.totalorder %s27, 1
        %s416 = scalar_select %p415, %s27, 1
        %s417 = smul.addr %s416, 16
        %s418 = smul.addr %s417, 8
        %s419 = scalar_lea.vmem %s0, %s418
        %p420 = scmp.lt.s32.totalorder %s27, 1
        %s421 = scalar_select %p420, %s27, 1
        %s422 = smul.addr %s421, 16
        %s423 = smul.addr %s422, 8
        %s424 = scalar_lea.vmem %s12, %s423
        %v425 = vld [vmem:[%s419] sm:$0xff]
        %v426 = vld [vmem:[%s419 + $0x8] sm:$0xff]
        %v427 = vld [vmem:[%s419 + $0x10] sm:$0xff]
        %v428 = vld [vmem:[%s419 + $0x18] sm:$0xff]
        %v429 = vld [vmem:[%s419 + $0x20] sm:$0xff]
        %v430 = vld [vmem:[%s419 + $0x28] sm:$0xff]
        %v431 = vld [vmem:[%s419 + $0x30] sm:$0xff]
        %v432 = vld [vmem:[%s419 + $0x38] sm:$0xff]
        %v433 = vld [vmem:[%s419 + $0x40] sm:$0xff]
        %v434 = vld [vmem:[%s419 + $0x48] sm:$0xff]
        %v435 = vld [vmem:[%s419 + $0x50] sm:$0xff]
        %v436 = vld [vmem:[%s419 + $0x58] sm:$0xff]
        %v437 = vld [vmem:[%s419 + $0x60] sm:$0xff]
        %v438 = vld [vmem:[%s419 + $0x68] sm:$0xff]
        %v439 = vld [vmem:[%s419 + $0x70] sm:$0xff]
        %v440 = vld [vmem:[%s419 + $0x78] sm:$0xff]
        %v441 = vld [vmem:[%s1] sm:$0xff]
        %v442 = vld [vmem:[%s1 + $0x8] sm:$0xff]
        %v443 = vld [vmem:[%s1 + $0x10] sm:$0xff]
        %v444 = vld [vmem:[%s1 + $0x18] sm:$0xff]
        %v445 = vld [vmem:[%s1 + $0x20] sm:$0xff]
        %v446 = vld [vmem:[%s1 + $0x28] sm:$0xff]
        %v447 = vld [vmem:[%s1 + $0x30] sm:$0xff]
        %v448 = vld [vmem:[%s1 + $0x38] sm:$0xff]
        %v449 = vld [vmem:[%s1 + $0x40] sm:$0xff]
        %v450 = vld [vmem:[%s1 + $0x48] sm:$0xff]
        %v451 = vld [vmem:[%s1 + $0x50] sm:$0xff]
        %v452 = vld [vmem:[%s1 + $0x58] sm:$0xff]
        %v453 = vld [vmem:[%s1 + $0x60] sm:$0xff]
        %v454 = vld [vmem:[%s1 + $0x68] sm:$0xff]
        %v455 = vld [vmem:[%s1 + $0x70] sm:$0xff]
        %v456 = vld [vmem:[%s1 + $0x78] sm:$0xff]
        %v457 = vld [vmem:[%s8] sm:$0xff]
        %v458 = vld [vmem:[%s8 + $0x8] sm:$0xff]
        %v459 = vld [vmem:[%s8 + $0x10] sm:$0xff]
        %v460 = vld [vmem:[%s8 + $0x18] sm:$0xff]
        %v461 = vld [vmem:[%s8 + $0x20] sm:$0xff]
        %v462 = vld [vmem:[%s8 + $0x28] sm:$0xff]
        %v463 = vld [vmem:[%s8 + $0x30] sm:$0xff]
        %v464 = vld [vmem:[%s8 + $0x38] sm:$0xff]
        %v465 = vld [vmem:[%s8 + $0x40] sm:$0xff]
        %v466 = vld [vmem:[%s8 + $0x48] sm:$0xff]
        %v467 = vld [vmem:[%s8 + $0x50] sm:$0xff]
        %v468 = vld [vmem:[%s8 + $0x58] sm:$0xff]
        %v469 = vld [vmem:[%s8 + $0x60] sm:$0xff]
        %v470 = vld [vmem:[%s8 + $0x68] sm:$0xff]
        %v471 = vld [vmem:[%s8 + $0x70] sm:$0xff]
        %v472 = vld [vmem:[%s8 + $0x78] sm:$0xff]
        %v473 = vld [vmem:[%s9] sm:$0x1]
        %v475 = vperm.slane %v473, 0
        %477 = vmatpush.msra.mxu0 %v472
        %478 = vmatpush.msra.mxu0 %v471
        %479 = vmatpush.msra.mxu0 %v470
        %480 = vmatpush.msra.mxu0 %v469
        %481 = vmatpush.msra.mxu0 %v468
        %482 = vmatpush.msra.mxu0 %v467
        %483 = vmatpush.msra.mxu0 %v466
        %484 = vmatpush.msra.mxu0 %v465
        %485 = vmatpush.msra.mxu0 %v464
        %486 = vmatpush.msra.mxu0 %v463
        %487 = vmatpush.msra.mxu0 %v462
        %488 = vmatpush.msra.mxu0 %v461
        %489 = vmatpush.msra.mxu0 %v460
        %490 = vmatpush.msra.mxu0 %v459
        %491 = vmatpush.msra.mxu0 %v458
        %492 = vmatpush.msra.mxu0 %v457
        %493 = vmatmul.f32.gmra.mxu0 %v425
        %v494 = vpop.f32.mrf.mxu0
        %v495 = vadd.f32 %v475, %v494
        %496 = vmatmul.f32.gmra.mxu0 %v426
        %v497 = vpop.f32.mrf.mxu0
        %v498 = vadd.f32 %v475, %v497
        %499 = vmatmul.f32.gmra.mxu0 %v427
        %v500 = vpop.f32.mrf.mxu0
        %v501 = vadd.f32 %v475, %v500
        %502 = vmatmul.f32.gmra.mxu0 %v428
        %v503 = vpop.f32.mrf.mxu0
        %v504 = vadd.f32 %v475, %v503
        %505 = vmatmul.f32.gmra.mxu0 %v429
        %v506 = vpop.f32.mrf.mxu0
        %v507 = vadd.f32 %v475, %v506
        %508 = vmatmul.f32.gmra.mxu0 %v430
        %v509 = vpop.f32.mrf.mxu0
        %v510 = vadd.f32 %v475, %v509
        %511 = vmatmul.f32.gmra.mxu0 %v431
        %v512 = vpop.f32.mrf.mxu0
        %v513 = vadd.f32 %v475, %v512
        %514 = vmatmul.f32.gmra.mxu0 %v432
        %v515 = vpop.f32.mrf.mxu0
        %v516 = vadd.f32 %v475, %v515
        %517 = vmatmul.f32.gmra.mxu0 %v433
        %v518 = vpop.f32.mrf.mxu0
        %v519 = vadd.f32 %v475, %v518
        %520 = vmatmul.f32.gmra.mxu0 %v434
        %v521 = vpop.f32.mrf.mxu0
        %v522 = vadd.f32 %v475, %v521
        %523 = vmatmul.f32.gmra.mxu0 %v435
        %v524 = vpop.f32.mrf.mxu0
        %v525 = vadd.f32 %v475, %v524
        %526 = vmatmul.f32.gmra.mxu0 %v436
        %v527 = vpop.f32.mrf.mxu0
        %v528 = vadd.f32 %v475, %v527
        %529 = vmatmul.f32.gmra.mxu0 %v437
        %v530 = vpop.f32.mrf.mxu0
        %v531 = vadd.f32 %v475, %v530
        %532 = vmatmul.f32.gmra.mxu0 %v438
        %v533 = vpop.f32.mrf.mxu0
        %v534 = vadd.f32 %v475, %v533
        %535 = vmatmul.f32.gmra.mxu0 %v439
        %v536 = vpop.f32.mrf.mxu0
        %v537 = vadd.f32 %v475, %v536
        %538 = vmatmul.f32.gmra.mxu0 %v440
        %v539 = vpop.f32.mrf.mxu0
        %v540 = vadd.f32 %v475, %v539
        %541 = vdwg.mxu0
        %v542 = vld [vmem:[%s2] sm:$0xff]
        %v543 = vld [vmem:[%s2 + $0x8] sm:$0xff]
        %v544 = vld [vmem:[%s2 + $0x10] sm:$0xff]
        %v545 = vld [vmem:[%s2 + $0x18] sm:$0xff]
        %v546 = vld [vmem:[%s2 + $0x20] sm:$0xff]
        %v547 = vld [vmem:[%s2 + $0x28] sm:$0xff]
        %v548 = vld [vmem:[%s2 + $0x30] sm:$0xff]
        %v549 = vld [vmem:[%s2 + $0x38] sm:$0xff]
        %v550 = vld [vmem:[%s2 + $0x40] sm:$0xff]
        %v551 = vld [vmem:[%s2 + $0x48] sm:$0xff]
        %v552 = vld [vmem:[%s2 + $0x50] sm:$0xff]
        %v553 = vld [vmem:[%s2 + $0x58] sm:$0xff]
        %v554 = vld [vmem:[%s2 + $0x60] sm:$0xff]
        %v555 = vld [vmem:[%s2 + $0x68] sm:$0xff]
        %v556 = vld [vmem:[%s2 + $0x70] sm:$0xff]
        %v557 = vld [vmem:[%s2 + $0x78] sm:$0xff]
        %v558 = vld [vmem:[%s3] sm:$0x1]
        %v560 = vperm.slane %v558, 0
        %562 = vmatpush.msra.mxu0 %v557
        %563 = vmatpush.msra.mxu0 %v556
        %564 = vmatpush.msra.mxu0 %v555
        %565 = vmatpush.msra.mxu0 %v554
        %566 = vmatpush.msra.mxu0 %v553
        %567 = vmatpush.msra.mxu0 %v552
        %568 = vmatpush.msra.mxu0 %v551
        %569 = vmatpush.msra.mxu0 %v550
        %570 = vmatpush.msra.mxu0 %v549
        %571 = vmatpush.msra.mxu0 %v548
        %572 = vmatpush.msra.mxu0 %v547
        %573 = vmatpush.msra.mxu0 %v546
        %574 = vmatpush.msra.mxu0 %v545
        %575 = vmatpush.msra.mxu0 %v544
        %576 = vmatpush.msra.mxu0 %v543
        %577 = vmatpush.msra.mxu0 %v542
        %578 = vmatmul.f32.gmra.mxu0 %v425
        %v579 = vpop.f32.mrf.mxu0
        %v580 = vadd.f32 %v560, %v579
        %581 = vmatmul.f32.gmra.mxu0 %v426
        %v582 = vpop.f32.mrf.mxu0
        %v583 = vadd.f32 %v560, %v582
        %584 = vmatmul.f32.gmra.mxu0 %v427
        %v585 = vpop.f32.mrf.mxu0
        %v586 = vadd.f32 %v560, %v585
        %587 = vmatmul.f32.gmra.mxu0 %v428
        %v588 = vpop.f32.mrf.mxu0
        %v589 = vadd.f32 %v560, %v588
        %590 = vmatmul.f32.gmra.mxu0 %v429
        %v591 = vpop.f32.mrf.mxu0
        %v592 = vadd.f32 %v560, %v591
        %593 = vmatmul.f32.gmra.mxu0 %v430
        %v594 = vpop.f32.mrf.mxu0
        %v595 = vadd.f32 %v560, %v594
        %596 = vmatmul.f32.gmra.mxu0 %v431
        %v597 = vpop.f32.mrf.mxu0
        %v598 = vadd.f32 %v560, %v597
        %599 = vmatmul.f32.gmra.mxu0 %v432
        %v600 = vpop.f32.mrf.mxu0
        %v601 = vadd.f32 %v560, %v600
        %602 = vmatmul.f32.gmra.mxu0 %v433
        %v603 = vpop.f32.mrf.mxu0
        %v604 = vadd.f32 %v560, %v603
        %605 = vmatmul.f32.gmra.mxu0 %v434
        %v606 = vpop.f32.mrf.mxu0
        %v607 = vadd.f32 %v560, %v606
        %608 = vmatmul.f32.gmra.mxu0 %v435
        %v609 = vpop.f32.mrf.mxu0
        %v610 = vadd.f32 %v560, %v609
        %611 = vmatmul.f32.gmra.mxu0 %v436
        %v612 = vpop.f32.mrf.mxu0
        %v613 = vadd.f32 %v560, %v612
        %614 = vmatmul.f32.gmra.mxu0 %v437
        %v615 = vpop.f32.mrf.mxu0
        %v616 = vadd.f32 %v560, %v615
        %617 = vmatmul.f32.gmra.mxu0 %v438
        %v618 = vpop.f32.mrf.mxu0
        %v619 = vadd.f32 %v560, %v618
        %620 = vmatmul.f32.gmra.mxu0 %v439
        %v621 = vpop.f32.mrf.mxu0
        %v622 = vadd.f32 %v560, %v621
        %623 = vmatmul.f32.gmra.mxu0 %v440
        %v624 = vpop.f32.mrf.mxu0
        %v625 = vadd.f32 %v560, %v624
        %626 = vdwg.mxu0
        %v627 = vld [vmem:[%s4] sm:$0x1]
        %v629 = vperm.slane %v627, 0
        %631 = vmatpush.msra.mxu0 %v625
        %632 = vmatpush.msra.mxu0 %v622
        %633 = vmatpush.msra.mxu0 %v619
        %634 = vmatpush.msra.mxu0 %v616
        %635 = vmatpush.msra.mxu0 %v613
        %636 = vmatpush.msra.mxu0 %v610
        %637 = vmatpush.msra.mxu0 %v607
        %638 = vmatpush.msra.mxu0 %v604
        %639 = vmatpush.msra.mxu0 %v601
        %640 = vmatpush.msra.mxu0 %v598
        %641 = vmatpush.msra.mxu0 %v595
        %642 = vmatpush.msra.mxu0 %v592
        %643 = vmatpush.msra.mxu0 %v589
        %644 = vmatpush.msra.mxu0 %v586
        %645 = vmatpush.msra.mxu0 %v583
        %646 = vmatpush.msra.mxu0 %v580
        %647 = vmatmul.f32.gmra.mxu0 %v441
        %v648 = vpop.f32.mrf.mxu0
        %v649 = vadd.f32 %v629, %v648
        %650 = vmatmul.f32.gmra.mxu0 %v442
        %v651 = vpop.f32.mrf.mxu0
        %v652 = vadd.f32 %v629, %v651
        %653 = vmatmul.f32.gmra.mxu0 %v443
        %v654 = vpop.f32.mrf.mxu0
        %v655 = vadd.f32 %v629, %v654
        %656 = vmatmul.f32.gmra.mxu0 %v444
        %v657 = vpop.f32.mrf.mxu0
        %v658 = vadd.f32 %v629, %v657
        %659 = vmatmul.f32.gmra.mxu0 %v445
        %v660 = vpop.f32.mrf.mxu0
        %v661 = vadd.f32 %v629, %v660
        %662 = vmatmul.f32.gmra.mxu0 %v446
        %v663 = vpop.f32.mrf.mxu0
        %v664 = vadd.f32 %v629, %v663
        %665 = vmatmul.f32.gmra.mxu0 %v447
        %v666 = vpop.f32.mrf.mxu0
        %v667 = vadd.f32 %v629, %v666
        %668 = vmatmul.f32.gmra.mxu0 %v448
        %v669 = vpop.f32.mrf.mxu0
        %v670 = vadd.f32 %v629, %v669
        %671 = vmatmul.f32.gmra.mxu0 %v449
        %v672 = vpop.f32.mrf.mxu0
        %v673 = vadd.f32 %v629, %v672
        %674 = vmatmul.f32.gmra.mxu0 %v450
        %v675 = vpop.f32.mrf.mxu0
        %v676 = vadd.f32 %v629, %v675
        %677 = vmatmul.f32.gmra.mxu0 %v451
        %v678 = vpop.f32.mrf.mxu0
        %v679 = vadd.f32 %v629, %v678
        %680 = vmatmul.f32.gmra.mxu0 %v452
        %v681 = vpop.f32.mrf.mxu0
        %v682 = vadd.f32 %v629, %v681
        %683 = vmatmul.f32.gmra.mxu0 %v453
        %v684 = vpop.f32.mrf.mxu0
        %v685 = vadd.f32 %v629, %v684
        %686 = vmatmul.f32.gmra.mxu0 %v454
        %v687 = vpop.f32.mrf.mxu0
        %v688 = vadd.f32 %v629, %v687
        %689 = vmatmul.f32.gmra.mxu0 %v455
        %v690 = vpop.f32.mrf.mxu0
        %v691 = vadd.f32 %v629, %v690
        %692 = vmatmul.f32.gmra.mxu0 %v456
        %v693 = vpop.f32.mrf.mxu0
        %v694 = vadd.f32 %v629, %v693
        %695 = vdwg.mxu0
        %v696 = vld [vmem:[%s5] sm:$0x1]
        %vm697 = vcmp.ge.f32.partialorder %v649, 0.0
        %vm698 = vcmp.ge.f32.partialorder %v652, 0.0
        %vm699 = vcmp.ge.f32.partialorder %v655, 0.0
        %vm700 = vcmp.ge.f32.partialorder %v658, 0.0
        %vm701 = vcmp.ge.f32.partialorder %v661, 0.0
        %vm702 = vcmp.ge.f32.partialorder %v664, 0.0
        %vm703 = vcmp.ge.f32.partialorder %v667, 0.0
        %vm704 = vcmp.ge.f32.partialorder %v670, 0.0
        %vm705 = vcmp.ge.f32.partialorder %v673, 0.0
        %vm706 = vcmp.ge.f32.partialorder %v676, 0.0
        %vm707 = vcmp.ge.f32.partialorder %v679, 0.0
        %vm708 = vcmp.ge.f32.partialorder %v682, 0.0
        %vm709 = vcmp.ge.f32.partialorder %v685, 0.0
        %vm710 = vcmp.ge.f32.partialorder %v688, 0.0
        %vm711 = vcmp.ge.f32.partialorder %v691, 0.0
        %vm712 = vcmp.ge.f32.partialorder %v694, 0.0
        %v714 = vperm.slane %v696, 0
        %v716 = vmul.f32 %v714, %v649
        %v717 = vmul.f32 %v714, %v652
        %v718 = vmul.f32 %v714, %v655
        %v719 = vmul.f32 %v714, %v658
        %v720 = vmul.f32 %v714, %v661
        %v721 = vmul.f32 %v714, %v664
        %v722 = vmul.f32 %v714, %v667
        %v723 = vmul.f32 %v714, %v670
        %v724 = vmul.f32 %v714, %v673
        %v725 = vmul.f32 %v714, %v676
        %v726 = vmul.f32 %v714, %v679
        %v727 = vmul.f32 %v714, %v682
        %v728 = vmul.f32 %v714, %v685
        %v729 = vmul.f32 %v714, %v688
        %v730 = vmul.f32 %v714, %v691
        %v731 = vmul.f32 %v714, %v694
        %v732 = vsel %vm697, %v649, %v716
        %v733 = vsel %vm698, %v652, %v717
        %v734 = vsel %vm699, %v655, %v718
        %v735 = vsel %vm700, %v658, %v719
        %v736 = vsel %vm701, %v661, %v720
        %v737 = vsel %vm702, %v664, %v721
        %v738 = vsel %vm703, %v667, %v722
        %v739 = vsel %vm704, %v670, %v723
        %v740 = vsel %vm705, %v673, %v724
        %v741 = vsel %vm706, %v676, %v725
        %v742 = vsel %vm707, %v679, %v726
        %v743 = vsel %vm708, %v682, %v727
        %v744 = vsel %vm709, %v685, %v728
        %v745 = vsel %vm710, %v688, %v729
        %v746 = vsel %vm711, %v691, %v730
        %v747 = vsel %vm712, %v694, %v731
        %v748 = vld [vmem:[%s6] sm:$0xff]
        %v749 = vld [vmem:[%s6 + $0x8] sm:$0xff]
        %v750 = vld [vmem:[%s6 + $0x10] sm:$0xff]
        %v751 = vld [vmem:[%s6 + $0x18] sm:$0xff]
        %v752 = vld [vmem:[%s6 + $0x20] sm:$0xff]
        %v753 = vld [vmem:[%s6 + $0x28] sm:$0xff]
        %v754 = vld [vmem:[%s6 + $0x30] sm:$0xff]
        %v755 = vld [vmem:[%s6 + $0x38] sm:$0xff]
        %v756 = vld [vmem:[%s6 + $0x40] sm:$0xff]
        %v757 = vld [vmem:[%s6 + $0x48] sm:$0xff]
        %v758 = vld [vmem:[%s6 + $0x50] sm:$0xff]
        %v759 = vld [vmem:[%s6 + $0x58] sm:$0xff]
        %v760 = vld [vmem:[%s6 + $0x60] sm:$0xff]
        %v761 = vld [vmem:[%s6 + $0x68] sm:$0xff]
        %v762 = vld [vmem:[%s6 + $0x70] sm:$0xff]
        %v763 = vld [vmem:[%s6 + $0x78] sm:$0xff]
        %v764 = vld [vmem:[%s6 + $0x80] sm:$0xff]
        %v765 = vld [vmem:[%s6 + $0x88] sm:$0xff]
        %v766 = vld [vmem:[%s6 + $0x90] sm:$0xff]
        %v767 = vld [vmem:[%s6 + $0x98] sm:$0xff]
        %v768 = vld [vmem:[%s6 + $0xa0] sm:$0xff]
        %v769 = vld [vmem:[%s6 + $0xa8] sm:$0xff]
        %v770 = vld [vmem:[%s6 + $0xb0] sm:$0xff]
        %v771 = vld [vmem:[%s6 + $0xb8] sm:$0xff]
        %v772 = vld [vmem:[%s6 + $0xc0] sm:$0xff]
        %v773 = vld [vmem:[%s6 + $0xc8] sm:$0xff]
        %v774 = vld [vmem:[%s6 + $0xd0] sm:$0xff]
        %v775 = vld [vmem:[%s6 + $0xd8] sm:$0xff]
        %v776 = vld [vmem:[%s6 + $0xe0] sm:$0xff]
        %v777 = vld [vmem:[%s6 + $0xe8] sm:$0xff]
        %v778 = vld [vmem:[%s6 + $0xf0] sm:$0xff]
        %v779 = vld [vmem:[%s6 + $0xf8] sm:$0xff]
        %v780 = vld [vmem:[%s6 + $0x100] sm:$0xff]
        %v781 = vld [vmem:[%s6 + $0x108] sm:$0xff]
        %v782 = vld [vmem:[%s6 + $0x110] sm:$0xff]
        %v783 = vld [vmem:[%s6 + $0x118] sm:$0xff]
        %v784 = vld [vmem:[%s6 + $0x120] sm:$0xff]
        %v785 = vld [vmem:[%s6 + $0x128] sm:$0xff]
        %v786 = vld [vmem:[%s6 + $0x130] sm:$0xff]
        %v787 = vld [vmem:[%s6 + $0x138] sm:$0xff]
        %v788 = vld [vmem:[%s6 + $0x140] sm:$0xff]
        %v789 = vld [vmem:[%s6 + $0x148] sm:$0xff]
        %v790 = vld [vmem:[%s6 + $0x150] sm:$0xff]
        %v791 = vld [vmem:[%s6 + $0x158] sm:$0xff]
        %v792 = vld [vmem:[%s6 + $0x160] sm:$0xff]
        %v793 = vld [vmem:[%s6 + $0x168] sm:$0xff]
        %v794 = vld [vmem:[%s6 + $0x170] sm:$0xff]
        %v795 = vld [vmem:[%s6 + $0x178] sm:$0xff]
        %v796 = vld [vmem:[%s7] sm:$0x1]
        %v798 = vperm.slane %v796, 0
        %800 = vmatpush.msra.mxu0 %v763
        %801 = vmatpush.msra.mxu0 %v762
        %802 = vmatpush.msra.mxu0 %v761
        %803 = vmatpush.msra.mxu0 %v760
        %804 = vmatpush.msra.mxu0 %v759
        %805 = vmatpush.msra.mxu0 %v758
        %806 = vmatpush.msra.mxu0 %v757
        %807 = vmatpush.msra.mxu0 %v756
        %808 = vmatpush.msra.mxu0 %v755
        %809 = vmatpush.msra.mxu0 %v754
        %810 = vmatpush.msra.mxu0 %v753
        %811 = vmatpush.msra.mxu0 %v752
        %812 = vmatpush.msra.mxu0 %v751
        %813 = vmatpush.msra.mxu0 %v750
        %814 = vmatpush.msra.mxu0 %v749
        %815 = vmatpush.msra.mxu0 %v748
        %816 = vmatmul.f32.gmra.mxu0 0.0
        %v817 = vpop.f32.mrf.mxu0
        %v818 = vadd.f32 %v798, %v817
        %819 = vmatmul.f32.gmra.mxu0 0.0
        %v820 = vpop.f32.mrf.mxu0
        %v821 = vadd.f32 %v798, %v820
        %822 = vmatmul.f32.gmra.mxu0 %v732
        %v823 = vpop.f32.mrf.mxu0
        %v824 = vadd.f32 %v798, %v823
        %825 = vmatmul.f32.gmra.mxu0 %v733
        %v826 = vpop.f32.mrf.mxu0
        %v827 = vadd.f32 %v798, %v826
        %828 = vmatmul.f32.gmra.mxu0 %v734
        %v829 = vpop.f32.mrf.mxu0
        %v830 = vadd.f32 %v798, %v829
        %831 = vmatmul.f32.gmra.mxu0 %v735
        %v832 = vpop.f32.mrf.mxu0
        %v833 = vadd.f32 %v798, %v832
        %834 = vmatmul.f32.gmra.mxu0 %v736
        %v835 = vpop.f32.mrf.mxu0
        %v836 = vadd.f32 %v798, %v835
        %837 = vmatmul.f32.gmra.mxu0 %v737
        %v838 = vpop.f32.mrf.mxu0
        %v839 = vadd.f32 %v798, %v838
        %840 = vmatmul.f32.gmra.mxu0 %v738
        %v841 = vpop.f32.mrf.mxu0
        %v842 = vadd.f32 %v798, %v841
        %843 = vmatmul.f32.gmra.mxu0 %v739
        %v844 = vpop.f32.mrf.mxu0
        %v845 = vadd.f32 %v798, %v844
        %846 = vmatmul.f32.gmra.mxu0 %v740
        %v847 = vpop.f32.mrf.mxu0
        %v848 = vadd.f32 %v798, %v847
        %849 = vmatmul.f32.gmra.mxu0 %v741
        %v850 = vpop.f32.mrf.mxu0
        %v851 = vadd.f32 %v798, %v850
        %852 = vmatmul.f32.gmra.mxu0 %v742
        %v853 = vpop.f32.mrf.mxu0
        %v854 = vadd.f32 %v798, %v853
        %855 = vmatmul.f32.gmra.mxu0 %v743
        %v856 = vpop.f32.mrf.mxu0
        %v857 = vadd.f32 %v798, %v856
        %858 = vmatmul.f32.gmra.mxu0 %v744
        %v859 = vpop.f32.mrf.mxu0
        %v860 = vadd.f32 %v798, %v859
        %861 = vmatmul.f32.gmra.mxu0 %v745
        %v862 = vpop.f32.mrf.mxu0
        %v863 = vadd.f32 %v798, %v862
        %864 = vdwg.mxu0
        %865 = vmatpush.msra.mxu0 %v779
        %866 = vmatpush.msra.mxu0 %v778
        %867 = vmatpush.msra.mxu0 %v777
        %868 = vmatpush.msra.mxu0 %v776
        %869 = vmatpush.msra.mxu0 %v775
        %870 = vmatpush.msra.mxu0 %v774
        %871 = vmatpush.msra.mxu0 %v773
        %872 = vmatpush.msra.mxu0 %v772
        %873 = vmatpush.msra.mxu0 %v771
        %874 = vmatpush.msra.mxu0 %v770
        %875 = vmatpush.msra.mxu0 %v769
        %876 = vmatpush.msra.mxu0 %v768
        %877 = vmatpush.msra.mxu0 %v767
        %878 = vmatpush.msra.mxu0 %v766
        %879 = vmatpush.msra.mxu0 %v765
        %880 = vmatpush.msra.mxu0 %v764
        %881 = vmatmul.f32.gmra.mxu0 %v732
        %v882 = vpop.f32.mrf.mxu0
        %v883 = vadd.f32 %v818, %v882
        %884 = vmatmul.f32.gmra.mxu0 %v733
        %v885 = vpop.f32.mrf.mxu0
        %v886 = vadd.f32 %v821, %v885
        %887 = vmatmul.f32.gmra.mxu0 %v734
        %v888 = vpop.f32.mrf.mxu0
        %v889 = vadd.f32 %v824, %v888
        %890 = vmatmul.f32.gmra.mxu0 %v735
        %v891 = vpop.f32.mrf.mxu0
        %v892 = vadd.f32 %v827, %v891
        %893 = vmatmul.f32.gmra.mxu0 %v736
        %v894 = vpop.f32.mrf.mxu0
        %v895 = vadd.f32 %v830, %v894
        %896 = vmatmul.f32.gmra.mxu0 %v737
        %v897 = vpop.f32.mrf.mxu0
        %v898 = vadd.f32 %v833, %v897
        %899 = vmatmul.f32.gmra.mxu0 %v738
        %v900 = vpop.f32.mrf.mxu0
        %v901 = vadd.f32 %v836, %v900
        %902 = vmatmul.f32.gmra.mxu0 %v739
        %v903 = vpop.f32.mrf.mxu0
        %v904 = vadd.f32 %v839, %v903
        %905 = vmatmul.f32.gmra.mxu0 %v740
        %v906 = vpop.f32.mrf.mxu0
        %v907 = vadd.f32 %v842, %v906
        %908 = vmatmul.f32.gmra.mxu0 %v741
        %v909 = vpop.f32.mrf.mxu0
        %v910 = vadd.f32 %v845, %v909
        %911 = vmatmul.f32.gmra.mxu0 %v742
        %v912 = vpop.f32.mrf.mxu0
        %v913 = vadd.f32 %v848, %v912
        %914 = vmatmul.f32.gmra.mxu0 %v743
        %v915 = vpop.f32.mrf.mxu0
        %v916 = vadd.f32 %v851, %v915
        %917 = vmatmul.f32.gmra.mxu0 %v744
        %v918 = vpop.f32.mrf.mxu0
        %v919 = vadd.f32 %v854, %v918
        %920 = vmatmul.f32.gmra.mxu0 %v745
        %v921 = vpop.f32.mrf.mxu0
        %v922 = vadd.f32 %v857, %v921
        %923 = vmatmul.f32.gmra.mxu0 %v746
        %v924 = vpop.f32.mrf.mxu0
        %v925 = vadd.f32 %v860, %v924
        %926 = vmatmul.f32.gmra.mxu0 %v747
        %v927 = vpop.f32.mrf.mxu0
        %v928 = vadd.f32 %v863, %v927
        %929 = vdwg.mxu0
        %930 = vmatpush.msra.mxu0 %v795
        %931 = vmatpush.msra.mxu0 %v794
        %932 = vmatpush.msra.mxu0 %v793
        %933 = vmatpush.msra.mxu0 %v792
        %934 = vmatpush.msra.mxu0 %v791
        %935 = vmatpush.msra.mxu0 %v790
        %936 = vmatpush.msra.mxu0 %v789
        %937 = vmatpush.msra.mxu0 %v788
        %938 = vmatpush.msra.mxu0 %v787
        %939 = vmatpush.msra.mxu0 %v786
        %940 = vmatpush.msra.mxu0 %v785
        %941 = vmatpush.msra.mxu0 %v784
        %942 = vmatpush.msra.mxu0 %v783
        %943 = vmatpush.msra.mxu0 %v782
        %944 = vmatpush.msra.mxu0 %v781
        %945 = vmatpush.msra.mxu0 %v780
        %946 = vmatmul.f32.gmra.mxu0 %v734
        %v947 = vpop.f32.mrf.mxu0
        %v948 = vadd.f32 %v883, %v947
        %949 = vmatmul.f32.gmra.mxu0 %v735
        %v950 = vpop.f32.mrf.mxu0
        %v951 = vadd.f32 %v886, %v950
        %952 = vmatmul.f32.gmra.mxu0 %v736
        %v953 = vpop.f32.mrf.mxu0
        %v954 = vadd.f32 %v889, %v953
        %955 = vmatmul.f32.gmra.mxu0 %v737
        %v956 = vpop.f32.mrf.mxu0
        %v957 = vadd.f32 %v892, %v956
        %958 = vmatmul.f32.gmra.mxu0 %v738
        %v959 = vpop.f32.mrf.mxu0
        %v960 = vadd.f32 %v895, %v959
        %961 = vmatmul.f32.gmra.mxu0 %v739
        %v962 = vpop.f32.mrf.mxu0
        %v963 = vadd.f32 %v898, %v962
        %964 = vmatmul.f32.gmra.mxu0 %v740
        %v965 = vpop.f32.mrf.mxu0
        %v966 = vadd.f32 %v901, %v965
        %967 = vmatmul.f32.gmra.mxu0 %v741
        %v968 = vpop.f32.mrf.mxu0
        %v969 = vadd.f32 %v904, %v968
        %970 = vmatmul.f32.gmra.mxu0 %v742
        %v971 = vpop.f32.mrf.mxu0
        %v972 = vadd.f32 %v907, %v971
        %973 = vmatmul.f32.gmra.mxu0 %v743
        %v974 = vpop.f32.mrf.mxu0
        %v975 = vadd.f32 %v910, %v974
        %976 = vmatmul.f32.gmra.mxu0 %v744
        %v977 = vpop.f32.mrf.mxu0
        %v978 = vadd.f32 %v913, %v977
        %979 = vmatmul.f32.gmra.mxu0 %v745
        %v980 = vpop.f32.mrf.mxu0
        %v981 = vadd.f32 %v916, %v980
        %982 = vmatmul.f32.gmra.mxu0 %v746
        %v983 = vpop.f32.mrf.mxu0
        %v984 = vadd.f32 %v919, %v983
        %985 = vmatmul.f32.gmra.mxu0 %v747
        %v986 = vpop.f32.mrf.mxu0
        %v987 = vadd.f32 %v922, %v986
        %988 = vmatmul.f32.gmra.mxu0 0.0
        %v989 = vpop.f32.mrf.mxu0
        %v990 = vadd.f32 %v925, %v989
        %991 = vmatmul.f32.gmra.mxu0 0.0
        %v992 = vpop.f32.mrf.mxu0
        %v993 = vadd.f32 %v928, %v992
        %994 = vdwg.mxu0
        %v995 = vadd.f32 %v948, %v495
        %v996 = vadd.f32 %v951, %v498
        %v997 = vadd.f32 %v954, %v501
        %v998 = vadd.f32 %v957, %v504
        %v999 = vadd.f32 %v960, %v507
        %v1000 = vadd.f32 %v963, %v510
        %v1001 = vadd.f32 %v966, %v513
        %v1002 = vadd.f32 %v969, %v516
        %v1003 = vadd.f32 %v972, %v519
        %v1004 = vadd.f32 %v975, %v522
        %v1005 = vadd.f32 %v978, %v525
        %v1006 = vadd.f32 %v981, %v528
        %v1007 = vadd.f32 %v984, %v531
        %v1008 = vadd.f32 %v987, %v534
        %v1009 = vadd.f32 %v990, %v537
        %v1010 = vadd.f32 %v993, %v540
        %v1011 = vld [vmem:[%s10] sm:$0x1]
        %vm1012 = vcmp.ge.f32.partialorder %v995, 0.0
        %vm1013 = vcmp.ge.f32.partialorder %v996, 0.0
        %vm1014 = vcmp.ge.f32.partialorder %v997, 0.0
        %vm1015 = vcmp.ge.f32.partialorder %v998, 0.0
        %vm1016 = vcmp.ge.f32.partialorder %v999, 0.0
        %vm1017 = vcmp.ge.f32.partialorder %v1000, 0.0
        %vm1018 = vcmp.ge.f32.partialorder %v1001, 0.0
        %vm1019 = vcmp.ge.f32.partialorder %v1002, 0.0
        %vm1020 = vcmp.ge.f32.partialorder %v1003, 0.0
        %vm1021 = vcmp.ge.f32.partialorder %v1004, 0.0
        %vm1022 = vcmp.ge.f32.partialorder %v1005, 0.0
        %vm1023 = vcmp.ge.f32.partialorder %v1006, 0.0
        %vm1024 = vcmp.ge.f32.partialorder %v1007, 0.0
        %vm1025 = vcmp.ge.f32.partialorder %v1008, 0.0
        %vm1026 = vcmp.ge.f32.partialorder %v1009, 0.0
        %vm1027 = vcmp.ge.f32.partialorder %v1010, 0.0
        %v1029 = vperm.slane %v1011, 0
        %v1031 = vmul.f32 %v1029, %v995
        %v1032 = vmul.f32 %v1029, %v996
        %v1033 = vmul.f32 %v1029, %v997
        %v1034 = vmul.f32 %v1029, %v998
        %v1035 = vmul.f32 %v1029, %v999
        %v1036 = vmul.f32 %v1029, %v1000
        %v1037 = vmul.f32 %v1029, %v1001
        %v1038 = vmul.f32 %v1029, %v1002
        %v1039 = vmul.f32 %v1029, %v1003
        %v1040 = vmul.f32 %v1029, %v1004
        %v1041 = vmul.f32 %v1029, %v1005
        %v1042 = vmul.f32 %v1029, %v1006
        %v1043 = vmul.f32 %v1029, %v1007
        %v1044 = vmul.f32 %v1029, %v1008
        %v1045 = vmul.f32 %v1029, %v1009
        %v1046 = vmul.f32 %v1029, %v1010
        %v1047 = vsel %vm1012, %v995, %v1031
        %v1048 = vsel %vm1013, %v996, %v1032
        %v1049 = vsel %vm1014, %v997, %v1033
        %v1050 = vsel %vm1015, %v998, %v1034
        %v1051 = vsel %vm1016, %v999, %v1035
        %v1052 = vsel %vm1017, %v1000, %v1036
        %v1053 = vsel %vm1018, %v1001, %v1037
        %v1054 = vsel %vm1019, %v1002, %v1038
        %v1055 = vsel %vm1020, %v1003, %v1039
        %v1056 = vsel %vm1021, %v1004, %v1040
        %v1057 = vsel %vm1022, %v1005, %v1041
        %v1058 = vsel %vm1023, %v1006, %v1042
        %v1059 = vsel %vm1024, %v1007, %v1043
        %v1060 = vsel %vm1025, %v1008, %v1044
        %v1061 = vsel %vm1026, %v1009, %v1045
        %v1062 = vsel %vm1027, %v1010, %v1046
        %s1063 = scalar_lea.vmem %s8, 128
        %v1064 = vld [vmem:[%s1063] sm:$0xff]
        %v1065 = vld [vmem:[%s1063 + $0x8] sm:$0xff]
        %v1066 = vld [vmem:[%s1063 + $0x10] sm:$0xff]
        %v1067 = vld [vmem:[%s1063 + $0x18] sm:$0xff]
        %v1068 = vld [vmem:[%s1063 + $0x20] sm:$0xff]
        %v1069 = vld [vmem:[%s1063 + $0x28] sm:$0xff]
        %v1070 = vld [vmem:[%s1063 + $0x30] sm:$0xff]
        %v1071 = vld [vmem:[%s1063 + $0x38] sm:$0xff]
        %v1072 = vld [vmem:[%s1063 + $0x40] sm:$0xff]
        %v1073 = vld [vmem:[%s1063 + $0x48] sm:$0xff]
        %v1074 = vld [vmem:[%s1063 + $0x50] sm:$0xff]
        %v1075 = vld [vmem:[%s1063 + $0x58] sm:$0xff]
        %v1076 = vld [vmem:[%s1063 + $0x60] sm:$0xff]
        %v1077 = vld [vmem:[%s1063 + $0x68] sm:$0xff]
        %v1078 = vld [vmem:[%s1063 + $0x70] sm:$0xff]
        %v1079 = vld [vmem:[%s1063 + $0x78] sm:$0xff]
        %s1080 = scalar_lea.vmem %s9, 1
        %v1081 = vld [vmem:[%s1080] sm:$0x1]
        %v1083 = vperm.slane %v1081, 0
        %1085 = vmatpush.msra.mxu0 %v1079
        %1086 = vmatpush.msra.mxu0 %v1078
        %1087 = vmatpush.msra.mxu0 %v1077
        %1088 = vmatpush.msra.mxu0 %v1076
        %1089 = vmatpush.msra.mxu0 %v1075
        %1090 = vmatpush.msra.mxu0 %v1074
        %1091 = vmatpush.msra.mxu0 %v1073
        %1092 = vmatpush.msra.mxu0 %v1072
        %1093 = vmatpush.msra.mxu0 %v1071
        %1094 = vmatpush.msra.mxu0 %v1070
        %1095 = vmatpush.msra.mxu0 %v1069
        %1096 = vmatpush.msra.mxu0 %v1068
        %1097 = vmatpush.msra.mxu0 %v1067
        %1098 = vmatpush.msra.mxu0 %v1066
        %1099 = vmatpush.msra.mxu0 %v1065
        %1100 = vmatpush.msra.mxu0 %v1064
        %1101 = vmatmul.f32.gmra.mxu0 %v1047
        %v1102 = vpop.f32.mrf.mxu0
        %v1103 = vadd.f32 %v1083, %v1102
        %1104 = vmatmul.f32.gmra.mxu0 %v1048
        %v1105 = vpop.f32.mrf.mxu0
        %v1106 = vadd.f32 %v1083, %v1105
        %1107 = vmatmul.f32.gmra.mxu0 %v1049
        %v1108 = vpop.f32.mrf.mxu0
        %v1109 = vadd.f32 %v1083, %v1108
        %1110 = vmatmul.f32.gmra.mxu0 %v1050
        %v1111 = vpop.f32.mrf.mxu0
        %v1112 = vadd.f32 %v1083, %v1111
        %1113 = vmatmul.f32.gmra.mxu0 %v1051
        %v1114 = vpop.f32.mrf.mxu0
        %v1115 = vadd.f32 %v1083, %v1114
        %1116 = vmatmul.f32.gmra.mxu0 %v1052
        %v1117 = vpop.f32.mrf.mxu0
        %v1118 = vadd.f32 %v1083, %v1117
        %1119 = vmatmul.f32.gmra.mxu0 %v1053
        %v1120 = vpop.f32.mrf.mxu0
        %v1121 = vadd.f32 %v1083, %v1120
        %1122 = vmatmul.f32.gmra.mxu0 %v1054
        %v1123 = vpop.f32.mrf.mxu0
        %v1124 = vadd.f32 %v1083, %v1123
        %1125 = vmatmul.f32.gmra.mxu0 %v1055
        %v1126 = vpop.f32.mrf.mxu0
        %v1127 = vadd.f32 %v1083, %v1126
        %1128 = vmatmul.f32.gmra.mxu0 %v1056
        %v1129 = vpop.f32.mrf.mxu0
        %v1130 = vadd.f32 %v1083, %v1129
        %1131 = vmatmul.f32.gmra.mxu0 %v1057
        %v1132 = vpop.f32.mrf.mxu0
        %v1133 = vadd.f32 %v1083, %v1132
        %1134 = vmatmul.f32.gmra.mxu0 %v1058
        %v1135 = vpop.f32.mrf.mxu0
        %v1136 = vadd.f32 %v1083, %v1135
        %1137 = vmatmul.f32.gmra.mxu0 %v1059
        %v1138 = vpop.f32.mrf.mxu0
        %v1139 = vadd.f32 %v1083, %v1138
        %1140 = vmatmul.f32.gmra.mxu0 %v1060
        %v1141 = vpop.f32.mrf.mxu0
        %v1142 = vadd.f32 %v1083, %v1141
        %1143 = vmatmul.f32.gmra.mxu0 %v1061
        %v1144 = vpop.f32.mrf.mxu0
        %v1145 = vadd.f32 %v1083, %v1144
        %1146 = vmatmul.f32.gmra.mxu0 %v1062
        %v1147 = vpop.f32.mrf.mxu0
        %v1148 = vadd.f32 %v1083, %v1147
        %1149 = vdwg.mxu0
        %s1150 = scalar_lea.vmem %s2, 128
        %v1151 = vld [vmem:[%s1150] sm:$0xff]
        %v1152 = vld [vmem:[%s1150 + $0x8] sm:$0xff]
        %v1153 = vld [vmem:[%s1150 + $0x10] sm:$0xff]
        %v1154 = vld [vmem:[%s1150 + $0x18] sm:$0xff]
        %v1155 = vld [vmem:[%s1150 + $0x20] sm:$0xff]
        %v1156 = vld [vmem:[%s1150 + $0x28] sm:$0xff]
        %v1157 = vld [vmem:[%s1150 + $0x30] sm:$0xff]
        %v1158 = vld [vmem:[%s1150 + $0x38] sm:$0xff]
        %v1159 = vld [vmem:[%s1150 + $0x40] sm:$0xff]
        %v1160 = vld [vmem:[%s1150 + $0x48] sm:$0xff]
        %v1161 = vld [vmem:[%s1150 + $0x50] sm:$0xff]
        %v1162 = vld [vmem:[%s1150 + $0x58] sm:$0xff]
        %v1163 = vld [vmem:[%s1150 + $0x60] sm:$0xff]
        %v1164 = vld [vmem:[%s1150 + $0x68] sm:$0xff]
        %v1165 = vld [vmem:[%s1150 + $0x70] sm:$0xff]
        %v1166 = vld [vmem:[%s1150 + $0x78] sm:$0xff]
        %s1167 = scalar_lea.vmem %s3, 1
        %v1168 = vld [vmem:[%s1167] sm:$0x1]
        %v1170 = vperm.slane %v1168, 0
        %1172 = vmatpush.msra.mxu0 %v1166
        %1173 = vmatpush.msra.mxu0 %v1165
        %1174 = vmatpush.msra.mxu0 %v1164
        %1175 = vmatpush.msra.mxu0 %v1163
        %1176 = vmatpush.msra.mxu0 %v1162
        %1177 = vmatpush.msra.mxu0 %v1161
        %1178 = vmatpush.msra.mxu0 %v1160
        %1179 = vmatpush.msra.mxu0 %v1159
        %1180 = vmatpush.msra.mxu0 %v1158
        %1181 = vmatpush.msra.mxu0 %v1157
        %1182 = vmatpush.msra.mxu0 %v1156
        %1183 = vmatpush.msra.mxu0 %v1155
        %1184 = vmatpush.msra.mxu0 %v1154
        %1185 = vmatpush.msra.mxu0 %v1153
        %1186 = vmatpush.msra.mxu0 %v1152
        %1187 = vmatpush.msra.mxu0 %v1151
        %1188 = vmatmul.f32.gmra.mxu0 %v1047
        %v1189 = vpop.f32.mrf.mxu0
        %v1190 = vadd.f32 %v1170, %v1189
        %1191 = vmatmul.f32.gmra.mxu0 %v1048
        %v1192 = vpop.f32.mrf.mxu0
        %v1193 = vadd.f32 %v1170, %v1192
        %1194 = vmatmul.f32.gmra.mxu0 %v1049
        %v1195 = vpop.f32.mrf.mxu0
        %v1196 = vadd.f32 %v1170, %v1195
        %1197 = vmatmul.f32.gmra.mxu0 %v1050
        %v1198 = vpop.f32.mrf.mxu0
        %v1199 = vadd.f32 %v1170, %v1198
        %1200 = vmatmul.f32.gmra.mxu0 %v1051
        %v1201 = vpop.f32.mrf.mxu0
        %v1202 = vadd.f32 %v1170, %v1201
        %1203 = vmatmul.f32.gmra.mxu0 %v1052
        %v1204 = vpop.f32.mrf.mxu0
        %v1205 = vadd.f32 %v1170, %v1204
        %1206 = vmatmul.f32.gmra.mxu0 %v1053
        %v1207 = vpop.f32.mrf.mxu0
        %v1208 = vadd.f32 %v1170, %v1207
        %1209 = vmatmul.f32.gmra.mxu0 %v1054
        %v1210 = vpop.f32.mrf.mxu0
        %v1211 = vadd.f32 %v1170, %v1210
        %1212 = vmatmul.f32.gmra.mxu0 %v1055
        %v1213 = vpop.f32.mrf.mxu0
        %v1214 = vadd.f32 %v1170, %v1213
        %1215 = vmatmul.f32.gmra.mxu0 %v1056
        %v1216 = vpop.f32.mrf.mxu0
        %v1217 = vadd.f32 %v1170, %v1216
        %1218 = vmatmul.f32.gmra.mxu0 %v1057
        %v1219 = vpop.f32.mrf.mxu0
        %v1220 = vadd.f32 %v1170, %v1219
        %1221 = vmatmul.f32.gmra.mxu0 %v1058
        %v1222 = vpop.f32.mrf.mxu0
        %v1223 = vadd.f32 %v1170, %v1222
        %1224 = vmatmul.f32.gmra.mxu0 %v1059
        %v1225 = vpop.f32.mrf.mxu0
        %v1226 = vadd.f32 %v1170, %v1225
        %1227 = vmatmul.f32.gmra.mxu0 %v1060
        %v1228 = vpop.f32.mrf.mxu0
        %v1229 = vadd.f32 %v1170, %v1228
        %1230 = vmatmul.f32.gmra.mxu0 %v1061
        %v1231 = vpop.f32.mrf.mxu0
        %v1232 = vadd.f32 %v1170, %v1231
        %1233 = vmatmul.f32.gmra.mxu0 %v1062
        %v1234 = vpop.f32.mrf.mxu0
        %v1235 = vadd.f32 %v1170, %v1234
        %1236 = vdwg.mxu0
        %s1237 = scalar_lea.vmem %s4, 1
        %v1238 = vld [vmem:[%s1237] sm:$0x1]
        %v1240 = vperm.slane %v1238, 0
        %1242 = vmatpush.msra.mxu0 %v1235
        %1243 = vmatpush.msra.mxu0 %v1232
        %1244 = vmatpush.msra.mxu0 %v1229
        %1245 = vmatpush.msra.mxu0 %v1226
        %1246 = vmatpush.msra.mxu0 %v1223
        %1247 = vmatpush.msra.mxu0 %v1220
        %1248 = vmatpush.msra.mxu0 %v1217
        %1249 = vmatpush.msra.mxu0 %v1214
        %1250 = vmatpush.msra.mxu0 %v1211
        %1251 = vmatpush.msra.mxu0 %v1208
        %1252 = vmatpush.msra.mxu0 %v1205
        %1253 = vmatpush.msra.mxu0 %v1202
        %1254 = vmatpush.msra.mxu0 %v1199
        %1255 = vmatpush.msra.mxu0 %v1196
        %1256 = vmatpush.msra.mxu0 %v1193
        %1257 = vmatpush.msra.mxu0 %v1190
        %1258 = vmatmul.f32.gmra.mxu0 %v441
        %v1259 = vpop.f32.mrf.mxu0
        %v1260 = vadd.f32 %v1240, %v1259
        %1261 = vmatmul.f32.gmra.mxu0 %v442
        %v1262 = vpop.f32.mrf.mxu0
        %v1263 = vadd.f32 %v1240, %v1262
        %1264 = vmatmul.f32.gmra.mxu0 %v443
        %v1265 = vpop.f32.mrf.mxu0
        %v1266 = vadd.f32 %v1240, %v1265
        %1267 = vmatmul.f32.gmra.mxu0 %v444
        %v1268 = vpop.f32.mrf.mxu0
        %v1269 = vadd.f32 %v1240, %v1268
        %1270 = vmatmul.f32.gmra.mxu0 %v445
        %v1271 = vpop.f32.mrf.mxu0
        %v1272 = vadd.f32 %v1240, %v1271
        %1273 = vmatmul.f32.gmra.mxu0 %v446
        %v1274 = vpop.f32.mrf.mxu0
        %v1275 = vadd.f32 %v1240, %v1274
        %1276 = vmatmul.f32.gmra.mxu0 %v447
        %v1277 = vpop.f32.mrf.mxu0
        %v1278 = vadd.f32 %v1240, %v1277
        %1279 = vmatmul.f32.gmra.mxu0 %v448
        %v1280 = vpop.f32.mrf.mxu0
        %v1281 = vadd.f32 %v1240, %v1280
        %1282 = vmatmul.f32.gmra.mxu0 %v449
        %v1283 = vpop.f32.mrf.mxu0
        %v1284 = vadd.f32 %v1240, %v1283
        %1285 = vmatmul.f32.gmra.mxu0 %v450
        %v1286 = vpop.f32.mrf.mxu0
        %v1287 = vadd.f32 %v1240, %v1286
        %1288 = vmatmul.f32.gmra.mxu0 %v451
        %v1289 = vpop.f32.mrf.mxu0
        %v1290 = vadd.f32 %v1240, %v1289
        %1291 = vmatmul.f32.gmra.mxu0 %v452
        %v1292 = vpop.f32.mrf.mxu0
        %v1293 = vadd.f32 %v1240, %v1292
        %1294 = vmatmul.f32.gmra.mxu0 %v453
        %v1295 = vpop.f32.mrf.mxu0
        %v1296 = vadd.f32 %v1240, %v1295
        %1297 = vmatmul.f32.gmra.mxu0 %v454
        %v1298 = vpop.f32.mrf.mxu0
        %v1299 = vadd.f32 %v1240, %v1298
        %1300 = vmatmul.f32.gmra.mxu0 %v455
        %v1301 = vpop.f32.mrf.mxu0
        %v1302 = vadd.f32 %v1240, %v1301
        %1303 = vmatmul.f32.gmra.mxu0 %v456
        %v1304 = vpop.f32.mrf.mxu0
        %v1305 = vadd.f32 %v1240, %v1304
        %1306 = vdwg.mxu0
        %s1307 = scalar_lea.vmem %s5, 1
        %v1308 = vld [vmem:[%s1307] sm:$0x1]
        %vm1309 = vcmp.ge.f32.partialorder %v1260, 0.0
        %vm1310 = vcmp.ge.f32.partialorder %v1263, 0.0
        %vm1311 = vcmp.ge.f32.partialorder %v1266, 0.0
        %vm1312 = vcmp.ge.f32.partialorder %v1269, 0.0
        %vm1313 = vcmp.ge.f32.partialorder %v1272, 0.0
        %vm1314 = vcmp.ge.f32.partialorder %v1275, 0.0
        %vm1315 = vcmp.ge.f32.partialorder %v1278, 0.0
        %vm1316 = vcmp.ge.f32.partialorder %v1281, 0.0
        %vm1317 = vcmp.ge.f32.partialorder %v1284, 0.0
        %vm1318 = vcmp.ge.f32.partialorder %v1287, 0.0
        %vm1319 = vcmp.ge.f32.partialorder %v1290, 0.0
        %vm1320 = vcmp.ge.f32.partialorder %v1293, 0.0
        %vm1321 = vcmp.ge.f32.partialorder %v1296, 0.0
        %vm1322 = vcmp.ge.f32.partialorder %v1299, 0.0
        %vm1323 = vcmp.ge.f32.partialorder %v1302, 0.0
        %vm1324 = vcmp.ge.f32.partialorder %v1305, 0.0
        %v1326 = vperm.slane %v1308, 0
        %v1328 = vmul.f32 %v1326, %v1260
        %v1329 = vmul.f32 %v1326, %v1263
        %v1330 = vmul.f32 %v1326, %v1266
        %v1331 = vmul.f32 %v1326, %v1269
        %v1332 = vmul.f32 %v1326, %v1272
        %v1333 = vmul.f32 %v1326, %v1275
        %v1334 = vmul.f32 %v1326, %v1278
        %v1335 = vmul.f32 %v1326, %v1281
        %v1336 = vmul.f32 %v1326, %v1284
        %v1337 = vmul.f32 %v1326, %v1287
        %v1338 = vmul.f32 %v1326, %v1290
        %v1339 = vmul.f32 %v1326, %v1293
        %v1340 = vmul.f32 %v1326, %v1296
        %v1341 = vmul.f32 %v1326, %v1299
        %v1342 = vmul.f32 %v1326, %v1302
        %v1343 = vmul.f32 %v1326, %v1305
        %v1344 = vsel %vm1309, %v1260, %v1328
        %v1345 = vsel %vm1310, %v1263, %v1329
        %v1346 = vsel %vm1311, %v1266, %v1330
        %v1347 = vsel %vm1312, %v1269, %v1331
        %v1348 = vsel %vm1313, %v1272, %v1332
        %v1349 = vsel %vm1314, %v1275, %v1333
        %v1350 = vsel %vm1315, %v1278, %v1334
        %v1351 = vsel %vm1316, %v1281, %v1335
        %v1352 = vsel %vm1317, %v1284, %v1336
        %v1353 = vsel %vm1318, %v1287, %v1337
        %v1354 = vsel %vm1319, %v1290, %v1338
        %v1355 = vsel %vm1320, %v1293, %v1339
        %v1356 = vsel %vm1321, %v1296, %v1340
        %v1357 = vsel %vm1322, %v1299, %v1341
        %v1358 = vsel %vm1323, %v1302, %v1342
        %v1359 = vsel %vm1324, %v1305, %v1343
        %s1360 = scalar_lea.vmem %s6, 384
        %v1361 = vld [vmem:[%s1360] sm:$0xff]
        %v1362 = vld [vmem:[%s1360 + $0x8] sm:$0xff]
        %v1363 = vld [vmem:[%s1360 + $0x10] sm:$0xff]
        %v1364 = vld [vmem:[%s1360 + $0x18] sm:$0xff]
        %v1365 = vld [vmem:[%s1360 + $0x20] sm:$0xff]
        %v1366 = vld [vmem:[%s1360 + $0x28] sm:$0xff]
        %v1367 = vld [vmem:[%s1360 + $0x30] sm:$0xff]
        %v1368 = vld [vmem:[%s1360 + $0x38] sm:$0xff]
        %v1369 = vld [vmem:[%s1360 + $0x40] sm:$0xff]
        %v1370 = vld [vmem:[%s1360 + $0x48] sm:$0xff]
        %v1371 = vld [vmem:[%s1360 + $0x50] sm:$0xff]
        %v1372 = vld [vmem:[%s1360 + $0x58] sm:$0xff]
        %v1373 = vld [vmem:[%s1360 + $0x60] sm:$0xff]
        %v1374 = vld [vmem:[%s1360 + $0x68] sm:$0xff]
        %v1375 = vld [vmem:[%s1360 + $0x70] sm:$0xff]
        %v1376 = vld [vmem:[%s1360 + $0x78] sm:$0xff]
        %v1377 = vld [vmem:[%s1360 + $0x80] sm:$0xff]
        %v1378 = vld [vmem:[%s1360 + $0x88] sm:$0xff]
        %v1379 = vld [vmem:[%s1360 + $0x90] sm:$0xff]
        %v1380 = vld [vmem:[%s1360 + $0x98] sm:$0xff]
        %v1381 = vld [vmem:[%s1360 + $0xa0] sm:$0xff]
        %v1382 = vld [vmem:[%s1360 + $0xa8] sm:$0xff]
        %v1383 = vld [vmem:[%s1360 + $0xb0] sm:$0xff]
        %v1384 = vld [vmem:[%s1360 + $0xb8] sm:$0xff]
        %v1385 = vld [vmem:[%s1360 + $0xc0] sm:$0xff]
        %v1386 = vld [vmem:[%s1360 + $0xc8] sm:$0xff]
        %v1387 = vld [vmem:[%s1360 + $0xd0] sm:$0xff]
        %v1388 = vld [vmem:[%s1360 + $0xd8] sm:$0xff]
        %v1389 = vld [vmem:[%s1360 + $0xe0] sm:$0xff]
        %v1390 = vld [vmem:[%s1360 + $0xe8] sm:$0xff]
        %v1391 = vld [vmem:[%s1360 + $0xf0] sm:$0xff]
        %v1392 = vld [vmem:[%s1360 + $0xf8] sm:$0xff]
        %v1393 = vld [vmem:[%s1360 + $0x100] sm:$0xff]
        %v1394 = vld [vmem:[%s1360 + $0x108] sm:$0xff]
        %v1395 = vld [vmem:[%s1360 + $0x110] sm:$0xff]
        %v1396 = vld [vmem:[%s1360 + $0x118] sm:$0xff]
        %v1397 = vld [vmem:[%s1360 + $0x120] sm:$0xff]
        %v1398 = vld [vmem:[%s1360 + $0x128] sm:$0xff]
        %v1399 = vld [vmem:[%s1360 + $0x130] sm:$0xff]
        %v1400 = vld [vmem:[%s1360 + $0x138] sm:$0xff]
        %v1401 = vld [vmem:[%s1360 + $0x140] sm:$0xff]
        %v1402 = vld [vmem:[%s1360 + $0x148] sm:$0xff]
        %v1403 = vld [vmem:[%s1360 + $0x150] sm:$0xff]
        %v1404 = vld [vmem:[%s1360 + $0x158] sm:$0xff]
        %v1405 = vld [vmem:[%s1360 + $0x160] sm:$0xff]
        %v1406 = vld [vmem:[%s1360 + $0x168] sm:$0xff]
        %v1407 = vld [vmem:[%s1360 + $0x170] sm:$0xff]
        %v1408 = vld [vmem:[%s1360 + $0x178] sm:$0xff]
        %s1409 = scalar_lea.vmem %s7, 1
        %v1410 = vld [vmem:[%s1409] sm:$0x1]
        %v1412 = vperm.slane %v1410, 0
        %1414 = vmatpush.msra.mxu0 %v1376
        %1415 = vmatpush.msra.mxu0 %v1375
        %1416 = vmatpush.msra.mxu0 %v1374
        %1417 = vmatpush.msra.mxu0 %v1373
        %1418 = vmatpush.msra.mxu0 %v1372
        %1419 = vmatpush.msra.mxu0 %v1371
        %1420 = vmatpush.msra.mxu0 %v1370
        %1421 = vmatpush.msra.mxu0 %v1369
        %1422 = vmatpush.msra.mxu0 %v1368
        %1423 = vmatpush.msra.mxu0 %v1367
        %1424 = vmatpush.msra.mxu0 %v1366
        %1425 = vmatpush.msra.mxu0 %v1365
        %1426 = vmatpush.msra.mxu0 %v1364
        %1427 = vmatpush.msra.mxu0 %v1363
        %1428 = vmatpush.msra.mxu0 %v1362
        %1429 = vmatpush.msra.mxu0 %v1361
        %1430 = vmatmul.f32.gmra.mxu0 0.0
        %v1431 = vpop.f32.mrf.mxu0
        %v1432 = vadd.f32 %v1412, %v1431
        %1433 = vmatmul.f32.gmra.mxu0 0.0
        %v1434 = vpop.f32.mrf.mxu0
        %v1435 = vadd.f32 %v1412, %v1434
        %1436 = vmatmul.f32.gmra.mxu0 %v1344
        %v1437 = vpop.f32.mrf.mxu0
        %v1438 = vadd.f32 %v1412, %v1437
        %1439 = vmatmul.f32.gmra.mxu0 %v1345
        %v1440 = vpop.f32.mrf.mxu0
        %v1441 = vadd.f32 %v1412, %v1440
        %1442 = vmatmul.f32.gmra.mxu0 %v1346
        %v1443 = vpop.f32.mrf.mxu0
        %v1444 = vadd.f32 %v1412, %v1443
        %1445 = vmatmul.f32.gmra.mxu0 %v1347
        %v1446 = vpop.f32.mrf.mxu0
        %v1447 = vadd.f32 %v1412, %v1446
        %1448 = vmatmul.f32.gmra.mxu0 %v1348
        %v1449 = vpop.f32.mrf.mxu0
        %v1450 = vadd.f32 %v1412, %v1449
        %1451 = vmatmul.f32.gmra.mxu0 %v1349
        %v1452 = vpop.f32.mrf.mxu0
        %v1453 = vadd.f32 %v1412, %v1452
        %1454 = vmatmul.f32.gmra.mxu0 %v1350
        %v1455 = vpop.f32.mrf.mxu0
        %v1456 = vadd.f32 %v1412, %v1455
        %1457 = vmatmul.f32.gmra.mxu0 %v1351
        %v1458 = vpop.f32.mrf.mxu0
        %v1459 = vadd.f32 %v1412, %v1458
        %1460 = vmatmul.f32.gmra.mxu0 %v1352
        %v1461 = vpop.f32.mrf.mxu0
        %v1462 = vadd.f32 %v1412, %v1461
        %1463 = vmatmul.f32.gmra.mxu0 %v1353
        %v1464 = vpop.f32.mrf.mxu0
        %v1465 = vadd.f32 %v1412, %v1464
        %1466 = vmatmul.f32.gmra.mxu0 %v1354
        %v1467 = vpop.f32.mrf.mxu0
        %v1468 = vadd.f32 %v1412, %v1467
        %1469 = vmatmul.f32.gmra.mxu0 %v1355
        %v1470 = vpop.f32.mrf.mxu0
        %v1471 = vadd.f32 %v1412, %v1470
        %1472 = vmatmul.f32.gmra.mxu0 %v1356
        %v1473 = vpop.f32.mrf.mxu0
        %v1474 = vadd.f32 %v1412, %v1473
        %1475 = vmatmul.f32.gmra.mxu0 %v1357
        %v1476 = vpop.f32.mrf.mxu0
        %v1477 = vadd.f32 %v1412, %v1476
        %1478 = vdwg.mxu0
        %1479 = vmatpush.msra.mxu0 %v1392
        %1480 = vmatpush.msra.mxu0 %v1391
        %1481 = vmatpush.msra.mxu0 %v1390
        %1482 = vmatpush.msra.mxu0 %v1389
        %1483 = vmatpush.msra.mxu0 %v1388
        %1484 = vmatpush.msra.mxu0 %v1387
        %1485 = vmatpush.msra.mxu0 %v1386
        %1486 = vmatpush.msra.mxu0 %v1385
        %1487 = vmatpush.msra.mxu0 %v1384
        %1488 = vmatpush.msra.mxu0 %v1383
        %1489 = vmatpush.msra.mxu0 %v1382
        %1490 = vmatpush.msra.mxu0 %v1381
        %1491 = vmatpush.msra.mxu0 %v1380
        %1492 = vmatpush.msra.mxu0 %v1379
        %1493 = vmatpush.msra.mxu0 %v1378
        %1494 = vmatpush.msra.mxu0 %v1377
        %1495 = vmatmul.f32.gmra.mxu0 %v1344
        %v1496 = vpop.f32.mrf.mxu0
        %v1497 = vadd.f32 %v1432, %v1496
        %1498 = vmatmul.f32.gmra.mxu0 %v1345
        %v1499 = vpop.f32.mrf.mxu0
        %v1500 = vadd.f32 %v1435, %v1499
        %1501 = vmatmul.f32.gmra.mxu0 %v1346
        %v1502 = vpop.f32.mrf.mxu0
        %v1503 = vadd.f32 %v1438, %v1502
        %1504 = vmatmul.f32.gmra.mxu0 %v1347
        %v1505 = vpop.f32.mrf.mxu0
        %v1506 = vadd.f32 %v1441, %v1505
        %1507 = vmatmul.f32.gmra.mxu0 %v1348
        %v1508 = vpop.f32.mrf.mxu0
        %v1509 = vadd.f32 %v1444, %v1508
        %1510 = vmatmul.f32.gmra.mxu0 %v1349
        %v1511 = vpop.f32.mrf.mxu0
        %v1512 = vadd.f32 %v1447, %v1511
        %1513 = vmatmul.f32.gmra.mxu0 %v1350
        %v1514 = vpop.f32.mrf.mxu0
        %v1515 = vadd.f32 %v1450, %v1514
        %1516 = vmatmul.f32.gmra.mxu0 %v1351
        %v1517 = vpop.f32.mrf.mxu0
        %v1518 = vadd.f32 %v1453, %v1517
        %1519 = vmatmul.f32.gmra.mxu0 %v1352
        %v1520 = vpop.f32.mrf.mxu0
        %v1521 = vadd.f32 %v1456, %v1520
        %1522 = vmatmul.f32.gmra.mxu0 %v1353
        %v1523 = vpop.f32.mrf.mxu0
        %v1524 = vadd.f32 %v1459, %v1523
        %1525 = vmatmul.f32.gmra.mxu0 %v1354
        %v1526 = vpop.f32.mrf.mxu0
        %v1527 = vadd.f32 %v1462, %v1526
        %1528 = vmatmul.f32.gmra.mxu0 %v1355
        %v1529 = vpop.f32.mrf.mxu0
        %v1530 = vadd.f32 %v1465, %v1529
        %1531 = vmatmul.f32.gmra.mxu0 %v1356
        %v1532 = vpop.f32.mrf.mxu0
        %v1533 = vadd.f32 %v1468, %v1532
        %1534 = vmatmul.f32.gmra.mxu0 %v1357
        %v1535 = vpop.f32.mrf.mxu0
        %v1536 = vadd.f32 %v1471, %v1535
        %1537 = vmatmul.f32.gmra.mxu0 %v1358
        %v1538 = vpop.f32.mrf.mxu0
        %v1539 = vadd.f32 %v1474, %v1538
        %1540 = vmatmul.f32.gmra.mxu0 %v1359
        %v1541 = vpop.f32.mrf.mxu0
        %v1542 = vadd.f32 %v1477, %v1541
        %1543 = vdwg.mxu0
        %1544 = vmatpush.msra.mxu0 %v1408
        %1545 = vmatpush.msra.mxu0 %v1407
        %1546 = vmatpush.msra.mxu0 %v1406
        %1547 = vmatpush.msra.mxu0 %v1405
        %1548 = vmatpush.msra.mxu0 %v1404
        %1549 = vmatpush.msra.mxu0 %v1403
        %1550 = vmatpush.msra.mxu0 %v1402
        %1551 = vmatpush.msra.mxu0 %v1401
        %1552 = vmatpush.msra.mxu0 %v1400
        %1553 = vmatpush.msra.mxu0 %v1399
        %1554 = vmatpush.msra.mxu0 %v1398
        %1555 = vmatpush.msra.mxu0 %v1397
        %1556 = vmatpush.msra.mxu0 %v1396
        %1557 = vmatpush.msra.mxu0 %v1395
        %1558 = vmatpush.msra.mxu0 %v1394
        %1559 = vmatpush.msra.mxu0 %v1393
        %1560 = vmatmul.f32.gmra.mxu0 %v1346
        %v1561 = vpop.f32.mrf.mxu0
        %v1562 = vadd.f32 %v1497, %v1561
        %1563 = vmatmul.f32.gmra.mxu0 %v1347
        %v1564 = vpop.f32.mrf.mxu0
        %v1565 = vadd.f32 %v1500, %v1564
        %1566 = vmatmul.f32.gmra.mxu0 %v1348
        %v1567 = vpop.f32.mrf.mxu0
        %v1568 = vadd.f32 %v1503, %v1567
        %1569 = vmatmul.f32.gmra.mxu0 %v1349
        %v1570 = vpop.f32.mrf.mxu0
        %v1571 = vadd.f32 %v1506, %v1570
        %1572 = vmatmul.f32.gmra.mxu0 %v1350
        %v1573 = vpop.f32.mrf.mxu0
        %v1574 = vadd.f32 %v1509, %v1573
        %1575 = vmatmul.f32.gmra.mxu0 %v1351
        %v1576 = vpop.f32.mrf.mxu0
        %v1577 = vadd.f32 %v1512, %v1576
        %1578 = vmatmul.f32.gmra.mxu0 %v1352
        %v1579 = vpop.f32.mrf.mxu0
        %v1580 = vadd.f32 %v1515, %v1579
        %1581 = vmatmul.f32.gmra.mxu0 %v1353
        %v1582 = vpop.f32.mrf.mxu0
        %v1583 = vadd.f32 %v1518, %v1582
        %1584 = vmatmul.f32.gmra.mxu0 %v1354
        %v1585 = vpop.f32.mrf.mxu0
        %v1586 = vadd.f32 %v1521, %v1585
        %1587 = vmatmul.f32.gmra.mxu0 %v1355
        %v1588 = vpop.f32.mrf.mxu0
        %v1589 = vadd.f32 %v1524, %v1588
        %1590 = vmatmul.f32.gmra.mxu0 %v1356
        %v1591 = vpop.f32.mrf.mxu0
        %v1592 = vadd.f32 %v1527, %v1591
        %1593 = vmatmul.f32.gmra.mxu0 %v1357
        %v1594 = vpop.f32.mrf.mxu0
        %v1595 = vadd.f32 %v1530, %v1594
        %1596 = vmatmul.f32.gmra.mxu0 %v1358
        %v1597 = vpop.f32.mrf.mxu0
        %v1598 = vadd.f32 %v1533, %v1597
        %1599 = vmatmul.f32.gmra.mxu0 %v1359
        %v1600 = vpop.f32.mrf.mxu0
        %v1601 = vadd.f32 %v1536, %v1600
        %1602 = vmatmul.f32.gmra.mxu0 0.0
        %v1603 = vpop.f32.mrf.mxu0
        %v1604 = vadd.f32 %v1539, %v1603
        %1605 = vmatmul.f32.gmra.mxu0 0.0
        %v1606 = vpop.f32.mrf.mxu0
        %v1607 = vadd.f32 %v1542, %v1606
        %1608 = vdwg.mxu0
        %v1609 = vadd.f32 %v1562, %v1103
        %v1610 = vadd.f32 %v1565, %v1106
        %v1611 = vadd.f32 %v1568, %v1109
        %v1612 = vadd.f32 %v1571, %v1112
        %v1613 = vadd.f32 %v1574, %v1115
        %v1614 = vadd.f32 %v1577, %v1118
        %v1615 = vadd.f32 %v1580, %v1121
        %v1616 = vadd.f32 %v1583, %v1124
        %v1617 = vadd.f32 %v1586, %v1127
        %v1618 = vadd.f32 %v1589, %v1130
        %v1619 = vadd.f32 %v1592, %v1133
        %v1620 = vadd.f32 %v1595, %v1136
        %v1621 = vadd.f32 %v1598, %v1139
        %v1622 = vadd.f32 %v1601, %v1142
        %v1623 = vadd.f32 %v1604, %v1145
        %v1624 = vadd.f32 %v1607, %v1148
        %s1625 = scalar_lea.vmem %s10, 1
        %v1626 = vld [vmem:[%s1625] sm:$0x1]
        %vm1627 = vcmp.ge.f32.partialorder %v1609, 0.0
        %vm1628 = vcmp.ge.f32.partialorder %v1610, 0.0
        %vm1629 = vcmp.ge.f32.partialorder %v1611, 0.0
        %vm1630 = vcmp.ge.f32.partialorder %v1612, 0.0
        %vm1631 = vcmp.ge.f32.partialorder %v1613, 0.0
        %vm1632 = vcmp.ge.f32.partialorder %v1614, 0.0
        %vm1633 = vcmp.ge.f32.partialorder %v1615, 0.0
        %vm1634 = vcmp.ge.f32.partialorder %v1616, 0.0
        %vm1635 = vcmp.ge.f32.partialorder %v1617, 0.0
        %vm1636 = vcmp.ge.f32.partialorder %v1618, 0.0
        %vm1637 = vcmp.ge.f32.partialorder %v1619, 0.0
        %vm1638 = vcmp.ge.f32.partialorder %v1620, 0.0
        %vm1639 = vcmp.ge.f32.partialorder %v1621, 0.0
        %vm1640 = vcmp.ge.f32.partialorder %v1622, 0.0
        %vm1641 = vcmp.ge.f32.partialorder %v1623, 0.0
        %vm1642 = vcmp.ge.f32.partialorder %v1624, 0.0
        %v1644 = vperm.slane %v1626, 0
        %v1646 = vmul.f32 %v1644, %v1609
        %v1647 = vmul.f32 %v1644, %v1610
        %v1648 = vmul.f32 %v1644, %v1611
        %v1649 = vmul.f32 %v1644, %v1612
        %v1650 = vmul.f32 %v1644, %v1613
        %v1651 = vmul.f32 %v1644, %v1614
        %v1652 = vmul.f32 %v1644, %v1615
        %v1653 = vmul.f32 %v1644, %v1616
        %v1654 = vmul.f32 %v1644, %v1617
        %v1655 = vmul.f32 %v1644, %v1618
        %v1656 = vmul.f32 %v1644, %v1619
        %v1657 = vmul.f32 %v1644, %v1620
        %v1658 = vmul.f32 %v1644, %v1621
        %v1659 = vmul.f32 %v1644, %v1622
        %v1660 = vmul.f32 %v1644, %v1623
        %v1661 = vmul.f32 %v1644, %v1624
        %v1662 = vsel %vm1627, %v1609, %v1646
        %v1663 = vsel %vm1628, %v1610, %v1647
        %v1664 = vsel %vm1629, %v1611, %v1648
        %v1665 = vsel %vm1630, %v1612, %v1649
        %v1666 = vsel %vm1631, %v1613, %v1650
        %v1667 = vsel %vm1632, %v1614, %v1651
        %v1668 = vsel %vm1633, %v1615, %v1652
        %v1669 = vsel %vm1634, %v1616, %v1653
        %v1670 = vsel %vm1635, %v1617, %v1654
        %v1671 = vsel %vm1636, %v1618, %v1655
        %v1672 = vsel %vm1637, %v1619, %v1656
        %v1673 = vsel %vm1638, %v1620, %v1657
        %v1674 = vsel %vm1639, %v1621, %v1658
        %v1675 = vsel %vm1640, %v1622, %v1659
        %v1676 = vsel %vm1641, %v1623, %v1660
        %v1677 = vsel %vm1642, %v1624, %v1661
        %1678 = vst [vmem:[%s407] sm:$0xff] %v1662
        %1679 = vst [vmem:[%s407 + $0x8] sm:$0xff] %v1663
        %1680 = vst [vmem:[%s407 + $0x10] sm:$0xff] %v1664
        %1681 = vst [vmem:[%s407 + $0x18] sm:$0xff] %v1665
        %1682 = vst [vmem:[%s407 + $0x20] sm:$0xff] %v1666
        %1683 = vst [vmem:[%s407 + $0x28] sm:$0xff] %v1667
        %1684 = vst [vmem:[%s407 + $0x30] sm:$0xff] %v1668
        %1685 = vst [vmem:[%s407 + $0x38] sm:$0xff] %v1669
        %1686 = vst [vmem:[%s407 + $0x40] sm:$0xff] %v1670
        %1687 = vst [vmem:[%s407 + $0x48] sm:$0xff] %v1671
        %1688 = vst [vmem:[%s407 + $0x50] sm:$0xff] %v1672
        %1689 = vst [vmem:[%s407 + $0x58] sm:$0xff] %v1673
        %1690 = vst [vmem:[%s407 + $0x60] sm:$0xff] %v1674
        %1691 = vst [vmem:[%s407 + $0x68] sm:$0xff] %v1675
        %1692 = vst [vmem:[%s407 + $0x70] sm:$0xff] %v1676
        %1693 = vst [vmem:[%s407 + $0x78] sm:$0xff] %v1677
        %s1694 = scalar_lea.vmem %s8, 256
        %v1695 = vld [vmem:[%s1694] sm:$0xff]
        %v1696 = vld [vmem:[%s1694 + $0x8] sm:$0xff]
        %v1697 = vld [vmem:[%s1694 + $0x10] sm:$0xff]
        %v1698 = vld [vmem:[%s1694 + $0x18] sm:$0xff]
        %v1699 = vld [vmem:[%s1694 + $0x20] sm:$0xff]
        %v1700 = vld [vmem:[%s1694 + $0x28] sm:$0xff]
        %v1701 = vld [vmem:[%s1694 + $0x30] sm:$0xff]
        %v1702 = vld [vmem:[%s1694 + $0x38] sm:$0xff]
        %v1703 = vld [vmem:[%s1694 + $0x40] sm:$0xff]
        %v1704 = vld [vmem:[%s1694 + $0x48] sm:$0xff]
        %v1705 = vld [vmem:[%s1694 + $0x50] sm:$0xff]
        %v1706 = vld [vmem:[%s1694 + $0x58] sm:$0xff]
        %v1707 = vld [vmem:[%s1694 + $0x60] sm:$0xff]
        %v1708 = vld [vmem:[%s1694 + $0x68] sm:$0xff]
        %v1709 = vld [vmem:[%s1694 + $0x70] sm:$0xff]
        %v1710 = vld [vmem:[%s1694 + $0x78] sm:$0xff]
        %s1711 = scalar_lea.vmem %s9, 2
        %v1712 = vld [vmem:[%s1711] sm:$0x1]
        %v1714 = vperm.slane %v1712, 0
        %1716 = vmatpush.msra.mxu0 %v1710
        %1717 = vmatpush.msra.mxu0 %v1709
        %1718 = vmatpush.msra.mxu0 %v1708
        %1719 = vmatpush.msra.mxu0 %v1707
        %1720 = vmatpush.msra.mxu0 %v1706
        %1721 = vmatpush.msra.mxu0 %v1705
        %1722 = vmatpush.msra.mxu0 %v1704
        %1723 = vmatpush.msra.mxu0 %v1703
        %1724 = vmatpush.msra.mxu0 %v1702
        %1725 = vmatpush.msra.mxu0 %v1701
        %1726 = vmatpush.msra.mxu0 %v1700
        %1727 = vmatpush.msra.mxu0 %v1699
        %1728 = vmatpush.msra.mxu0 %v1698
        %1729 = vmatpush.msra.mxu0 %v1697
        %1730 = vmatpush.msra.mxu0 %v1696
        %1731 = vmatpush.msra.mxu0 %v1695
        %1732 = vmatmul.f32.gmra.mxu0 %v1662
        %v1733 = vpop.f32.mrf.mxu0
        %v1734 = vadd.f32 %v1714, %v1733
        %1735 = vmatmul.f32.gmra.mxu0 %v1663
        %v1736 = vpop.f32.mrf.mxu0
        %v1737 = vadd.f32 %v1714, %v1736
        %1738 = vmatmul.f32.gmra.mxu0 %v1664
        %v1739 = vpop.f32.mrf.mxu0
        %v1740 = vadd.f32 %v1714, %v1739
        %1741 = vmatmul.f32.gmra.mxu0 %v1665
        %v1742 = vpop.f32.mrf.mxu0
        %v1743 = vadd.f32 %v1714, %v1742
        %1744 = vmatmul.f32.gmra.mxu0 %v1666
        %v1745 = vpop.f32.mrf.mxu0
        %v1746 = vadd.f32 %v1714, %v1745
        %1747 = vmatmul.f32.gmra.mxu0 %v1667
        %v1748 = vpop.f32.mrf.mxu0
        %v1749 = vadd.f32 %v1714, %v1748
        %1750 = vmatmul.f32.gmra.mxu0 %v1668
        %v1751 = vpop.f32.mrf.mxu0
        %v1752 = vadd.f32 %v1714, %v1751
        %1753 = vmatmul.f32.gmra.mxu0 %v1669
        %v1754 = vpop.f32.mrf.mxu0
        %v1755 = vadd.f32 %v1714, %v1754
        %1756 = vmatmul.f32.gmra.mxu0 %v1670
        %v1757 = vpop.f32.mrf.mxu0
        %v1758 = vadd.f32 %v1714, %v1757
        %1759 = vmatmul.f32.gmra.mxu0 %v1671
        %v1760 = vpop.f32.mrf.mxu0
        %v1761 = vadd.f32 %v1714, %v1760
        %1762 = vmatmul.f32.gmra.mxu0 %v1672
        %v1763 = vpop.f32.mrf.mxu0
        %v1764 = vadd.f32 %v1714, %v1763
        %1765 = vmatmul.f32.gmra.mxu0 %v1673
        %v1766 = vpop.f32.mrf.mxu0
        %v1767 = vadd.f32 %v1714, %v1766
        %1768 = vmatmul.f32.gmra.mxu0 %v1674
        %v1769 = vpop.f32.mrf.mxu0
        %v1770 = vadd.f32 %v1714, %v1769
        %1771 = vmatmul.f32.gmra.mxu0 %v1675
        %v1772 = vpop.f32.mrf.mxu0
        %v1773 = vadd.f32 %v1714, %v1772
        %1774 = vmatmul.f32.gmra.mxu0 %v1676
        %v1775 = vpop.f32.mrf.mxu0
        %v1776 = vadd.f32 %v1714, %v1775
        %1777 = vmatmul.f32.gmra.mxu0 %v1677
        %v1778 = vpop.f32.mrf.mxu0
        %v1779 = vadd.f32 %v1714, %v1778
        %1780 = vdwg.mxu0
        %s1781 = scalar_lea.vmem %s2, 256
        %v1782 = vld [vmem:[%s1781] sm:$0xff]
        %v1783 = vld [vmem:[%s1781 + $0x8] sm:$0xff]
        %v1784 = vld [vmem:[%s1781 + $0x10] sm:$0xff]
        %v1785 = vld [vmem:[%s1781 + $0x18] sm:$0xff]
        %v1786 = vld [vmem:[%s1781 + $0x20] sm:$0xff]
        %v1787 = vld [vmem:[%s1781 + $0x28] sm:$0xff]
        %v1788 = vld [vmem:[%s1781 + $0x30] sm:$0xff]
        %v1789 = vld [vmem:[%s1781 + $0x38] sm:$0xff]
        %v1790 = vld [vmem:[%s1781 + $0x40] sm:$0xff]
        %v1791 = vld [vmem:[%s1781 + $0x48] sm:$0xff]
        %v1792 = vld [vmem:[%s1781 + $0x50] sm:$0xff]
        %v1793 = vld [vmem:[%s1781 + $0x58] sm:$0xff]
        %v1794 = vld [vmem:[%s1781 + $0x60] sm:$0xff]
        %v1795 = vld [vmem:[%s1781 + $0x68] sm:$0xff]
        %v1796 = vld [vmem:[%s1781 + $0x70] sm:$0xff]
        %v1797 = vld [vmem:[%s1781 + $0x78] sm:$0xff]
        %s1798 = scalar_lea.vmem %s3, 2
        %v1799 = vld [vmem:[%s1798] sm:$0x1]
        %v1801 = vperm.slane %v1799, 0
        %1803 = vmatpush.msra.mxu0 %v1797
        %1804 = vmatpush.msra.mxu0 %v1796
        %1805 = vmatpush.msra.mxu0 %v1795
        %1806 = vmatpush.msra.mxu0 %v1794
        %1807 = vmatpush.msra.mxu0 %v1793
        %1808 = vmatpush.msra.mxu0 %v1792
        %1809 = vmatpush.msra.mxu0 %v1791
        %1810 = vmatpush.msra.mxu0 %v1790
        %1811 = vmatpush.msra.mxu0 %v1789
        %1812 = vmatpush.msra.mxu0 %v1788
        %1813 = vmatpush.msra.mxu0 %v1787
        %1814 = vmatpush.msra.mxu0 %v1786
        %1815 = vmatpush.msra.mxu0 %v1785
        %1816 = vmatpush.msra.mxu0 %v1784
        %1817 = vmatpush.msra.mxu0 %v1783
        %1818 = vmatpush.msra.mxu0 %v1782
        %1819 = vmatmul.f32.gmra.mxu0 %v1662
        %v1820 = vpop.f32.mrf.mxu0
        %v1821 = vadd.f32 %v1801, %v1820
        %1822 = vmatmul.f32.gmra.mxu0 %v1663
        %v1823 = vpop.f32.mrf.mxu0
        %v1824 = vadd.f32 %v1801, %v1823
        %1825 = vmatmul.f32.gmra.mxu0 %v1664
        %v1826 = vpop.f32.mrf.mxu0
        %v1827 = vadd.f32 %v1801, %v1826
        %1828 = vmatmul.f32.gmra.mxu0 %v1665
        %v1829 = vpop.f32.mrf.mxu0
        %v1830 = vadd.f32 %v1801, %v1829
        %1831 = vmatmul.f32.gmra.mxu0 %v1666
        %v1832 = vpop.f32.mrf.mxu0
        %v1833 = vadd.f32 %v1801, %v1832
        %1834 = vmatmul.f32.gmra.mxu0 %v1667
        %v1835 = vpop.f32.mrf.mxu0
        %v1836 = vadd.f32 %v1801, %v1835
        %1837 = vmatmul.f32.gmra.mxu0 %v1668
        %v1838 = vpop.f32.mrf.mxu0
        %v1839 = vadd.f32 %v1801, %v1838
        %1840 = vmatmul.f32.gmra.mxu0 %v1669
        %v1841 = vpop.f32.mrf.mxu0
        %v1842 = vadd.f32 %v1801, %v1841
        %1843 = vmatmul.f32.gmra.mxu0 %v1670
        %v1844 = vpop.f32.mrf.mxu0
        %v1845 = vadd.f32 %v1801, %v1844
        %1846 = vmatmul.f32.gmra.mxu0 %v1671
        %v1847 = vpop.f32.mrf.mxu0
        %v1848 = vadd.f32 %v1801, %v1847
        %1849 = vmatmul.f32.gmra.mxu0 %v1672
        %v1850 = vpop.f32.mrf.mxu0
        %v1851 = vadd.f32 %v1801, %v1850
        %1852 = vmatmul.f32.gmra.mxu0 %v1673
        %v1853 = vpop.f32.mrf.mxu0
        %v1854 = vadd.f32 %v1801, %v1853
        %1855 = vmatmul.f32.gmra.mxu0 %v1674
        %v1856 = vpop.f32.mrf.mxu0
        %v1857 = vadd.f32 %v1801, %v1856
        %1858 = vmatmul.f32.gmra.mxu0 %v1675
        %v1859 = vpop.f32.mrf.mxu0
        %v1860 = vadd.f32 %v1801, %v1859
        %1861 = vmatmul.f32.gmra.mxu0 %v1676
        %v1862 = vpop.f32.mrf.mxu0
        %v1863 = vadd.f32 %v1801, %v1862
        %1864 = vmatmul.f32.gmra.mxu0 %v1677
        %v1865 = vpop.f32.mrf.mxu0
        %v1866 = vadd.f32 %v1801, %v1865
        %1867 = vdwg.mxu0
        %s1868 = scalar_lea.vmem %s4, 2
        %v1869 = vld [vmem:[%s1868] sm:$0x1]
        %v1871 = vperm.slane %v1869, 0
        %1873 = vmatpush.msra.mxu0 %v1866
        %1874 = vmatpush.msra.mxu0 %v1863
        %1875 = vmatpush.msra.mxu0 %v1860
        %1876 = vmatpush.msra.mxu0 %v1857
        %1877 = vmatpush.msra.mxu0 %v1854
        %1878 = vmatpush.msra.mxu0 %v1851
        %1879 = vmatpush.msra.mxu0 %v1848
        %1880 = vmatpush.msra.mxu0 %v1845
        %1881 = vmatpush.msra.mxu0 %v1842
        %1882 = vmatpush.msra.mxu0 %v1839
        %1883 = vmatpush.msra.mxu0 %v1836
        %1884 = vmatpush.msra.mxu0 %v1833
        %1885 = vmatpush.msra.mxu0 %v1830
        %1886 = vmatpush.msra.mxu0 %v1827
        %1887 = vmatpush.msra.mxu0 %v1824
        %1888 = vmatpush.msra.mxu0 %v1821
        %1889 = vmatmul.f32.gmra.mxu0 %v441
        %v1890 = vpop.f32.mrf.mxu0
        %v1891 = vadd.f32 %v1871, %v1890
        %1892 = vmatmul.f32.gmra.mxu0 %v442
        %v1893 = vpop.f32.mrf.mxu0
        %v1894 = vadd.f32 %v1871, %v1893
        %1895 = vmatmul.f32.gmra.mxu0 %v443
        %v1896 = vpop.f32.mrf.mxu0
        %v1897 = vadd.f32 %v1871, %v1896
        %1898 = vmatmul.f32.gmra.mxu0 %v444
        %v1899 = vpop.f32.mrf.mxu0
        %v1900 = vadd.f32 %v1871, %v1899
        %1901 = vmatmul.f32.gmra.mxu0 %v445
        %v1902 = vpop.f32.mrf.mxu0
        %v1903 = vadd.f32 %v1871, %v1902
        %1904 = vmatmul.f32.gmra.mxu0 %v446
        %v1905 = vpop.f32.mrf.mxu0
        %v1906 = vadd.f32 %v1871, %v1905
        %1907 = vmatmul.f32.gmra.mxu0 %v447
        %v1908 = vpop.f32.mrf.mxu0
        %v1909 = vadd.f32 %v1871, %v1908
        %1910 = vmatmul.f32.gmra.mxu0 %v448
        %v1911 = vpop.f32.mrf.mxu0
        %v1912 = vadd.f32 %v1871, %v1911
        %1913 = vmatmul.f32.gmra.mxu0 %v449
        %v1914 = vpop.f32.mrf.mxu0
        %v1915 = vadd.f32 %v1871, %v1914
        %1916 = vmatmul.f32.gmra.mxu0 %v450
        %v1917 = vpop.f32.mrf.mxu0
        %v1918 = vadd.f32 %v1871, %v1917
        %1919 = vmatmul.f32.gmra.mxu0 %v451
        %v1920 = vpop.f32.mrf.mxu0
        %v1921 = vadd.f32 %v1871, %v1920
        %1922 = vmatmul.f32.gmra.mxu0 %v452
        %v1923 = vpop.f32.mrf.mxu0
        %v1924 = vadd.f32 %v1871, %v1923
        %1925 = vmatmul.f32.gmra.mxu0 %v453
        %v1926 = vpop.f32.mrf.mxu0
        %v1927 = vadd.f32 %v1871, %v1926
        %1928 = vmatmul.f32.gmra.mxu0 %v454
        %v1929 = vpop.f32.mrf.mxu0
        %v1930 = vadd.f32 %v1871, %v1929
        %1931 = vmatmul.f32.gmra.mxu0 %v455
        %v1932 = vpop.f32.mrf.mxu0
        %v1933 = vadd.f32 %v1871, %v1932
        %1934 = vmatmul.f32.gmra.mxu0 %v456
        %v1935 = vpop.f32.mrf.mxu0
        %v1936 = vadd.f32 %v1871, %v1935
        %1937 = vdwg.mxu0
        %s1938 = scalar_lea.vmem %s5, 2
        %v1939 = vld [vmem:[%s1938] sm:$0x1]
        %vm1940 = vcmp.ge.f32.partialorder %v1891, 0.0
        %vm1941 = vcmp.ge.f32.partialorder %v1894, 0.0
        %vm1942 = vcmp.ge.f32.partialorder %v1897, 0.0
        %vm1943 = vcmp.ge.f32.partialorder %v1900, 0.0
        %vm1944 = vcmp.ge.f32.partialorder %v1903, 0.0
        %vm1945 = vcmp.ge.f32.partialorder %v1906, 0.0
        %vm1946 = vcmp.ge.f32.partialorder %v1909, 0.0
        %vm1947 = vcmp.ge.f32.partialorder %v1912, 0.0
        %vm1948 = vcmp.ge.f32.partialorder %v1915, 0.0
        %vm1949 = vcmp.ge.f32.partialorder %v1918, 0.0
        %vm1950 = vcmp.ge.f32.partialorder %v1921, 0.0
        %vm1951 = vcmp.ge.f32.partialorder %v1924, 0.0
        %vm1952 = vcmp.ge.f32.partialorder %v1927, 0.0
        %vm1953 = vcmp.ge.f32.partialorder %v1930, 0.0
        %vm1954 = vcmp.ge.f32.partialorder %v1933, 0.0
        %vm1955 = vcmp.ge.f32.partialorder %v1936, 0.0
        %v1957 = vperm.slane %v1939, 0
        %v1959 = vmul.f32 %v1957, %v1891
        %v1960 = vmul.f32 %v1957, %v1894
        %v1961 = vmul.f32 %v1957, %v1897
        %v1962 = vmul.f32 %v1957, %v1900
        %v1963 = vmul.f32 %v1957, %v1903
        %v1964 = vmul.f32 %v1957, %v1906
        %v1965 = vmul.f32 %v1957, %v1909
        %v1966 = vmul.f32 %v1957, %v1912
        %v1967 = vmul.f32 %v1957, %v1915
        %v1968 = vmul.f32 %v1957, %v1918
        %v1969 = vmul.f32 %v1957, %v1921
        %v1970 = vmul.f32 %v1957, %v1924
        %v1971 = vmul.f32 %v1957, %v1927
        %v1972 = vmul.f32 %v1957, %v1930
        %v1973 = vmul.f32 %v1957, %v1933
        %v1974 = vmul.f32 %v1957, %v1936
        %v1975 = vsel %vm1940, %v1891, %v1959
        %v1976 = vsel %vm1941, %v1894, %v1960
        %v1977 = vsel %vm1942, %v1897, %v1961
        %v1978 = vsel %vm1943, %v1900, %v1962
        %v1979 = vsel %vm1944, %v1903, %v1963
        %v1980 = vsel %vm1945, %v1906, %v1964
        %v1981 = vsel %vm1946, %v1909, %v1965
        %v1982 = vsel %vm1947, %v1912, %v1966
        %v1983 = vsel %vm1948, %v1915, %v1967
        %v1984 = vsel %vm1949, %v1918, %v1968
        %v1985 = vsel %vm1950, %v1921, %v1969
        %v1986 = vsel %vm1951, %v1924, %v1970
        %v1987 = vsel %vm1952, %v1927, %v1971
        %v1988 = vsel %vm1953, %v1930, %v1972
        %v1989 = vsel %vm1954, %v1933, %v1973
        %v1990 = vsel %vm1955, %v1936, %v1974
        %s1991 = scalar_lea.vmem %s6, 768
        %v1992 = vld [vmem:[%s1991] sm:$0xff]
        %v1993 = vld [vmem:[%s1991 + $0x8] sm:$0xff]
        %v1994 = vld [vmem:[%s1991 + $0x10] sm:$0xff]
        %v1995 = vld [vmem:[%s1991 + $0x18] sm:$0xff]
        %v1996 = vld [vmem:[%s1991 + $0x20] sm:$0xff]
        %v1997 = vld [vmem:[%s1991 + $0x28] sm:$0xff]
        %v1998 = vld [vmem:[%s1991 + $0x30] sm:$0xff]
        %v1999 = vld [vmem:[%s1991 + $0x38] sm:$0xff]
        %v2000 = vld [vmem:[%s1991 + $0x40] sm:$0xff]
        %v2001 = vld [vmem:[%s1991 + $0x48] sm:$0xff]
        %v2002 = vld [vmem:[%s1991 + $0x50] sm:$0xff]
        %v2003 = vld [vmem:[%s1991 + $0x58] sm:$0xff]
        %v2004 = vld [vmem:[%s1991 + $0x60] sm:$0xff]
        %v2005 = vld [vmem:[%s1991 + $0x68] sm:$0xff]
        %v2006 = vld [vmem:[%s1991 + $0x70] sm:$0xff]
        %v2007 = vld [vmem:[%s1991 + $0x78] sm:$0xff]
        %v2008 = vld [vmem:[%s1991 + $0x80] sm:$0xff]
        %v2009 = vld [vmem:[%s1991 + $0x88] sm:$0xff]
        %v2010 = vld [vmem:[%s1991 + $0x90] sm:$0xff]
        %v2011 = vld [vmem:[%s1991 + $0x98] sm:$0xff]
        %v2012 = vld [vmem:[%s1991 + $0xa0] sm:$0xff]
        %v2013 = vld [vmem:[%s1991 + $0xa8] sm:$0xff]
        %v2014 = vld [vmem:[%s1991 + $0xb0] sm:$0xff]
        %v2015 = vld [vmem:[%s1991 + $0xb8] sm:$0xff]
        %v2016 = vld [vmem:[%s1991 + $0xc0] sm:$0xff]
        %v2017 = vld [vmem:[%s1991 + $0xc8] sm:$0xff]
        %v2018 = vld [vmem:[%s1991 + $0xd0] sm:$0xff]
        %v2019 = vld [vmem:[%s1991 + $0xd8] sm:$0xff]
        %v2020 = vld [vmem:[%s1991 + $0xe0] sm:$0xff]
        %v2021 = vld [vmem:[%s1991 + $0xe8] sm:$0xff]
        %v2022 = vld [vmem:[%s1991 + $0xf0] sm:$0xff]
        %v2023 = vld [vmem:[%s1991 + $0xf8] sm:$0xff]
        %v2024 = vld [vmem:[%s1991 + $0x100] sm:$0xff]
        %v2025 = vld [vmem:[%s1991 + $0x108] sm:$0xff]
        %v2026 = vld [vmem:[%s1991 + $0x110] sm:$0xff]
        %v2027 = vld [vmem:[%s1991 + $0x118] sm:$0xff]
        %v2028 = vld [vmem:[%s1991 + $0x120] sm:$0xff]
        %v2029 = vld [vmem:[%s1991 + $0x128] sm:$0xff]
        %v2030 = vld [vmem:[%s1991 + $0x130] sm:$0xff]
        %v2031 = vld [vmem:[%s1991 + $0x138] sm:$0xff]
        %v2032 = vld [vmem:[%s1991 + $0x140] sm:$0xff]
        %v2033 = vld [vmem:[%s1991 + $0x148] sm:$0xff]
        %v2034 = vld [vmem:[%s1991 + $0x150] sm:$0xff]
        %v2035 = vld [vmem:[%s1991 + $0x158] sm:$0xff]
        %v2036 = vld [vmem:[%s1991 + $0x160] sm:$0xff]
        %v2037 = vld [vmem:[%s1991 + $0x168] sm:$0xff]
        %v2038 = vld [vmem:[%s1991 + $0x170] sm:$0xff]
        %v2039 = vld [vmem:[%s1991 + $0x178] sm:$0xff]
        %s2040 = scalar_lea.vmem %s7, 2
        %v2041 = vld [vmem:[%s2040] sm:$0x1]
        %v2043 = vperm.slane %v2041, 0
        %2045 = vmatpush.msra.mxu0 %v2007
        %2046 = vmatpush.msra.mxu0 %v2006
        %2047 = vmatpush.msra.mxu0 %v2005
        %2048 = vmatpush.msra.mxu0 %v2004
        %2049 = vmatpush.msra.mxu0 %v2003
        %2050 = vmatpush.msra.mxu0 %v2002
        %2051 = vmatpush.msra.mxu0 %v2001
        %2052 = vmatpush.msra.mxu0 %v2000
        %2053 = vmatpush.msra.mxu0 %v1999
        %2054 = vmatpush.msra.mxu0 %v1998
        %2055 = vmatpush.msra.mxu0 %v1997
        %2056 = vmatpush.msra.mxu0 %v1996
        %2057 = vmatpush.msra.mxu0 %v1995
        %2058 = vmatpush.msra.mxu0 %v1994
        %2059 = vmatpush.msra.mxu0 %v1993
        %2060 = vmatpush.msra.mxu0 %v1992
        %2061 = vmatmul.f32.gmra.mxu0 0.0
        %v2062 = vpop.f32.mrf.mxu0
        %v2063 = vadd.f32 %v2043, %v2062
        %2064 = vmatmul.f32.gmra.mxu0 0.0
        %v2065 = vpop.f32.mrf.mxu0
        %v2066 = vadd.f32 %v2043, %v2065
        %2067 = vmatmul.f32.gmra.mxu0 %v1975
        %v2068 = vpop.f32.mrf.mxu0
        %v2069 = vadd.f32 %v2043, %v2068
        %2070 = vmatmul.f32.gmra.mxu0 %v1976
        %v2071 = vpop.f32.mrf.mxu0
        %v2072 = vadd.f32 %v2043, %v2071
        %2073 = vmatmul.f32.gmra.mxu0 %v1977
        %v2074 = vpop.f32.mrf.mxu0
        %v2075 = vadd.f32 %v2043, %v2074
        %2076 = vmatmul.f32.gmra.mxu0 %v1978
        %v2077 = vpop.f32.mrf.mxu0
        %v2078 = vadd.f32 %v2043, %v2077
        %2079 = vmatmul.f32.gmra.mxu0 %v1979
        %v2080 = vpop.f32.mrf.mxu0
        %v2081 = vadd.f32 %v2043, %v2080
        %2082 = vmatmul.f32.gmra.mxu0 %v1980
        %v2083 = vpop.f32.mrf.mxu0
        %v2084 = vadd.f32 %v2043, %v2083
        %2085 = vmatmul.f32.gmra.mxu0 %v1981
        %v2086 = vpop.f32.mrf.mxu0
        %v2087 = vadd.f32 %v2043, %v2086
        %2088 = vmatmul.f32.gmra.mxu0 %v1982
        %v2089 = vpop.f32.mrf.mxu0
        %v2090 = vadd.f32 %v2043, %v2089
        %2091 = vmatmul.f32.gmra.mxu0 %v1983
        %v2092 = vpop.f32.mrf.mxu0
        %v2093 = vadd.f32 %v2043, %v2092
        %2094 = vmatmul.f32.gmra.mxu0 %v1984
        %v2095 = vpop.f32.mrf.mxu0
        %v2096 = vadd.f32 %v2043, %v2095
        %2097 = vmatmul.f32.gmra.mxu0 %v1985
        %v2098 = vpop.f32.mrf.mxu0
        %v2099 = vadd.f32 %v2043, %v2098
        %2100 = vmatmul.f32.gmra.mxu0 %v1986
        %v2101 = vpop.f32.mrf.mxu0
        %v2102 = vadd.f32 %v2043, %v2101
        %2103 = vmatmul.f32.gmra.mxu0 %v1987
        %v2104 = vpop.f32.mrf.mxu0
        %v2105 = vadd.f32 %v2043, %v2104
        %2106 = vmatmul.f32.gmra.mxu0 %v1988
        %v2107 = vpop.f32.mrf.mxu0
        %v2108 = vadd.f32 %v2043, %v2107
        %2109 = vdwg.mxu0
        %2110 = vmatpush.msra.mxu0 %v2023
        %2111 = vmatpush.msra.mxu0 %v2022
        %2112 = vmatpush.msra.mxu0 %v2021
        %2113 = vmatpush.msra.mxu0 %v2020
        %2114 = vmatpush.msra.mxu0 %v2019
        %2115 = vmatpush.msra.mxu0 %v2018
        %2116 = vmatpush.msra.mxu0 %v2017
        %2117 = vmatpush.msra.mxu0 %v2016
        %2118 = vmatpush.msra.mxu0 %v2015
        %2119 = vmatpush.msra.mxu0 %v2014
        %2120 = vmatpush.msra.mxu0 %v2013
        %2121 = vmatpush.msra.mxu0 %v2012
        %2122 = vmatpush.msra.mxu0 %v2011
        %2123 = vmatpush.msra.mxu0 %v2010
        %2124 = vmatpush.msra.mxu0 %v2009
        %2125 = vmatpush.msra.mxu0 %v2008
        %2126 = vmatmul.f32.gmra.mxu0 %v1975
        %v2127 = vpop.f32.mrf.mxu0
        %v2128 = vadd.f32 %v2063, %v2127
        %2129 = vmatmul.f32.gmra.mxu0 %v1976
        %v2130 = vpop.f32.mrf.mxu0
        %v2131 = vadd.f32 %v2066, %v2130
        %2132 = vmatmul.f32.gmra.mxu0 %v1977
        %v2133 = vpop.f32.mrf.mxu0
        %v2134 = vadd.f32 %v2069, %v2133
        %2135 = vmatmul.f32.gmra.mxu0 %v1978
        %v2136 = vpop.f32.mrf.mxu0
        %v2137 = vadd.f32 %v2072, %v2136
        %2138 = vmatmul.f32.gmra.mxu0 %v1979
        %v2139 = vpop.f32.mrf.mxu0
        %v2140 = vadd.f32 %v2075, %v2139
        %2141 = vmatmul.f32.gmra.mxu0 %v1980
        %v2142 = vpop.f32.mrf.mxu0
        %v2143 = vadd.f32 %v2078, %v2142
        %2144 = vmatmul.f32.gmra.mxu0 %v1981
        %v2145 = vpop.f32.mrf.mxu0
        %v2146 = vadd.f32 %v2081, %v2145
        %2147 = vmatmul.f32.gmra.mxu0 %v1982
        %v2148 = vpop.f32.mrf.mxu0
        %v2149 = vadd.f32 %v2084, %v2148
        %2150 = vmatmul.f32.gmra.mxu0 %v1983
        %v2151 = vpop.f32.mrf.mxu0
        %v2152 = vadd.f32 %v2087, %v2151
        %2153 = vmatmul.f32.gmra.mxu0 %v1984
        %v2154 = vpop.f32.mrf.mxu0
        %v2155 = vadd.f32 %v2090, %v2154
        %2156 = vmatmul.f32.gmra.mxu0 %v1985
        %v2157 = vpop.f32.mrf.mxu0
        %v2158 = vadd.f32 %v2093, %v2157
        %2159 = vmatmul.f32.gmra.mxu0 %v1986
        %v2160 = vpop.f32.mrf.mxu0
        %v2161 = vadd.f32 %v2096, %v2160
        %2162 = vmatmul.f32.gmra.mxu0 %v1987
        %v2163 = vpop.f32.mrf.mxu0
        %v2164 = vadd.f32 %v2099, %v2163
        %2165 = vmatmul.f32.gmra.mxu0 %v1988
        %v2166 = vpop.f32.mrf.mxu0
        %v2167 = vadd.f32 %v2102, %v2166
        %2168 = vmatmul.f32.gmra.mxu0 %v1989
        %v2169 = vpop.f32.mrf.mxu0
        %v2170 = vadd.f32 %v2105, %v2169
        %2171 = vmatmul.f32.gmra.mxu0 %v1990
        %v2172 = vpop.f32.mrf.mxu0
        %v2173 = vadd.f32 %v2108, %v2172
        %2174 = vdwg.mxu0
        %2175 = vmatpush.msra.mxu0 %v2039
        %2176 = vmatpush.msra.mxu0 %v2038
        %2177 = vmatpush.msra.mxu0 %v2037
        %2178 = vmatpush.msra.mxu0 %v2036
        %2179 = vmatpush.msra.mxu0 %v2035
        %2180 = vmatpush.msra.mxu0 %v2034
        %2181 = vmatpush.msra.mxu0 %v2033
        %2182 = vmatpush.msra.mxu0 %v2032
        %2183 = vmatpush.msra.mxu0 %v2031
        %2184 = vmatpush.msra.mxu0 %v2030
        %2185 = vmatpush.msra.mxu0 %v2029
        %2186 = vmatpush.msra.mxu0 %v2028
        %2187 = vmatpush.msra.mxu0 %v2027
        %2188 = vmatpush.msra.mxu0 %v2026
        %2189 = vmatpush.msra.mxu0 %v2025
        %2190 = vmatpush.msra.mxu0 %v2024
        %2191 = vmatmul.f32.gmra.mxu0 %v1977
        %v2192 = vpop.f32.mrf.mxu0
        %v2193 = vadd.f32 %v2128, %v2192
        %2194 = vmatmul.f32.gmra.mxu0 %v1978
        %v2195 = vpop.f32.mrf.mxu0
        %v2196 = vadd.f32 %v2131, %v2195
        %2197 = vmatmul.f32.gmra.mxu0 %v1979
        %v2198 = vpop.f32.mrf.mxu0
        %v2199 = vadd.f32 %v2134, %v2198
        %2200 = vmatmul.f32.gmra.mxu0 %v1980
        %v2201 = vpop.f32.mrf.mxu0
        %v2202 = vadd.f32 %v2137, %v2201
        %2203 = vmatmul.f32.gmra.mxu0 %v1981
        %v2204 = vpop.f32.mrf.mxu0
        %v2205 = vadd.f32 %v2140, %v2204
        %2206 = vmatmul.f32.gmra.mxu0 %v1982
        %v2207 = vpop.f32.mrf.mxu0
        %v2208 = vadd.f32 %v2143, %v2207
        %2209 = vmatmul.f32.gmra.mxu0 %v1983
        %v2210 = vpop.f32.mrf.mxu0
        %v2211 = vadd.f32 %v2146, %v2210
        %2212 = vmatmul.f32.gmra.mxu0 %v1984
        %v2213 = vpop.f32.mrf.mxu0
        %v2214 = vadd.f32 %v2149, %v2213
        %2215 = vmatmul.f32.gmra.mxu0 %v1985
        %v2216 = vpop.f32.mrf.mxu0
        %v2217 = vadd.f32 %v2152, %v2216
        %2218 = vmatmul.f32.gmra.mxu0 %v1986
        %v2219 = vpop.f32.mrf.mxu0
        %v2220 = vadd.f32 %v2155, %v2219
        %2221 = vmatmul.f32.gmra.mxu0 %v1987
        %v2222 = vpop.f32.mrf.mxu0
        %v2223 = vadd.f32 %v2158, %v2222
        %2224 = vmatmul.f32.gmra.mxu0 %v1988
        %v2225 = vpop.f32.mrf.mxu0
        %v2226 = vadd.f32 %v2161, %v2225
        %2227 = vmatmul.f32.gmra.mxu0 %v1989
        %v2228 = vpop.f32.mrf.mxu0
        %v2229 = vadd.f32 %v2164, %v2228
        %2230 = vmatmul.f32.gmra.mxu0 %v1990
        %v2231 = vpop.f32.mrf.mxu0
        %v2232 = vadd.f32 %v2167, %v2231
        %2233 = vmatmul.f32.gmra.mxu0 0.0
        %v2234 = vpop.f32.mrf.mxu0
        %v2235 = vadd.f32 %v2170, %v2234
        %2236 = vmatmul.f32.gmra.mxu0 0.0
        %v2237 = vpop.f32.mrf.mxu0
        %v2238 = vadd.f32 %v2173, %v2237
        %2239 = vdwg.mxu0
        %v2240 = vadd.f32 %v2193, %v1734
        %v2241 = vadd.f32 %v2196, %v1737
        %v2242 = vadd.f32 %v2199, %v1740
        %v2243 = vadd.f32 %v2202, %v1743
        %v2244 = vadd.f32 %v2205, %v1746
        %v2245 = vadd.f32 %v2208, %v1749
        %v2246 = vadd.f32 %v2211, %v1752
        %v2247 = vadd.f32 %v2214, %v1755
        %v2248 = vadd.f32 %v2217, %v1758
        %v2249 = vadd.f32 %v2220, %v1761
        %v2250 = vadd.f32 %v2223, %v1764
        %v2251 = vadd.f32 %v2226, %v1767
        %v2252 = vadd.f32 %v2229, %v1770
        %v2253 = vadd.f32 %v2232, %v1773
        %v2254 = vadd.f32 %v2235, %v1776
        %v2255 = vadd.f32 %v2238, %v1779
        %s2256 = scalar_lea.vmem %s10, 2
        %v2257 = vld [vmem:[%s2256] sm:$0x1]
        %vm2258 = vcmp.ge.f32.partialorder %v2240, 0.0
        %vm2259 = vcmp.ge.f32.partialorder %v2241, 0.0
        %vm2260 = vcmp.ge.f32.partialorder %v2242, 0.0
        %vm2261 = vcmp.ge.f32.partialorder %v2243, 0.0
        %vm2262 = vcmp.ge.f32.partialorder %v2244, 0.0
        %vm2263 = vcmp.ge.f32.partialorder %v2245, 0.0
        %vm2264 = vcmp.ge.f32.partialorder %v2246, 0.0
        %vm2265 = vcmp.ge.f32.partialorder %v2247, 0.0
        %vm2266 = vcmp.ge.f32.partialorder %v2248, 0.0
        %vm2267 = vcmp.ge.f32.partialorder %v2249, 0.0
        %vm2268 = vcmp.ge.f32.partialorder %v2250, 0.0
        %vm2269 = vcmp.ge.f32.partialorder %v2251, 0.0
        %vm2270 = vcmp.ge.f32.partialorder %v2252, 0.0
        %vm2271 = vcmp.ge.f32.partialorder %v2253, 0.0
        %vm2272 = vcmp.ge.f32.partialorder %v2254, 0.0
        %vm2273 = vcmp.ge.f32.partialorder %v2255, 0.0
        %v2275 = vperm.slane %v2257, 0
        %v2277 = vmul.f32 %v2275, %v2240
        %v2278 = vmul.f32 %v2275, %v2241
        %v2279 = vmul.f32 %v2275, %v2242
        %v2280 = vmul.f32 %v2275, %v2243
        %v2281 = vmul.f32 %v2275, %v2244
        %v2282 = vmul.f32 %v2275, %v2245
        %v2283 = vmul.f32 %v2275, %v2246
        %v2284 = vmul.f32 %v2275, %v2247
        %v2285 = vmul.f32 %v2275, %v2248
        %v2286 = vmul.f32 %v2275, %v2249
        %v2287 = vmul.f32 %v2275, %v2250
        %v2288 = vmul.f32 %v2275, %v2251
        %v2289 = vmul.f32 %v2275, %v2252
        %v2290 = vmul.f32 %v2275, %v2253
        %v2291 = vmul.f32 %v2275, %v2254
        %v2292 = vmul.f32 %v2275, %v2255
        %v2293 = vsel %vm2258, %v2240, %v2277
        %v2294 = vsel %vm2259, %v2241, %v2278
        %v2295 = vsel %vm2260, %v2242, %v2279
        %v2296 = vsel %vm2261, %v2243, %v2280
        %v2297 = vsel %vm2262, %v2244, %v2281
        %v2298 = vsel %vm2263, %v2245, %v2282
        %v2299 = vsel %vm2264, %v2246, %v2283
        %v2300 = vsel %vm2265, %v2247, %v2284
        %v2301 = vsel %vm2266, %v2248, %v2285
        %v2302 = vsel %vm2267, %v2249, %v2286
        %v2303 = vsel %vm2268, %v2250, %v2287
        %v2304 = vsel %vm2269, %v2251, %v2288
        %v2305 = vsel %vm2270, %v2252, %v2289
        %v2306 = vsel %vm2271, %v2253, %v2290
        %v2307 = vsel %vm2272, %v2254, %v2291
        %v2308 = vsel %vm2273, %v2255, %v2292
        %s2309 = scalar_lea.vmem %s8, 384
        %v2310 = vld [vmem:[%s2309] sm:$0xff]
        %v2311 = vld [vmem:[%s2309 + $0x8] sm:$0xff]
        %v2312 = vld [vmem:[%s2309 + $0x10] sm:$0xff]
        %v2313 = vld [vmem:[%s2309 + $0x18] sm:$0xff]
        %v2314 = vld [vmem:[%s2309 + $0x20] sm:$0xff]
        %v2315 = vld [vmem:[%s2309 + $0x28] sm:$0xff]
        %v2316 = vld [vmem:[%s2309 + $0x30] sm:$0xff]
        %v2317 = vld [vmem:[%s2309 + $0x38] sm:$0xff]
        %v2318 = vld [vmem:[%s2309 + $0x40] sm:$0xff]
        %v2319 = vld [vmem:[%s2309 + $0x48] sm:$0xff]
        %v2320 = vld [vmem:[%s2309 + $0x50] sm:$0xff]
        %v2321 = vld [vmem:[%s2309 + $0x58] sm:$0xff]
        %v2322 = vld [vmem:[%s2309 + $0x60] sm:$0xff]
        %v2323 = vld [vmem:[%s2309 + $0x68] sm:$0xff]
        %v2324 = vld [vmem:[%s2309 + $0x70] sm:$0xff]
        %v2325 = vld [vmem:[%s2309 + $0x78] sm:$0xff]
        %s2326 = scalar_lea.vmem %s9, 3
        %v2327 = vld [vmem:[%s2326] sm:$0x1]
        %v2329 = vperm.slane %v2327, 0
        %2331 = vmatpush.msra.mxu0 %v2325
        %2332 = vmatpush.msra.mxu0 %v2324
        %2333 = vmatpush.msra.mxu0 %v2323
        %2334 = vmatpush.msra.mxu0 %v2322
        %2335 = vmatpush.msra.mxu0 %v2321
        %2336 = vmatpush.msra.mxu0 %v2320
        %2337 = vmatpush.msra.mxu0 %v2319
        %2338 = vmatpush.msra.mxu0 %v2318
        %2339 = vmatpush.msra.mxu0 %v2317
        %2340 = vmatpush.msra.mxu0 %v2316
        %2341 = vmatpush.msra.mxu0 %v2315
        %2342 = vmatpush.msra.mxu0 %v2314
        %2343 = vmatpush.msra.mxu0 %v2313
        %2344 = vmatpush.msra.mxu0 %v2312
        %2345 = vmatpush.msra.mxu0 %v2311
        %2346 = vmatpush.msra.mxu0 %v2310
        %2347 = vmatmul.f32.gmra.mxu0 %v2293
        %v2348 = vpop.f32.mrf.mxu0
        %v2349 = vadd.f32 %v2329, %v2348
        %2350 = vmatmul.f32.gmra.mxu0 %v2294
        %v2351 = vpop.f32.mrf.mxu0
        %v2352 = vadd.f32 %v2329, %v2351
        %2353 = vmatmul.f32.gmra.mxu0 %v2295
        %v2354 = vpop.f32.mrf.mxu0
        %v2355 = vadd.f32 %v2329, %v2354
        %2356 = vmatmul.f32.gmra.mxu0 %v2296
        %v2357 = vpop.f32.mrf.mxu0
        %v2358 = vadd.f32 %v2329, %v2357
        %2359 = vmatmul.f32.gmra.mxu0 %v2297
        %v2360 = vpop.f32.mrf.mxu0
        %v2361 = vadd.f32 %v2329, %v2360
        %2362 = vmatmul.f32.gmra.mxu0 %v2298
        %v2363 = vpop.f32.mrf.mxu0
        %v2364 = vadd.f32 %v2329, %v2363
        %2365 = vmatmul.f32.gmra.mxu0 %v2299
        %v2366 = vpop.f32.mrf.mxu0
        %v2367 = vadd.f32 %v2329, %v2366
        %2368 = vmatmul.f32.gmra.mxu0 %v2300
        %v2369 = vpop.f32.mrf.mxu0
        %v2370 = vadd.f32 %v2329, %v2369
        %2371 = vmatmul.f32.gmra.mxu0 %v2301
        %v2372 = vpop.f32.mrf.mxu0
        %v2373 = vadd.f32 %v2329, %v2372
        %2374 = vmatmul.f32.gmra.mxu0 %v2302
        %v2375 = vpop.f32.mrf.mxu0
        %v2376 = vadd.f32 %v2329, %v2375
        %2377 = vmatmul.f32.gmra.mxu0 %v2303
        %v2378 = vpop.f32.mrf.mxu0
        %v2379 = vadd.f32 %v2329, %v2378
        %2380 = vmatmul.f32.gmra.mxu0 %v2304
        %v2381 = vpop.f32.mrf.mxu0
        %v2382 = vadd.f32 %v2329, %v2381
        %2383 = vmatmul.f32.gmra.mxu0 %v2305
        %v2384 = vpop.f32.mrf.mxu0
        %v2385 = vadd.f32 %v2329, %v2384
        %2386 = vmatmul.f32.gmra.mxu0 %v2306
        %v2387 = vpop.f32.mrf.mxu0
        %v2388 = vadd.f32 %v2329, %v2387
        %2389 = vmatmul.f32.gmra.mxu0 %v2307
        %v2390 = vpop.f32.mrf.mxu0
        %v2391 = vadd.f32 %v2329, %v2390
        %2392 = vmatmul.f32.gmra.mxu0 %v2308
        %v2393 = vpop.f32.mrf.mxu0
        %v2394 = vadd.f32 %v2329, %v2393
        %2395 = vdwg.mxu0
        %s2396 = scalar_lea.vmem %s2, 384
        %v2397 = vld [vmem:[%s2396] sm:$0xff]
        %v2398 = vld [vmem:[%s2396 + $0x8] sm:$0xff]
        %v2399 = vld [vmem:[%s2396 + $0x10] sm:$0xff]
        %v2400 = vld [vmem:[%s2396 + $0x18] sm:$0xff]
        %v2401 = vld [vmem:[%s2396 + $0x20] sm:$0xff]
        %v2402 = vld [vmem:[%s2396 + $0x28] sm:$0xff]
        %v2403 = vld [vmem:[%s2396 + $0x30] sm:$0xff]
        %v2404 = vld [vmem:[%s2396 + $0x38] sm:$0xff]
        %v2405 = vld [vmem:[%s2396 + $0x40] sm:$0xff]
        %v2406 = vld [vmem:[%s2396 + $0x48] sm:$0xff]
        %v2407 = vld [vmem:[%s2396 + $0x50] sm:$0xff]
        %v2408 = vld [vmem:[%s2396 + $0x58] sm:$0xff]
        %v2409 = vld [vmem:[%s2396 + $0x60] sm:$0xff]
        %v2410 = vld [vmem:[%s2396 + $0x68] sm:$0xff]
        %v2411 = vld [vmem:[%s2396 + $0x70] sm:$0xff]
        %v2412 = vld [vmem:[%s2396 + $0x78] sm:$0xff]
        %s2413 = scalar_lea.vmem %s3, 3
        %v2414 = vld [vmem:[%s2413] sm:$0x1]
        %v2416 = vperm.slane %v2414, 0
        %2418 = vmatpush.msra.mxu0 %v2412
        %2419 = vmatpush.msra.mxu0 %v2411
        %2420 = vmatpush.msra.mxu0 %v2410
        %2421 = vmatpush.msra.mxu0 %v2409
        %2422 = vmatpush.msra.mxu0 %v2408
        %2423 = vmatpush.msra.mxu0 %v2407
        %2424 = vmatpush.msra.mxu0 %v2406
        %2425 = vmatpush.msra.mxu0 %v2405
        %2426 = vmatpush.msra.mxu0 %v2404
        %2427 = vmatpush.msra.mxu0 %v2403
        %2428 = vmatpush.msra.mxu0 %v2402
        %2429 = vmatpush.msra.mxu0 %v2401
        %2430 = vmatpush.msra.mxu0 %v2400
        %2431 = vmatpush.msra.mxu0 %v2399
        %2432 = vmatpush.msra.mxu0 %v2398
        %2433 = vmatpush.msra.mxu0 %v2397
        %2434 = vmatmul.f32.gmra.mxu0 %v2293
        %v2435 = vpop.f32.mrf.mxu0
        %v2436 = vadd.f32 %v2416, %v2435
        %2437 = vmatmul.f32.gmra.mxu0 %v2294
        %v2438 = vpop.f32.mrf.mxu0
        %v2439 = vadd.f32 %v2416, %v2438
        %2440 = vmatmul.f32.gmra.mxu0 %v2295
        %v2441 = vpop.f32.mrf.mxu0
        %v2442 = vadd.f32 %v2416, %v2441
        %2443 = vmatmul.f32.gmra.mxu0 %v2296
        %v2444 = vpop.f32.mrf.mxu0
        %v2445 = vadd.f32 %v2416, %v2444
        %2446 = vmatmul.f32.gmra.mxu0 %v2297
        %v2447 = vpop.f32.mrf.mxu0
        %v2448 = vadd.f32 %v2416, %v2447
        %2449 = vmatmul.f32.gmra.mxu0 %v2298
        %v2450 = vpop.f32.mrf.mxu0
        %v2451 = vadd.f32 %v2416, %v2450
        %2452 = vmatmul.f32.gmra.mxu0 %v2299
        %v2453 = vpop.f32.mrf.mxu0
        %v2454 = vadd.f32 %v2416, %v2453
        %2455 = vmatmul.f32.gmra.mxu0 %v2300
        %v2456 = vpop.f32.mrf.mxu0
        %v2457 = vadd.f32 %v2416, %v2456
        %2458 = vmatmul.f32.gmra.mxu0 %v2301
        %v2459 = vpop.f32.mrf.mxu0
        %v2460 = vadd.f32 %v2416, %v2459
        %2461 = vmatmul.f32.gmra.mxu0 %v2302
        %v2462 = vpop.f32.mrf.mxu0
        %v2463 = vadd.f32 %v2416, %v2462
        %2464 = vmatmul.f32.gmra.mxu0 %v2303
        %v2465 = vpop.f32.mrf.mxu0
        %v2466 = vadd.f32 %v2416, %v2465
        %2467 = vmatmul.f32.gmra.mxu0 %v2304
        %v2468 = vpop.f32.mrf.mxu0
        %v2469 = vadd.f32 %v2416, %v2468
        %2470 = vmatmul.f32.gmra.mxu0 %v2305
        %v2471 = vpop.f32.mrf.mxu0
        %v2472 = vadd.f32 %v2416, %v2471
        %2473 = vmatmul.f32.gmra.mxu0 %v2306
        %v2474 = vpop.f32.mrf.mxu0
        %v2475 = vadd.f32 %v2416, %v2474
        %2476 = vmatmul.f32.gmra.mxu0 %v2307
        %v2477 = vpop.f32.mrf.mxu0
        %v2478 = vadd.f32 %v2416, %v2477
        %2479 = vmatmul.f32.gmra.mxu0 %v2308
        %v2480 = vpop.f32.mrf.mxu0
        %v2481 = vadd.f32 %v2416, %v2480
        %2482 = vdwg.mxu0
        %s2483 = scalar_lea.vmem %s4, 3
        %v2484 = vld [vmem:[%s2483] sm:$0x1]
        %v2486 = vperm.slane %v2484, 0
        %2488 = vmatpush.msra.mxu0 %v2481
        %2489 = vmatpush.msra.mxu0 %v2478
        %2490 = vmatpush.msra.mxu0 %v2475
        %2491 = vmatpush.msra.mxu0 %v2472
        %2492 = vmatpush.msra.mxu0 %v2469
        %2493 = vmatpush.msra.mxu0 %v2466
        %2494 = vmatpush.msra.mxu0 %v2463
        %2495 = vmatpush.msra.mxu0 %v2460
        %2496 = vmatpush.msra.mxu0 %v2457
        %2497 = vmatpush.msra.mxu0 %v2454
        %2498 = vmatpush.msra.mxu0 %v2451
        %2499 = vmatpush.msra.mxu0 %v2448
        %2500 = vmatpush.msra.mxu0 %v2445
        %2501 = vmatpush.msra.mxu0 %v2442
        %2502 = vmatpush.msra.mxu0 %v2439
        %2503 = vmatpush.msra.mxu0 %v2436
        %2504 = vmatmul.f32.gmra.mxu0 %v441
        %v2505 = vpop.f32.mrf.mxu0
        %v2506 = vadd.f32 %v2486, %v2505
        %2507 = vmatmul.f32.gmra.mxu0 %v442
        %v2508 = vpop.f32.mrf.mxu0
        %v2509 = vadd.f32 %v2486, %v2508
        %2510 = vmatmul.f32.gmra.mxu0 %v443
        %v2511 = vpop.f32.mrf.mxu0
        %v2512 = vadd.f32 %v2486, %v2511
        %2513 = vmatmul.f32.gmra.mxu0 %v444
        %v2514 = vpop.f32.mrf.mxu0
        %v2515 = vadd.f32 %v2486, %v2514
        %2516 = vmatmul.f32.gmra.mxu0 %v445
        %v2517 = vpop.f32.mrf.mxu0
        %v2518 = vadd.f32 %v2486, %v2517
        %2519 = vmatmul.f32.gmra.mxu0 %v446
        %v2520 = vpop.f32.mrf.mxu0
        %v2521 = vadd.f32 %v2486, %v2520
        %2522 = vmatmul.f32.gmra.mxu0 %v447
        %v2523 = vpop.f32.mrf.mxu0
        %v2524 = vadd.f32 %v2486, %v2523
        %2525 = vmatmul.f32.gmra.mxu0 %v448
        %v2526 = vpop.f32.mrf.mxu0
        %v2527 = vadd.f32 %v2486, %v2526
        %2528 = vmatmul.f32.gmra.mxu0 %v449
        %v2529 = vpop.f32.mrf.mxu0
        %v2530 = vadd.f32 %v2486, %v2529
        %2531 = vmatmul.f32.gmra.mxu0 %v450
        %v2532 = vpop.f32.mrf.mxu0
        %v2533 = vadd.f32 %v2486, %v2532
        %2534 = vmatmul.f32.gmra.mxu0 %v451
        %v2535 = vpop.f32.mrf.mxu0
        %v2536 = vadd.f32 %v2486, %v2535
        %2537 = vmatmul.f32.gmra.mxu0 %v452
        %v2538 = vpop.f32.mrf.mxu0
        %v2539 = vadd.f32 %v2486, %v2538
        %2540 = vmatmul.f32.gmra.mxu0 %v453
        %v2541 = vpop.f32.mrf.mxu0
        %v2542 = vadd.f32 %v2486, %v2541
        %2543 = vmatmul.f32.gmra.mxu0 %v454
        %v2544 = vpop.f32.mrf.mxu0
        %v2545 = vadd.f32 %v2486, %v2544
        %2546 = vmatmul.f32.gmra.mxu0 %v455
        %v2547 = vpop.f32.mrf.mxu0
        %v2548 = vadd.f32 %v2486, %v2547
        %2549 = vmatmul.f32.gmra.mxu0 %v456
        %v2550 = vpop.f32.mrf.mxu0
        %v2551 = vadd.f32 %v2486, %v2550
        %2552 = vdwg.mxu0
        %s2553 = scalar_lea.vmem %s5, 3
        %v2554 = vld [vmem:[%s2553] sm:$0x1]
        %vm2555 = vcmp.ge.f32.partialorder %v2506, 0.0
        %vm2556 = vcmp.ge.f32.partialorder %v2509, 0.0
        %vm2557 = vcmp.ge.f32.partialorder %v2512, 0.0
        %vm2558 = vcmp.ge.f32.partialorder %v2515, 0.0
        %vm2559 = vcmp.ge.f32.partialorder %v2518, 0.0
        %vm2560 = vcmp.ge.f32.partialorder %v2521, 0.0
        %vm2561 = vcmp.ge.f32.partialorder %v2524, 0.0
        %vm2562 = vcmp.ge.f32.partialorder %v2527, 0.0
        %vm2563 = vcmp.ge.f32.partialorder %v2530, 0.0
        %vm2564 = vcmp.ge.f32.partialorder %v2533, 0.0
        %vm2565 = vcmp.ge.f32.partialorder %v2536, 0.0
        %vm2566 = vcmp.ge.f32.partialorder %v2539, 0.0
        %vm2567 = vcmp.ge.f32.partialorder %v2542, 0.0
        %vm2568 = vcmp.ge.f32.partialorder %v2545, 0.0
        %vm2569 = vcmp.ge.f32.partialorder %v2548, 0.0
        %vm2570 = vcmp.ge.f32.partialorder %v2551, 0.0
        %v2572 = vperm.slane %v2554, 0
        %v2574 = vmul.f32 %v2572, %v2506
        %v2575 = vmul.f32 %v2572, %v2509
        %v2576 = vmul.f32 %v2572, %v2512
        %v2577 = vmul.f32 %v2572, %v2515
        %v2578 = vmul.f32 %v2572, %v2518
        %v2579 = vmul.f32 %v2572, %v2521
        %v2580 = vmul.f32 %v2572, %v2524
        %v2581 = vmul.f32 %v2572, %v2527
        %v2582 = vmul.f32 %v2572, %v2530
        %v2583 = vmul.f32 %v2572, %v2533
        %v2584 = vmul.f32 %v2572, %v2536
        %v2585 = vmul.f32 %v2572, %v2539
        %v2586 = vmul.f32 %v2572, %v2542
        %v2587 = vmul.f32 %v2572, %v2545
        %v2588 = vmul.f32 %v2572, %v2548
        %v2589 = vmul.f32 %v2572, %v2551
        %v2590 = vsel %vm2555, %v2506, %v2574
        %v2591 = vsel %vm2556, %v2509, %v2575
        %v2592 = vsel %vm2557, %v2512, %v2576
        %v2593 = vsel %vm2558, %v2515, %v2577
        %v2594 = vsel %vm2559, %v2518, %v2578
        %v2595 = vsel %vm2560, %v2521, %v2579
        %v2596 = vsel %vm2561, %v2524, %v2580
        %v2597 = vsel %vm2562, %v2527, %v2581
        %v2598 = vsel %vm2563, %v2530, %v2582
        %v2599 = vsel %vm2564, %v2533, %v2583
        %v2600 = vsel %vm2565, %v2536, %v2584
        %v2601 = vsel %vm2566, %v2539, %v2585
        %v2602 = vsel %vm2567, %v2542, %v2586
        %v2603 = vsel %vm2568, %v2545, %v2587
        %v2604 = vsel %vm2569, %v2548, %v2588
        %v2605 = vsel %vm2570, %v2551, %v2589
        %s2606 = scalar_lea.vmem %s6, 1152
        %v2607 = vld [vmem:[%s2606] sm:$0xff]
        %v2608 = vld [vmem:[%s2606 + $0x8] sm:$0xff]
        %v2609 = vld [vmem:[%s2606 + $0x10] sm:$0xff]
        %v2610 = vld [vmem:[%s2606 + $0x18] sm:$0xff]
        %v2611 = vld [vmem:[%s2606 + $0x20] sm:$0xff]
        %v2612 = vld [vmem:[%s2606 + $0x28] sm:$0xff]
        %v2613 = vld [vmem:[%s2606 + $0x30] sm:$0xff]
        %v2614 = vld [vmem:[%s2606 + $0x38] sm:$0xff]
        %v2615 = vld [vmem:[%s2606 + $0x40] sm:$0xff]
        %v2616 = vld [vmem:[%s2606 + $0x48] sm:$0xff]
        %v2617 = vld [vmem:[%s2606 + $0x50] sm:$0xff]
        %v2618 = vld [vmem:[%s2606 + $0x58] sm:$0xff]
        %v2619 = vld [vmem:[%s2606 + $0x60] sm:$0xff]
        %v2620 = vld [vmem:[%s2606 + $0x68] sm:$0xff]
        %v2621 = vld [vmem:[%s2606 + $0x70] sm:$0xff]
        %v2622 = vld [vmem:[%s2606 + $0x78] sm:$0xff]
        %v2623 = vld [vmem:[%s2606 + $0x80] sm:$0xff]
        %v2624 = vld [vmem:[%s2606 + $0x88] sm:$0xff]
        %v2625 = vld [vmem:[%s2606 + $0x90] sm:$0xff]
        %v2626 = vld [vmem:[%s2606 + $0x98] sm:$0xff]
        %v2627 = vld [vmem:[%s2606 + $0xa0] sm:$0xff]
        %v2628 = vld [vmem:[%s2606 + $0xa8] sm:$0xff]
        %v2629 = vld [vmem:[%s2606 + $0xb0] sm:$0xff]
        %v2630 = vld [vmem:[%s2606 + $0xb8] sm:$0xff]
        %v2631 = vld [vmem:[%s2606 + $0xc0] sm:$0xff]
        %v2632 = vld [vmem:[%s2606 + $0xc8] sm:$0xff]
        %v2633 = vld [vmem:[%s2606 + $0xd0] sm:$0xff]
        %v2634 = vld [vmem:[%s2606 + $0xd8] sm:$0xff]
        %v2635 = vld [vmem:[%s2606 + $0xe0] sm:$0xff]
        %v2636 = vld [vmem:[%s2606 + $0xe8] sm:$0xff]
        %v2637 = vld [vmem:[%s2606 + $0xf0] sm:$0xff]
        %v2638 = vld [vmem:[%s2606 + $0xf8] sm:$0xff]
        %v2639 = vld [vmem:[%s2606 + $0x100] sm:$0xff]
        %v2640 = vld [vmem:[%s2606 + $0x108] sm:$0xff]
        %v2641 = vld [vmem:[%s2606 + $0x110] sm:$0xff]
        %v2642 = vld [vmem:[%s2606 + $0x118] sm:$0xff]
        %v2643 = vld [vmem:[%s2606 + $0x120] sm:$0xff]
        %v2644 = vld [vmem:[%s2606 + $0x128] sm:$0xff]
        %v2645 = vld [vmem:[%s2606 + $0x130] sm:$0xff]
        %v2646 = vld [vmem:[%s2606 + $0x138] sm:$0xff]
        %v2647 = vld [vmem:[%s2606 + $0x140] sm:$0xff]
        %v2648 = vld [vmem:[%s2606 + $0x148] sm:$0xff]
        %v2649 = vld [vmem:[%s2606 + $0x150] sm:$0xff]
        %v2650 = vld [vmem:[%s2606 + $0x158] sm:$0xff]
        %v2651 = vld [vmem:[%s2606 + $0x160] sm:$0xff]
        %v2652 = vld [vmem:[%s2606 + $0x168] sm:$0xff]
        %v2653 = vld [vmem:[%s2606 + $0x170] sm:$0xff]
        %v2654 = vld [vmem:[%s2606 + $0x178] sm:$0xff]
        %s2655 = scalar_lea.vmem %s7, 3
        %v2656 = vld [vmem:[%s2655] sm:$0x1]
        %v2658 = vperm.slane %v2656, 0
        %2660 = vmatpush.msra.mxu0 %v2622
        %2661 = vmatpush.msra.mxu0 %v2621
        %2662 = vmatpush.msra.mxu0 %v2620
        %2663 = vmatpush.msra.mxu0 %v2619
        %2664 = vmatpush.msra.mxu0 %v2618
        %2665 = vmatpush.msra.mxu0 %v2617
        %2666 = vmatpush.msra.mxu0 %v2616
        %2667 = vmatpush.msra.mxu0 %v2615
        %2668 = vmatpush.msra.mxu0 %v2614
        %2669 = vmatpush.msra.mxu0 %v2613
        %2670 = vmatpush.msra.mxu0 %v2612
        %2671 = vmatpush.msra.mxu0 %v2611
        %2672 = vmatpush.msra.mxu0 %v2610
        %2673 = vmatpush.msra.mxu0 %v2609
        %2674 = vmatpush.msra.mxu0 %v2608
        %2675 = vmatpush.msra.mxu0 %v2607
        %2676 = vmatmul.f32.gmra.mxu0 0.0
        %v2677 = vpop.f32.mrf.mxu0
        %v2678 = vadd.f32 %v2658, %v2677
        %2679 = vmatmul.f32.gmra.mxu0 0.0
        %v2680 = vpop.f32.mrf.mxu0
        %v2681 = vadd.f32 %v2658, %v2680
        %2682 = vmatmul.f32.gmra.mxu0 %v2590
        %v2683 = vpop.f32.mrf.mxu0
        %v2684 = vadd.f32 %v2658, %v2683
        %2685 = vmatmul.f32.gmra.mxu0 %v2591
        %v2686 = vpop.f32.mrf.mxu0
        %v2687 = vadd.f32 %v2658, %v2686
        %2688 = vmatmul.f32.gmra.mxu0 %v2592
        %v2689 = vpop.f32.mrf.mxu0
        %v2690 = vadd.f32 %v2658, %v2689
        %2691 = vmatmul.f32.gmra.mxu0 %v2593
        %v2692 = vpop.f32.mrf.mxu0
        %v2693 = vadd.f32 %v2658, %v2692
        %2694 = vmatmul.f32.gmra.mxu0 %v2594
        %v2695 = vpop.f32.mrf.mxu0
        %v2696 = vadd.f32 %v2658, %v2695
        %2697 = vmatmul.f32.gmra.mxu0 %v2595
        %v2698 = vpop.f32.mrf.mxu0
        %v2699 = vadd.f32 %v2658, %v2698
        %2700 = vmatmul.f32.gmra.mxu0 %v2596
        %v2701 = vpop.f32.mrf.mxu0
        %v2702 = vadd.f32 %v2658, %v2701
        %2703 = vmatmul.f32.gmra.mxu0 %v2597
        %v2704 = vpop.f32.mrf.mxu0
        %v2705 = vadd.f32 %v2658, %v2704
        %2706 = vmatmul.f32.gmra.mxu0 %v2598
        %v2707 = vpop.f32.mrf.mxu0
        %v2708 = vadd.f32 %v2658, %v2707
        %2709 = vmatmul.f32.gmra.mxu0 %v2599
        %v2710 = vpop.f32.mrf.mxu0
        %v2711 = vadd.f32 %v2658, %v2710
        %2712 = vmatmul.f32.gmra.mxu0 %v2600
        %v2713 = vpop.f32.mrf.mxu0
        %v2714 = vadd.f32 %v2658, %v2713
        %2715 = vmatmul.f32.gmra.mxu0 %v2601
        %v2716 = vpop.f32.mrf.mxu0
        %v2717 = vadd.f32 %v2658, %v2716
        %2718 = vmatmul.f32.gmra.mxu0 %v2602
        %v2719 = vpop.f32.mrf.mxu0
        %v2720 = vadd.f32 %v2658, %v2719
        %2721 = vmatmul.f32.gmra.mxu0 %v2603
        %v2722 = vpop.f32.mrf.mxu0
        %v2723 = vadd.f32 %v2658, %v2722
        %2724 = vdwg.mxu0
        %2725 = vmatpush.msra.mxu0 %v2638
        %2726 = vmatpush.msra.mxu0 %v2637
        %2727 = vmatpush.msra.mxu0 %v2636
        %2728 = vmatpush.msra.mxu0 %v2635
        %2729 = vmatpush.msra.mxu0 %v2634
        %2730 = vmatpush.msra.mxu0 %v2633
        %2731 = vmatpush.msra.mxu0 %v2632
        %2732 = vmatpush.msra.mxu0 %v2631
        %2733 = vmatpush.msra.mxu0 %v2630
        %2734 = vmatpush.msra.mxu0 %v2629
        %2735 = vmatpush.msra.mxu0 %v2628
        %2736 = vmatpush.msra.mxu0 %v2627
        %2737 = vmatpush.msra.mxu0 %v2626
        %2738 = vmatpush.msra.mxu0 %v2625
        %2739 = vmatpush.msra.mxu0 %v2624
        %2740 = vmatpush.msra.mxu0 %v2623
        %2741 = vmatmul.f32.gmra.mxu0 %v2590
        %v2742 = vpop.f32.mrf.mxu0
        %v2743 = vadd.f32 %v2678, %v2742
        %2744 = vmatmul.f32.gmra.mxu0 %v2591
        %v2745 = vpop.f32.mrf.mxu0
        %v2746 = vadd.f32 %v2681, %v2745
        %2747 = vmatmul.f32.gmra.mxu0 %v2592
        %v2748 = vpop.f32.mrf.mxu0
        %v2749 = vadd.f32 %v2684, %v2748
        %2750 = vmatmul.f32.gmra.mxu0 %v2593
        %v2751 = vpop.f32.mrf.mxu0
        %v2752 = vadd.f32 %v2687, %v2751
        %2753 = vmatmul.f32.gmra.mxu0 %v2594
        %v2754 = vpop.f32.mrf.mxu0
        %v2755 = vadd.f32 %v2690, %v2754
        %2756 = vmatmul.f32.gmra.mxu0 %v2595
        %v2757 = vpop.f32.mrf.mxu0
        %v2758 = vadd.f32 %v2693, %v2757
        %2759 = vmatmul.f32.gmra.mxu0 %v2596
        %v2760 = vpop.f32.mrf.mxu0
        %v2761 = vadd.f32 %v2696, %v2760
        %2762 = vmatmul.f32.gmra.mxu0 %v2597
        %v2763 = vpop.f32.mrf.mxu0
        %v2764 = vadd.f32 %v2699, %v2763
        %2765 = vmatmul.f32.gmra.mxu0 %v2598
        %v2766 = vpop.f32.mrf.mxu0
        %v2767 = vadd.f32 %v2702, %v2766
        %2768 = vmatmul.f32.gmra.mxu0 %v2599
        %v2769 = vpop.f32.mrf.mxu0
        %v2770 = vadd.f32 %v2705, %v2769
        %2771 = vmatmul.f32.gmra.mxu0 %v2600
        %v2772 = vpop.f32.mrf.mxu0
        %v2773 = vadd.f32 %v2708, %v2772
        %2774 = vmatmul.f32.gmra.mxu0 %v2601
        %v2775 = vpop.f32.mrf.mxu0
        %v2776 = vadd.f32 %v2711, %v2775
        %2777 = vmatmul.f32.gmra.mxu0 %v2602
        %v2778 = vpop.f32.mrf.mxu0
        %v2779 = vadd.f32 %v2714, %v2778
        %2780 = vmatmul.f32.gmra.mxu0 %v2603
        %v2781 = vpop.f32.mrf.mxu0
        %v2782 = vadd.f32 %v2717, %v2781
        %2783 = vmatmul.f32.gmra.mxu0 %v2604
        %v2784 = vpop.f32.mrf.mxu0
        %v2785 = vadd.f32 %v2720, %v2784
        %2786 = vmatmul.f32.gmra.mxu0 %v2605
        %v2787 = vpop.f32.mrf.mxu0
        %v2788 = vadd.f32 %v2723, %v2787
        %2789 = vdwg.mxu0
        %2790 = vmatpush.msra.mxu0 %v2654
        %2791 = vmatpush.msra.mxu0 %v2653
        %2792 = vmatpush.msra.mxu0 %v2652
        %2793 = vmatpush.msra.mxu0 %v2651
        %2794 = vmatpush.msra.mxu0 %v2650
        %2795 = vmatpush.msra.mxu0 %v2649
        %2796 = vmatpush.msra.mxu0 %v2648
        %2797 = vmatpush.msra.mxu0 %v2647
        %2798 = vmatpush.msra.mxu0 %v2646
        %2799 = vmatpush.msra.mxu0 %v2645
        %2800 = vmatpush.msra.mxu0 %v2644
        %2801 = vmatpush.msra.mxu0 %v2643
        %2802 = vmatpush.msra.mxu0 %v2642
        %2803 = vmatpush.msra.mxu0 %v2641
        %2804 = vmatpush.msra.mxu0 %v2640
        %2805 = vmatpush.msra.mxu0 %v2639
        %2806 = vmatmul.f32.gmra.mxu0 %v2592
        %v2807 = vpop.f32.mrf.mxu0
        %v2808 = vadd.f32 %v2743, %v2807
        %2809 = vmatmul.f32.gmra.mxu0 %v2593
        %v2810 = vpop.f32.mrf.mxu0
        %v2811 = vadd.f32 %v2746, %v2810
        %2812 = vmatmul.f32.gmra.mxu0 %v2594
        %v2813 = vpop.f32.mrf.mxu0
        %v2814 = vadd.f32 %v2749, %v2813
        %2815 = vmatmul.f32.gmra.mxu0 %v2595
        %v2816 = vpop.f32.mrf.mxu0
        %v2817 = vadd.f32 %v2752, %v2816
        %2818 = vmatmul.f32.gmra.mxu0 %v2596
        %v2819 = vpop.f32.mrf.mxu0
        %v2820 = vadd.f32 %v2755, %v2819
        %2821 = vmatmul.f32.gmra.mxu0 %v2597
        %v2822 = vpop.f32.mrf.mxu0
        %v2823 = vadd.f32 %v2758, %v2822
        %2824 = vmatmul.f32.gmra.mxu0 %v2598
        %v2825 = vpop.f32.mrf.mxu0
        %v2826 = vadd.f32 %v2761, %v2825
        %2827 = vmatmul.f32.gmra.mxu0 %v2599
        %v2828 = vpop.f32.mrf.mxu0
        %v2829 = vadd.f32 %v2764, %v2828
        %2830 = vmatmul.f32.gmra.mxu0 %v2600
        %v2831 = vpop.f32.mrf.mxu0
        %v2832 = vadd.f32 %v2767, %v2831
        %2833 = vmatmul.f32.gmra.mxu0 %v2601
        %v2834 = vpop.f32.mrf.mxu0
        %v2835 = vadd.f32 %v2770, %v2834
        %2836 = vmatmul.f32.gmra.mxu0 %v2602
        %v2837 = vpop.f32.mrf.mxu0
        %v2838 = vadd.f32 %v2773, %v2837
        %2839 = vmatmul.f32.gmra.mxu0 %v2603
        %v2840 = vpop.f32.mrf.mxu0
        %v2841 = vadd.f32 %v2776, %v2840
        %2842 = vmatmul.f32.gmra.mxu0 %v2604
        %v2843 = vpop.f32.mrf.mxu0
        %v2844 = vadd.f32 %v2779, %v2843
        %2845 = vmatmul.f32.gmra.mxu0 %v2605
        %v2846 = vpop.f32.mrf.mxu0
        %v2847 = vadd.f32 %v2782, %v2846
        %2848 = vmatmul.f32.gmra.mxu0 0.0
        %v2849 = vpop.f32.mrf.mxu0
        %v2850 = vadd.f32 %v2785, %v2849
        %2851 = vmatmul.f32.gmra.mxu0 0.0
        %v2852 = vpop.f32.mrf.mxu0
        %v2853 = vadd.f32 %v2788, %v2852
        %2854 = vdwg.mxu0
        %v2855 = vadd.f32 %v2808, %v2349
        %v2856 = vadd.f32 %v2811, %v2352
        %v2857 = vadd.f32 %v2814, %v2355
        %v2858 = vadd.f32 %v2817, %v2358
        %v2859 = vadd.f32 %v2820, %v2361
        %v2860 = vadd.f32 %v2823, %v2364
        %v2861 = vadd.f32 %v2826, %v2367
        %v2862 = vadd.f32 %v2829, %v2370
        %v2863 = vadd.f32 %v2832, %v2373
        %v2864 = vadd.f32 %v2835, %v2376
        %v2865 = vadd.f32 %v2838, %v2379
        %v2866 = vadd.f32 %v2841, %v2382
        %v2867 = vadd.f32 %v2844, %v2385
        %v2868 = vadd.f32 %v2847, %v2388
        %v2869 = vadd.f32 %v2850, %v2391
        %v2870 = vadd.f32 %v2853, %v2394
        %s2871 = scalar_lea.vmem %s10, 3
        %v2872 = vld [vmem:[%s2871] sm:$0x1]
        %vm2873 = vcmp.ge.f32.partialorder %v2855, 0.0
        %vm2874 = vcmp.ge.f32.partialorder %v2856, 0.0
        %vm2875 = vcmp.ge.f32.partialorder %v2857, 0.0
        %vm2876 = vcmp.ge.f32.partialorder %v2858, 0.0
        %vm2877 = vcmp.ge.f32.partialorder %v2859, 0.0
        %vm2878 = vcmp.ge.f32.partialorder %v2860, 0.0
        %vm2879 = vcmp.ge.f32.partialorder %v2861, 0.0
        %vm2880 = vcmp.ge.f32.partialorder %v2862, 0.0
        %vm2881 = vcmp.ge.f32.partialorder %v2863, 0.0
        %vm2882 = vcmp.ge.f32.partialorder %v2864, 0.0
        %vm2883 = vcmp.ge.f32.partialorder %v2865, 0.0
        %vm2884 = vcmp.ge.f32.partialorder %v2866, 0.0
        %vm2885 = vcmp.ge.f32.partialorder %v2867, 0.0
        %vm2886 = vcmp.ge.f32.partialorder %v2868, 0.0
        %vm2887 = vcmp.ge.f32.partialorder %v2869, 0.0
        %vm2888 = vcmp.ge.f32.partialorder %v2870, 0.0
        %v2890 = vperm.slane %v2872, 0
        %v2892 = vmul.f32 %v2890, %v2855
        %v2893 = vmul.f32 %v2890, %v2856
        %v2894 = vmul.f32 %v2890, %v2857
        %v2895 = vmul.f32 %v2890, %v2858
        %v2896 = vmul.f32 %v2890, %v2859
        %v2897 = vmul.f32 %v2890, %v2860
        %v2898 = vmul.f32 %v2890, %v2861
        %v2899 = vmul.f32 %v2890, %v2862
        %v2900 = vmul.f32 %v2890, %v2863
        %v2901 = vmul.f32 %v2890, %v2864
        %v2902 = vmul.f32 %v2890, %v2865
        %v2903 = vmul.f32 %v2890, %v2866
        %v2904 = vmul.f32 %v2890, %v2867
        %v2905 = vmul.f32 %v2890, %v2868
        %v2906 = vmul.f32 %v2890, %v2869
        %v2907 = vmul.f32 %v2890, %v2870
        %v2908 = vsel %vm2873, %v2855, %v2892
        %v2909 = vsel %vm2874, %v2856, %v2893
        %v2910 = vsel %vm2875, %v2857, %v2894
        %v2911 = vsel %vm2876, %v2858, %v2895
        %v2912 = vsel %vm2877, %v2859, %v2896
        %v2913 = vsel %vm2878, %v2860, %v2897
        %v2914 = vsel %vm2879, %v2861, %v2898
        %v2915 = vsel %vm2880, %v2862, %v2899
        %v2916 = vsel %vm2881, %v2863, %v2900
        %v2917 = vsel %vm2882, %v2864, %v2901
        %v2918 = vsel %vm2883, %v2865, %v2902
        %v2919 = vsel %vm2884, %v2866, %v2903
        %v2920 = vsel %vm2885, %v2867, %v2904
        %v2921 = vsel %vm2886, %v2868, %v2905
        %v2922 = vsel %vm2887, %v2869, %v2906
        %v2923 = vsel %vm2888, %v2870, %v2907
        %2924 = vst [vmem:[%s424] sm:$0xff] %v2908
        %2925 = vst [vmem:[%s424 + $0x8] sm:$0xff] %v2909
        %2926 = vst [vmem:[%s424 + $0x10] sm:$0xff] %v2910
        %2927 = vst [vmem:[%s424 + $0x18] sm:$0xff] %v2911
        %2928 = vst [vmem:[%s424 + $0x20] sm:$0xff] %v2912
        %2929 = vst [vmem:[%s424 + $0x28] sm:$0xff] %v2913
        %2930 = vst [vmem:[%s424 + $0x30] sm:$0xff] %v2914
        %2931 = vst [vmem:[%s424 + $0x38] sm:$0xff] %v2915
        %2932 = vst [vmem:[%s424 + $0x40] sm:$0xff] %v2916
        %2933 = vst [vmem:[%s424 + $0x48] sm:$0xff] %v2917
        %2934 = vst [vmem:[%s424 + $0x50] sm:$0xff] %v2918
        %2935 = vst [vmem:[%s424 + $0x58] sm:$0xff] %v2919
        %2936 = vst [vmem:[%s424 + $0x60] sm:$0xff] %v2920
        %2937 = vst [vmem:[%s424 + $0x68] sm:$0xff] %v2921
        %2938 = vst [vmem:[%s424 + $0x70] sm:$0xff] %v2922
        %2939 = vst [vmem:[%s424 + $0x78] sm:$0xff] %v2923
        %s2940 = sand.u32 %s271, 1
        %s2941 = scalar_lea.sflag [#allocation3], %s2940
        %s2942 = sand.u32 %s271, 1
        %s2943 = smul.addr %s2942, 128
        %s2944 = scalar_lea.vmem [#allocation2], %s2943
        %p2945 = scmp.lt.s32.totalorder %s27, 1
        %s2946 = scalar_select %p2945, %s27, 1
        %s2947 = smul.addr %s2946, 16
        %s2948 = smul.addr %s2947, 8
        %s2949 = scalar_lea.vmem %s12, %s2948
        // Predicated region
        $region65: #{graph_autoencoder_forward.1} parent=63 // pred_check
          %p2950 = pneg %p281
        $region66: #{graph_autoencoder_forward.1} parent=63 // pred_check_branch
          %2952 = sbr.rel (%p2950) target = $region68
        $region67: #{graph_autoencoder_forward.1} parent=63 // pred_region
          %2954 = vsyncadd %s2941, 0
          %s2955 = smul.addr %s27, 16
          %s2956 = smul.addr %s2955, 8
          %s2957 = scalar_lea.hbm %s11, %s2956
          %s2958 = sshll.u32 %s2944, 4
          %s2959 = int_to_ptr.vmem [resolvable:$true] %s2958
          %s2960 = sshll.u32 %s2957, 4
          %s2961 = int_to_ptr.hbm [resolvable:$true] %s2960
          %2966 = dma.vmem_to_hbm [thread:$0]  %s2959, 2048, %s2961, %s2941, 128, 128, 8
        $region68: #{graph_autoencoder_forward.1} parent=63 // pred_fallthru
          _
        // Predicated region
        $region69: #{graph_autoencoder_forward.1} parent=63 // pred_check
          %p2967 = pneg %p307
        $region70: #{graph_autoencoder_forward.1} parent=63 // pred_check_branch
          %2969 = sbr.rel (%p2967) target = $region72
        $region71: #{graph_autoencoder_forward.1} parent=63 // pred_region
          _
        $region72: #{graph_autoencoder_forward.1} parent=63 // pred_fallthru
          _
      $region64: #{graph_autoencoder_forward.1} parent=5 // pred_fallthru
        _
      %p2970 = scmp.le.s32.totalorder 2, %s22
      // Predicated region
      $region73: #{graph_autoencoder_forward.1} parent=5 // pred_check
        %p2971 = pneg %p2970
      $region74: #{graph_autoencoder_forward.1} parent=5 // pred_check_branch
        %2973 = sbr.rel (%p2971) target = $region76
      $region75: #{graph_autoencoder_forward.1} parent=5 // pred_region
        %s2974 = ssub.s32 %s22, 2
        // Predicated region
        $region77: #{graph_autoencoder_forward.1} parent=75 // pred_check
          %p2975 = pneg %p287
        $region78: #{graph_autoencoder_forward.1} parent=75 // pred_check_branch
          %2977 = sbr.rel (%p2975) target = $region80
        $region79: #{graph_autoencoder_forward.1} parent=75 // pred_region
          %s2978 = sand.u32 %s272, 1
          %s2979 = scalar_lea.sflag [#allocation3], %s2978
          %s2980 = sand.u32 %s272, 1
          %s2981 = smul.addr %s2980, 128
          %s2982 = scalar_lea.vmem [#allocation2], %s2981
          %2984 = dma.done %s2979, 2048
        $region80: #{graph_autoencoder_forward.1} parent=75 // pred_fallthru
          _
        // Predicated region
        $region81: #{graph_autoencoder_forward.1} parent=75 // pred_check
          %p2985 = pneg %p313
        $region82: #{graph_autoencoder_forward.1} parent=75 // pred_check_branch
          %2987 = sbr.rel (%p2985) target = $region84
        $region83: #{graph_autoencoder_forward.1} parent=75 // pred_region
          %p2988 = scmp.lt.s32.totalorder %s28, 1
          %s2989 = scalar_select %p2988, %s28, 1
          %s2990 = smul.addr %s2989, 16
          %s2991 = smul.addr %s2990, 8
          %s2992 = scalar_lea.vmem %s12, %s2991
        $region84: #{graph_autoencoder_forward.1} parent=75 // pred_fallthru
          _
      $region76: #{graph_autoencoder_forward.1} parent=5 // pred_fallthru
        _
    $region6: #{graph_autoencoder_forward.1} parent=1 // loop_footer
      %s26 = sadd.s32 1, %s22
    $region7: #{graph_autoencoder_forward.1} parent=1 // loop_footer_branch
      %21 = sbr.rel target = $region3
    $region8: #{graph_autoencoder_forward.1} parent=1 // loop_exit
      _
    %2993 = vsyncpa [#allocation3], 1
    %s2994 = scalar_lea.sflag [#allocation3], 1
    %2995 = vsyncpa %s2994, 1

</llo_original>
